<compile_context>
chip_gen: v7x
topology: tpu7x:2x2x1
jax: 0.10.0
libtpu: 0.0.40
codegen_flags: <defaults>
</compile_context>

<pallas_src>
import jax
import jax.numpy as jnp
from jax.experimental import pallas as pl
from jax.experimental.pallas import tpu as pltpu


# ---------------------------------------------------------------------------
# Single fused kernel: both MixedLayers + weight_metric combine.
# ---------------------------------------------------------------------------
def _cell_kernel(w_ref, q_ref, s_ref, qi_ref, si_ref, o_ref):
    """Fused Cell forward.

    w_ref  : SMEM (18,) f32 scalar-prefetch buffer
             [0:4]   weights[0,0]  (norm-mix alphas, layer 0)
             [4:8]   weights[0,1]  (metric-mix alphas, layer 0)
             [8:12]  weights[1,0]  (norm-mix alphas, layer 1)
             [12:16] weights[1,1]  (metric-mix alphas, layer 1)
             [16:18] weight_metric[0]
    q_ref  : VMEM (B, C, HW)       query features
    s_ref  : VMEM (N, B, C, HW)    support features (native class-major layout)
    qi_ref : VMEM (B, C, HW)       q_image features
    si_ref : VMEM (N, B, C, HW)    S_image features (native class-major layout)
    o_ref  : VMEM (B, N)           mixed metric output
    """
    eps = 1e-12
    # Hoist every scalar read once (JAX does not CSE repeated broadcasts).
    w = [w_ref[i] for i in range(18)]

    def norm_mix(x, wn):
        # Weighted mix of skip / channel-L2 / global-L2 / sep-L2 norms,
        # factored as x * scale.  Reciprocals go to the (otherwise idle) EUP.
        # NOTE: approx=True is ~1e-4 rel error; set approx=False for exact
        # division parity with a reference implementation.
        sq = x * x
        ss_sep = jnp.sum(sq, axis=-1, keepdims=True)        # (..., C, 1)
        ss_ch = jnp.sum(sq, axis=-2, keepdims=True)         # (..., 1, HW)
        ss_all = jnp.sum(ss_sep, axis=-2, keepdims=True)    # (..., 1, 1)
        scale = (wn[0]                                       # skip
                 + wn[1] * pl.reciprocal(jnp.sqrt(ss_ch) + eps, approx=True)
                 + wn[2] * pl.reciprocal(jnp.sqrt(ss_all) + eps, approx=True)
                 + wn[3] * pl.reciprocal(jnp.sqrt(ss_sep) + eps, approx=True))
        return x * scale

    def metric_mix(qn, sn, wm):
        # qn: (B, C, HW) normalized query; sn: (N, B, C, HW) normalized
        # support.  Returns the mixed metric as (N*B, 1), rows ordered n*B+b.
        n, b, c, hw = sn.shape
        k = c * hw
        q2 = qn.reshape(b, k)                                # (B, K)
        s2 = sn.reshape(n * b, k)                            # (N*B, K)
        # Pair each support row (n, b) with its batch's query row.
        qt = jnp.broadcast_to(q2[None, :, :], (n, b, k)).reshape(n * b, k)
        diff = qt - s2                                       # VPU
        ones_col = jnp.ones((k, 1), jnp.float32)

        def ksum(v):                                         # K-contraction on MXU
            return jnp.dot(v, ones_col, preferred_element_type=jnp.float32)

        m_dot = ksum(qt * s2)                                # <q, s>        (N*B, 1)
        m_abs = ksum(jnp.abs(diff))                          # sum |q - s|
        m_squ = ksum(diff * diff)                            # ||q - s||^2 (direct, no cancellation)
        s_sum = ksum(s2)                                     # sum s
        q_sum = jnp.broadcast_to(ksum(q2)[None, :, :], (n, b, 1)).reshape(n * b, 1)
        m_cov = (m_dot - q_sum * s_sum * (1.0 / k)) * (1.0 / (k - 1))
        return wm[0] * m_dot + wm[1] * m_abs + wm[2] * m_squ + wm[3] * m_cov

    n_cls = s_ref.shape[0]
    bsz = s_ref.shape[1]

    # Layer 0: (query, support); Layer 1: (q_image, S_image).
    r0 = metric_mix(norm_mix(q_ref[...], w[0:4]),
                    norm_mix(s_ref[...], w[0:4]), w[4:8])
    r1 = metric_mix(norm_mix(qi_ref[...], w[8:12]),
                    norm_mix(si_ref[...], w[8:12]), w[12:16])

    mix = w[16] * r0 + w[17] * r1                            # (N*B, 1)
    # Tiny (N, B) -> (B, N) transpose in-kernel; single full-block store.
    o_ref[...] = jnp.transpose(mix.reshape(n_cls, bsz))


# ---------------------------------------------------------------------------
# Wrapper mirroring Cell.forward
# ---------------------------------------------------------------------------
def cell_forward(query, support, q_image, S_image, weights, weight_metric):
    """query/q_image: (B, C, HW); support/S_image: (N, B, C, HW);
    weights: (steps=2, 2, 4); weight_metric: (1, 2).  Returns (B, N)."""
    B, C, HW = query.shape
    N = support.shape[0]

    # Inputs are already f32 (astype is a no-op); if upstream features were
    # bf16, drop the casts here and cast in-kernel to halve HBM->VMEM traffic.
    w_flat = jnp.concatenate(
        [weights.reshape(-1), weight_metric.reshape(-1)]).astype(jnp.float32)

    return pl.pallas_call(
        _cell_kernel,
        out_shape=jax.ShapeDtypeStruct((B, N), jnp.float32),
        grid_spec=pltpu.PrefetchScalarGridSpec(
            num_scalar_prefetch=1,
            grid=(1,),
            in_specs=[
                pl.BlockSpec((B, C, HW), lambda i, w: (0, 0, 0)),
                pl.BlockSpec((N, B, C, HW), lambda i, w: (0, 0, 0, 0)),
                pl.BlockSpec((B, C, HW), lambda i, w: (0, 0, 0)),
                pl.BlockSpec((N, B, C, HW), lambda i, w: (0, 0, 0, 0)),
            ],
            out_specs=pl.BlockSpec((B, N), lambda i, w: (0, 0)),
        ),
        compiler_params=pltpu.CompilerParams(
            dimension_semantics=("arbitrary",)),
    )(w_flat, query.astype(jnp.float32), support.astype(jnp.float32),
      q_image.astype(jnp.float32), S_image.astype(jnp.float32))


if __name__ == "__main__":
    key = jax.random.PRNGKey(0)
    k1, k2, k3, k4, k5, k6 = jax.random.split(key, 6)

    B, C, HW = 2, 8, 128          # small feature shapes (B, C, h*w)
    class_num = 5                 # per MixedLayer docstring
    steps = 2

    query = jax.random.normal(k1, (B, C, HW), jnp.float32)
    support = jax.random.normal(k2, (class_num, B, C, HW), jnp.float32)
    q_image = jax.random.normal(k3, (B, C, HW), jnp.float32)
    S_image = jax.random.normal(k4, (class_num, B, C, HW), jnp.float32)

    # architecture weights (alphas), softmaxed per op-group as in DARTS search
    weights = jax.nn.softmax(
        jax.random.normal(k5, (steps, 2, 4), jnp.float32), axis=-1)
    weight_metric = jax.nn.softmax(
        jax.random.normal(k6, (1, 2), jnp.float32), axis=-1)

    out = jax.jit(cell_forward)(query, support, q_image, S_image,
                                weights, weight_metric)
    jax.block_until_ready(out)
    assert out.shape == (B, class_num)
    print("KERNEL_OK")
</pallas_src>

<mosaic_0001>
module attributes {stable_mosaic.version = 11 : i64} {
  func.func @_cell_kernel(%arg0: i32, %arg1: memref<18xf32, #tpu.memory_space<smem>>, %arg2: memref<2x8x128xf32, #tpu.memory_space<vmem>>, %arg3: memref<5x2x8x128xf32, #tpu.memory_space<vmem>>, %arg4: memref<2x8x128xf32, #tpu.memory_space<vmem>>, %arg5: memref<5x2x8x128xf32, #tpu.memory_space<vmem>>, %arg6: memref<2x5xf32, #tpu.memory_space<vmem>>) attributes {dimension_semantics = [#tpu.dimension_semantics<arbitrary>], iteration_bounds = array<i64: 1>, scalar_prefetch = 1 : i64, scratch_operands = 0 : i64, tpu.core_type = #tpu.core_type<tc>, window_params = [{pipeline_mode = #tpu.pipeline_mode<synchronous>, transform_indices = @transform_0, window_bounds = array<i64: 2, 8, 128>}, {pipeline_mode = #tpu.pipeline_mode<synchronous>, transform_indices = @transform_1, window_bounds = array<i64: 5, 2, 8, 128>}, {pipeline_mode = #tpu.pipeline_mode<synchronous>, transform_indices = @transform_2, window_bounds = array<i64: 2, 8, 128>}, {pipeline_mode = #tpu.pipeline_mode<synchronous>, transform_indices = @transform_3, window_bounds = array<i64: 5, 2, 8, 128>}, {pipeline_mode = #tpu.pipeline_mode<synchronous>, transform_indices = @transform_4, window_bounds = array<i64: 2, 5>}]} {
    %c0 = arith.constant 0 : index
    %0 = memref.load %arg1[%c0] : memref<18xf32, #tpu.memory_space<smem>>
    %c1 = arith.constant 1 : index
    %1 = memref.load %arg1[%c1] : memref<18xf32, #tpu.memory_space<smem>>
    %c2 = arith.constant 2 : index
    %2 = memref.load %arg1[%c2] : memref<18xf32, #tpu.memory_space<smem>>
    %c3 = arith.constant 3 : index
    %3 = memref.load %arg1[%c3] : memref<18xf32, #tpu.memory_space<smem>>
    %c4 = arith.constant 4 : index
    %4 = memref.load %arg1[%c4] : memref<18xf32, #tpu.memory_space<smem>>
    %c5 = arith.constant 5 : index
    %5 = memref.load %arg1[%c5] : memref<18xf32, #tpu.memory_space<smem>>
    %c6 = arith.constant 6 : index
    %6 = memref.load %arg1[%c6] : memref<18xf32, #tpu.memory_space<smem>>
    %c7 = arith.constant 7 : index
    %7 = memref.load %arg1[%c7] : memref<18xf32, #tpu.memory_space<smem>>
    %c8 = arith.constant 8 : index
    %8 = memref.load %arg1[%c8] : memref<18xf32, #tpu.memory_space<smem>>
    %c9 = arith.constant 9 : index
    %9 = memref.load %arg1[%c9] : memref<18xf32, #tpu.memory_space<smem>>
    %c10 = arith.constant 10 : index
    %10 = memref.load %arg1[%c10] : memref<18xf32, #tpu.memory_space<smem>>
    %c11 = arith.constant 11 : index
    %11 = memref.load %arg1[%c11] : memref<18xf32, #tpu.memory_space<smem>>
    %c12 = arith.constant 12 : index
    %12 = memref.load %arg1[%c12] : memref<18xf32, #tpu.memory_space<smem>>
    %c13 = arith.constant 13 : index
    %13 = memref.load %arg1[%c13] : memref<18xf32, #tpu.memory_space<smem>>
    %c14 = arith.constant 14 : index
    %14 = memref.load %arg1[%c14] : memref<18xf32, #tpu.memory_space<smem>>
    %c15 = arith.constant 15 : index
    %15 = memref.load %arg1[%c15] : memref<18xf32, #tpu.memory_space<smem>>
    %c16 = arith.constant 16 : index
    %16 = memref.load %arg1[%c16] : memref<18xf32, #tpu.memory_space<smem>>
    %c17 = arith.constant 17 : index
    %17 = memref.load %arg1[%c17] : memref<18xf32, #tpu.memory_space<smem>>
    %c0_0 = arith.constant 0 : index
    %c0_1 = arith.constant 0 : index
    %c0_2 = arith.constant 0 : index
    %18 = vector.load %arg2[%c0_0, %c0_1, %c0_2] : memref<2x8x128xf32, #tpu.memory_space<vmem>>, vector<2x8x128xf32>
    %19 = arith.mulf %18, %18 : vector<2x8x128xf32>
    %cst = arith.constant dense<0.000000e+00> : vector<2x8xf32>
    %20 = vector.multi_reduction <add>, %19, %cst [2] : vector<2x8x128xf32> to vector<2x8xf32>
    %21 = vector.shape_cast %20 : vector<2x8xf32> to vector<2x8x1xf32>
    %cst_3 = arith.constant dense<0.000000e+00> : vector<2x128xf32>
    %22 = vector.multi_reduction <add>, %19, %cst_3 [1] : vector<2x8x128xf32> to vector<2x128xf32>
    %23 = vector.shape_cast %22 : vector<2x128xf32> to vector<2x1x128xf32>
    %cst_4 = arith.constant dense<0.000000e+00> : vector<2x1xf32>
    %24 = vector.multi_reduction <add>, %21, %cst_4 [1] : vector<2x8x1xf32> to vector<2x1xf32>
    %25 = vector.shape_cast %24 : vector<2x1xf32> to vector<2x1x1xf32>
    %26 = math.sqrt %23 : vector<2x1x128xf32>
    %cst_5 = arith.constant 9.99999996E-13 : f32
    %27 = vector.broadcast %cst_5 : f32 to vector<2x1x128xf32>
    %28 = arith.addf %26, %27 : vector<2x1x128xf32>
    %29 = tpu.reciprocal %28 {approx = true} : vector<2x1x128xf32> -> vector<2x1x128xf32>
    %30 = vector.broadcast %1 : f32 to vector<2x1x128xf32>
    %31 = arith.mulf %30, %29 : vector<2x1x128xf32>
    %32 = vector.broadcast %0 : f32 to vector<2x1x128xf32>
    %33 = arith.addf %32, %31 : vector<2x1x128xf32>
    %34 = math.sqrt %25 : vector<2x1x1xf32>
    %cst_6 = arith.constant 9.99999996E-13 : f32
    %35 = vector.broadcast %cst_6 : f32 to vector<2x1x1xf32>
    %36 = arith.addf %34, %35 : vector<2x1x1xf32>
    %37 = tpu.reciprocal %36 {approx = true} : vector<2x1x1xf32> -> vector<2x1x1xf32>
    %38 = vector.broadcast %2 : f32 to vector<2x1x1xf32>
    %39 = arith.mulf %38, %37 : vector<2x1x1xf32>
    %40 = vector.broadcast %39 : vector<2x1x1xf32> to vector<2x1x128xf32>
    %41 = arith.addf %33, %40 : vector<2x1x128xf32>
    %42 = math.sqrt %21 : vector<2x8x1xf32>
    %cst_7 = arith.constant 9.99999996E-13 : f32
    %43 = vector.broadcast %cst_7 : f32 to vector<2x8x1xf32>
    %44 = arith.addf %42, %43 : vector<2x8x1xf32>
    %45 = tpu.reciprocal %44 {approx = true} : vector<2x8x1xf32> -> vector<2x8x1xf32>
    %46 = vector.broadcast %3 : f32 to vector<2x8x1xf32>
    %47 = arith.mulf %46, %45 : vector<2x8x1xf32>
    %48 = vector.broadcast %41 : vector<2x1x128xf32> to vector<2x8x128xf32>
    %49 = vector.broadcast %47 : vector<2x8x1xf32> to vector<2x8x128xf32>
    %50 = arith.addf %48, %49 : vector<2x8x128xf32>
    %51 = arith.mulf %18, %50 : vector<2x8x128xf32>
    %c0_8 = arith.constant 0 : index
    %c0_9 = arith.constant 0 : index
    %c0_10 = arith.constant 0 : index
    %c0_11 = arith.constant 0 : index
    %52 = vector.load %arg3[%c0_8, %c0_9, %c0_10, %c0_11] : memref<5x2x8x128xf32, #tpu.memory_space<vmem>>, vector<5x2x8x128xf32>
    %53 = arith.mulf %52, %52 : vector<5x2x8x128xf32>
    %cst_12 = arith.constant dense<0.000000e+00> : vector<5x2x8xf32>
    %54 = vector.multi_reduction <add>, %53, %cst_12 [3] : vector<5x2x8x128xf32> to vector<5x2x8xf32>
    %55 = vector.shape_cast %54 : vector<5x2x8xf32> to vector<5x2x8x1xf32>
    %cst_13 = arith.constant dense<0.000000e+00> : vector<5x2x128xf32>
    %56 = vector.multi_reduction <add>, %53, %cst_13 [2] : vector<5x2x8x128xf32> to vector<5x2x128xf32>
    %57 = vector.shape_cast %56 : vector<5x2x128xf32> to vector<5x2x1x128xf32>
    %cst_14 = arith.constant dense<0.000000e+00> : vector<5x2x1xf32>
    %58 = vector.multi_reduction <add>, %55, %cst_14 [2] : vector<5x2x8x1xf32> to vector<5x2x1xf32>
    %59 = vector.shape_cast %58 : vector<5x2x1xf32> to vector<5x2x1x1xf32>
    %60 = math.sqrt %57 : vector<5x2x1x128xf32>
    %cst_15 = arith.constant 9.99999996E-13 : f32
    %61 = vector.broadcast %cst_15 : f32 to vector<5x2x1x128xf32>
    %62 = arith.addf %60, %61 : vector<5x2x1x128xf32>
    %63 = tpu.reciprocal %62 {approx = true} : vector<5x2x1x128xf32> -> vector<5x2x1x128xf32>
    %64 = vector.broadcast %1 : f32 to vector<5x2x1x128xf32>
    %65 = arith.mulf %64, %63 : vector<5x2x1x128xf32>
    %66 = vector.broadcast %0 : f32 to vector<5x2x1x128xf32>
    %67 = arith.addf %66, %65 : vector<5x2x1x128xf32>
    %68 = math.sqrt %59 : vector<5x2x1x1xf32>
    %cst_16 = arith.constant 9.99999996E-13 : f32
    %69 = vector.broadcast %cst_16 : f32 to vector<5x2x1x1xf32>
    %70 = arith.addf %68, %69 : vector<5x2x1x1xf32>
    %71 = tpu.reciprocal %70 {approx = true} : vector<5x2x1x1xf32> -> vector<5x2x1x1xf32>
    %72 = vector.broadcast %2 : f32 to vector<5x2x1x1xf32>
    %73 = arith.mulf %72, %71 : vector<5x2x1x1xf32>
    %74 = vector.broadcast %73 : vector<5x2x1x1xf32> to vector<5x2x1x128xf32>
    %75 = arith.addf %67, %74 : vector<5x2x1x128xf32>
    %76 = math.sqrt %55 : vector<5x2x8x1xf32>
    %cst_17 = arith.constant 9.99999996E-13 : f32
    %77 = vector.broadcast %cst_17 : f32 to vector<5x2x8x1xf32>
    %78 = arith.addf %76, %77 : vector<5x2x8x1xf32>
    %79 = tpu.reciprocal %78 {approx = true} : vector<5x2x8x1xf32> -> vector<5x2x8x1xf32>
    %80 = vector.broadcast %3 : f32 to vector<5x2x8x1xf32>
    %81 = arith.mulf %80, %79 : vector<5x2x8x1xf32>
    %82 = vector.broadcast %75 : vector<5x2x1x128xf32> to vector<5x2x8x128xf32>
    %83 = vector.broadcast %81 : vector<5x2x8x1xf32> to vector<5x2x8x128xf32>
    %84 = arith.addf %82, %83 : vector<5x2x8x128xf32>
    %85 = arith.mulf %52, %84 : vector<5x2x8x128xf32>
    %86 = vector.shape_cast %51 : vector<2x8x128xf32> to vector<2x1024xf32>
    %87 = vector.shape_cast %85 : vector<5x2x8x128xf32> to vector<10x1024xf32>
    %88 = vector.shape_cast %86 : vector<2x1024xf32> to vector<1x2x1024xf32>
    %89 = vector.shape_cast %88 : vector<1x2x1024xf32> to vector<1x2x1024xf32>
    %90 = vector.broadcast %89 : vector<1x2x1024xf32> to vector<5x2x1024xf32>
    %91 = vector.shape_cast %90 : vector<5x2x1024xf32> to vector<10x1024xf32>
    %92 = arith.subf %91, %87 : vector<10x1024xf32>
    %cst_18 = arith.constant 1.000000e+00 : f32
    %93 = vector.broadcast %cst_18 : f32 to vector<1024x1xf32>
    %94 = arith.mulf %91, %87 : vector<10x1024xf32>
    %cst_19 = arith.constant dense<0.000000e+00> : vector<10x1xf32>
    %95 = tpu.matmul %94, %93, %cst_19 {dimension_numbers = #tpu.dot_dimension_numbers<[1], [0], [0], [1], [0, 0, 1, 1], [], []>} : vector<10x1024xf32>, vector<1024x1xf32>, vector<10x1xf32> -> vector<10x1xf32>
    %96 = math.absf %92 : vector<10x1024xf32>
    %cst_20 = arith.constant dense<0.000000e+00> : vector<10x1xf32>
    %97 = tpu.matmul %96, %93, %cst_20 {dimension_numbers = #tpu.dot_dimension_numbers<[1], [0], [0], [1], [0, 0, 1, 1], [], []>} : vector<10x1024xf32>, vector<1024x1xf32>, vector<10x1xf32> -> vector<10x1xf32>
    %98 = arith.mulf %92, %92 : vector<10x1024xf32>
    %cst_21 = arith.constant dense<0.000000e+00> : vector<10x1xf32>
    %99 = tpu.matmul %98, %93, %cst_21 {dimension_numbers = #tpu.dot_dimension_numbers<[1], [0], [0], [1], [0, 0, 1, 1], [], []>} : vector<10x1024xf32>, vector<1024x1xf32>, vector<10x1xf32> -> vector<10x1xf32>
    %cst_22 = arith.constant dense<0.000000e+00> : vector<10x1xf32>
    %100 = tpu.matmul %87, %93, %cst_22 {dimension_numbers = #tpu.dot_dimension_numbers<[1], [0], [0], [1], [0, 0, 1, 1], [], []>} : vector<10x1024xf32>, vector<1024x1xf32>, vector<10x1xf32> -> vector<10x1xf32>
    %cst_23 = arith.constant dense<0.000000e+00> : vector<2x1xf32>
    %101 = tpu.matmul %86, %93, %cst_23 {dimension_numbers = #tpu.dot_dimension_numbers<[1], [0], [0], [1], [0, 0, 1, 1], [], []>} : vector<2x1024xf32>, vector<1024x1xf32>, vector<2x1xf32> -> vector<2x1xf32>
    %102 = vector.shape_cast %101 : vector<2x1xf32> to vector<1x2x1xf32>
    %103 = vector.shape_cast %102 : vector<1x2x1xf32> to vector<1x2x1xf32>
    %104 = vector.broadcast %103 : vector<1x2x1xf32> to vector<5x2x1xf32>
    %105 = vector.shape_cast %104 : vector<5x2x1xf32> to vector<10x1xf32>
    %106 = arith.mulf %105, %100 : vector<10x1xf32>
    %cst_24 = arith.constant 9.765625E-4 : f32
    %107 = vector.broadcast %cst_24 : f32 to vector<10x1xf32>
    %108 = arith.mulf %106, %107 : vector<10x1xf32>
    %109 = arith.subf %95, %108 : vector<10x1xf32>
    %cst_25 = arith.constant 9.77517105E-4 : f32
    %110 = vector.broadcast %cst_25 : f32 to vector<10x1xf32>
    %111 = arith.mulf %109, %110 : vector<10x1xf32>
    %112 = vector.broadcast %4 : f32 to vector<10x1xf32>
    %113 = arith.mulf %112, %95 : vector<10x1xf32>
    %114 = vector.broadcast %5 : f32 to vector<10x1xf32>
    %115 = arith.mulf %114, %97 : vector<10x1xf32>
    %116 = arith.addf %113, %115 : vector<10x1xf32>
    %117 = vector.broadcast %6 : f32 to vector<10x1xf32>
    %118 = arith.mulf %117, %99 : vector<10x1xf32>
    %119 = arith.addf %116, %118 : vector<10x1xf32>
    %120 = vector.broadcast %7 : f32 to vector<10x1xf32>
    %121 = arith.mulf %120, %111 : vector<10x1xf32>
    %122 = arith.addf %119, %121 : vector<10x1xf32>
    %c0_26 = arith.constant 0 : index
    %c0_27 = arith.constant 0 : index
    %c0_28 = arith.constant 0 : index
    %123 = vector.load %arg4[%c0_26, %c0_27, %c0_28] : memref<2x8x128xf32, #tpu.memory_space<vmem>>, vector<2x8x128xf32>
    %124 = arith.mulf %123, %123 : vector<2x8x128xf32>
    %cst_29 = arith.constant dense<0.000000e+00> : vector<2x8xf32>
    %125 = vector.multi_reduction <add>, %124, %cst_29 [2] : vector<2x8x128xf32> to vector<2x8xf32>
    %126 = vector.shape_cast %125 : vector<2x8xf32> to vector<2x8x1xf32>
    %cst_30 = arith.constant dense<0.000000e+00> : vector<2x128xf32>
    %127 = vector.multi_reduction <add>, %124, %cst_30 [1] : vector<2x8x128xf32> to vector<2x128xf32>
    %128 = vector.shape_cast %127 : vector<2x128xf32> to vector<2x1x128xf32>
    %cst_31 = arith.constant dense<0.000000e+00> : vector<2x1xf32>
    %129 = vector.multi_reduction <add>, %126, %cst_31 [1] : vector<2x8x1xf32> to vector<2x1xf32>
    %130 = vector.shape_cast %129 : vector<2x1xf32> to vector<2x1x1xf32>
    %131 = math.sqrt %128 : vector<2x1x128xf32>
    %cst_32 = arith.constant 9.99999996E-13 : f32
    %132 = vector.broadcast %cst_32 : f32 to vector<2x1x128xf32>
    %133 = arith.addf %131, %132 : vector<2x1x128xf32>
    %134 = tpu.reciprocal %133 {approx = true} : vector<2x1x128xf32> -> vector<2x1x128xf32>
    %135 = vector.broadcast %9 : f32 to vector<2x1x128xf32>
    %136 = arith.mulf %135, %134 : vector<2x1x128xf32>
    %137 = vector.broadcast %8 : f32 to vector<2x1x128xf32>
    %138 = arith.addf %137, %136 : vector<2x1x128xf32>
    %139 = math.sqrt %130 : vector<2x1x1xf32>
    %cst_33 = arith.constant 9.99999996E-13 : f32
    %140 = vector.broadcast %cst_33 : f32 to vector<2x1x1xf32>
    %141 = arith.addf %139, %140 : vector<2x1x1xf32>
    %142 = tpu.reciprocal %141 {approx = true} : vector<2x1x1xf32> -> vector<2x1x1xf32>
    %143 = vector.broadcast %10 : f32 to vector<2x1x1xf32>
    %144 = arith.mulf %143, %142 : vector<2x1x1xf32>
    %145 = vector.broadcast %144 : vector<2x1x1xf32> to vector<2x1x128xf32>
    %146 = arith.addf %138, %145 : vector<2x1x128xf32>
    %147 = math.sqrt %126 : vector<2x8x1xf32>
    %cst_34 = arith.constant 9.99999996E-13 : f32
    %148 = vector.broadcast %cst_34 : f32 to vector<2x8x1xf32>
    %149 = arith.addf %147, %148 : vector<2x8x1xf32>
    %150 = tpu.reciprocal %149 {approx = true} : vector<2x8x1xf32> -> vector<2x8x1xf32>
    %151 = vector.broadcast %11 : f32 to vector<2x8x1xf32>
    %152 = arith.mulf %151, %150 : vector<2x8x1xf32>
    %153 = vector.broadcast %146 : vector<2x1x128xf32> to vector<2x8x128xf32>
    %154 = vector.broadcast %152 : vector<2x8x1xf32> to vector<2x8x128xf32>
    %155 = arith.addf %153, %154 : vector<2x8x128xf32>
    %156 = arith.mulf %123, %155 : vector<2x8x128xf32>
    %c0_35 = arith.constant 0 : index
    %c0_36 = arith.constant 0 : index
    %c0_37 = arith.constant 0 : index
    %c0_38 = arith.constant 0 : index
    %157 = vector.load %arg5[%c0_35, %c0_36, %c0_37, %c0_38] : memref<5x2x8x128xf32, #tpu.memory_space<vmem>>, vector<5x2x8x128xf32>
    %158 = arith.mulf %157, %157 : vector<5x2x8x128xf32>
    %cst_39 = arith.constant dense<0.000000e+00> : vector<5x2x8xf32>
    %159 = vector.multi_reduction <add>, %158, %cst_39 [3] : vector<5x2x8x128xf32> to vector<5x2x8xf32>
    %160 = vector.shape_cast %159 : vector<5x2x8xf32> to vector<5x2x8x1xf32>
    %cst_40 = arith.constant dense<0.000000e+00> : vector<5x2x128xf32>
    %161 = vector.multi_reduction <add>, %158, %cst_40 [2] : vector<5x2x8x128xf32> to vector<5x2x128xf32>
    %162 = vector.shape_cast %161 : vector<5x2x128xf32> to vector<5x2x1x128xf32>
    %cst_41 = arith.constant dense<0.000000e+00> : vector<5x2x1xf32>
    %163 = vector.multi_reduction <add>, %160, %cst_41 [2] : vector<5x2x8x1xf32> to vector<5x2x1xf32>
    %164 = vector.shape_cast %163 : vector<5x2x1xf32> to vector<5x2x1x1xf32>
    %165 = math.sqrt %162 : vector<5x2x1x128xf32>
    %cst_42 = arith.constant 9.99999996E-13 : f32
    %166 = vector.broadcast %cst_42 : f32 to vector<5x2x1x128xf32>
    %167 = arith.addf %165, %166 : vector<5x2x1x128xf32>
    %168 = tpu.reciprocal %167 {approx = true} : vector<5x2x1x128xf32> -> vector<5x2x1x128xf32>
    %169 = vector.broadcast %9 : f32 to vector<5x2x1x128xf32>
    %170 = arith.mulf %169, %168 : vector<5x2x1x128xf32>
    %171 = vector.broadcast %8 : f32 to vector<5x2x1x128xf32>
    %172 = arith.addf %171, %170 : vector<5x2x1x128xf32>
    %173 = math.sqrt %164 : vector<5x2x1x1xf32>
    %cst_43 = arith.constant 9.99999996E-13 : f32
    %174 = vector.broadcast %cst_43 : f32 to vector<5x2x1x1xf32>
    %175 = arith.addf %173, %174 : vector<5x2x1x1xf32>
    %176 = tpu.reciprocal %175 {approx = true} : vector<5x2x1x1xf32> -> vector<5x2x1x1xf32>
    %177 = vector.broadcast %10 : f32 to vector<5x2x1x1xf32>
    %178 = arith.mulf %177, %176 : vector<5x2x1x1xf32>
    %179 = vector.broadcast %178 : vector<5x2x1x1xf32> to vector<5x2x1x128xf32>
    %180 = arith.addf %172, %179 : vector<5x2x1x128xf32>
    %181 = math.sqrt %160 : vector<5x2x8x1xf32>
    %cst_44 = arith.constant 9.99999996E-13 : f32
    %182 = vector.broadcast %cst_44 : f32 to vector<5x2x8x1xf32>
    %183 = arith.addf %181, %182 : vector<5x2x8x1xf32>
    %184 = tpu.reciprocal %183 {approx = true} : vector<5x2x8x1xf32> -> vector<5x2x8x1xf32>
    %185 = vector.broadcast %11 : f32 to vector<5x2x8x1xf32>
    %186 = arith.mulf %185, %184 : vector<5x2x8x1xf32>
    %187 = vector.broadcast %180 : vector<5x2x1x128xf32> to vector<5x2x8x128xf32>
    %188 = vector.broadcast %186 : vector<5x2x8x1xf32> to vector<5x2x8x128xf32>
    %189 = arith.addf %187, %188 : vector<5x2x8x128xf32>
    %190 = arith.mulf %157, %189 : vector<5x2x8x128xf32>
    %191 = vector.shape_cast %156 : vector<2x8x128xf32> to vector<2x1024xf32>
    %192 = vector.shape_cast %190 : vector<5x2x8x128xf32> to vector<10x1024xf32>
    %193 = vector.shape_cast %191 : vector<2x1024xf32> to vector<1x2x1024xf32>
    %194 = vector.shape_cast %193 : vector<1x2x1024xf32> to vector<1x2x1024xf32>
    %195 = vector.broadcast %194 : vector<1x2x1024xf32> to vector<5x2x1024xf32>
    %196 = vector.shape_cast %195 : vector<5x2x1024xf32> to vector<10x1024xf32>
    %197 = arith.subf %196, %192 : vector<10x1024xf32>
    %cst_45 = arith.constant 1.000000e+00 : f32
    %198 = vector.broadcast %cst_45 : f32 to vector<1024x1xf32>
    %199 = arith.mulf %196, %192 : vector<10x1024xf32>
    %cst_46 = arith.constant dense<0.000000e+00> : vector<10x1xf32>
    %200 = tpu.matmul %199, %198, %cst_46 {dimension_numbers = #tpu.dot_dimension_numbers<[1], [0], [0], [1], [0, 0, 1, 1], [], []>} : vector<10x1024xf32>, vector<1024x1xf32>, vector<10x1xf32> -> vector<10x1xf32>
    %201 = math.absf %197 : vector<10x1024xf32>
    %cst_47 = arith.constant dense<0.000000e+00> : vector<10x1xf32>
    %202 = tpu.matmul %201, %198, %cst_47 {dimension_numbers = #tpu.dot_dimension_numbers<[1], [0], [0], [1], [0, 0, 1, 1], [], []>} : vector<10x1024xf32>, vector<1024x1xf32>, vector<10x1xf32> -> vector<10x1xf32>
    %203 = arith.mulf %197, %197 : vector<10x1024xf32>
    %cst_48 = arith.constant dense<0.000000e+00> : vector<10x1xf32>
    %204 = tpu.matmul %203, %198, %cst_48 {dimension_numbers = #tpu.dot_dimension_numbers<[1], [0], [0], [1], [0, 0, 1, 1], [], []>} : vector<10x1024xf32>, vector<1024x1xf32>, vector<10x1xf32> -> vector<10x1xf32>
    %cst_49 = arith.constant dense<0.000000e+00> : vector<10x1xf32>
    %205 = tpu.matmul %192, %198, %cst_49 {dimension_numbers = #tpu.dot_dimension_numbers<[1], [0], [0], [1], [0, 0, 1, 1], [], []>} : vector<10x1024xf32>, vector<1024x1xf32>, vector<10x1xf32> -> vector<10x1xf32>
    %cst_50 = arith.constant dense<0.000000e+00> : vector<2x1xf32>
    %206 = tpu.matmul %191, %198, %cst_50 {dimension_numbers = #tpu.dot_dimension_numbers<[1], [0], [0], [1], [0, 0, 1, 1], [], []>} : vector<2x1024xf32>, vector<1024x1xf32>, vector<2x1xf32> -> vector<2x1xf32>
    %207 = vector.shape_cast %206 : vector<2x1xf32> to vector<1x2x1xf32>
    %208 = vector.shape_cast %207 : vector<1x2x1xf32> to vector<1x2x1xf32>
    %209 = vector.broadcast %208 : vector<1x2x1xf32> to vector<5x2x1xf32>
    %210 = vector.shape_cast %209 : vector<5x2x1xf32> to vector<10x1xf32>
    %211 = arith.mulf %210, %205 : vector<10x1xf32>
    %cst_51 = arith.constant 9.765625E-4 : f32
    %212 = vector.broadcast %cst_51 : f32 to vector<10x1xf32>
    %213 = arith.mulf %211, %212 : vector<10x1xf32>
    %214 = arith.subf %200, %213 : vector<10x1xf32>
    %cst_52 = arith.constant 9.77517105E-4 : f32
    %215 = vector.broadcast %cst_52 : f32 to vector<10x1xf32>
    %216 = arith.mulf %214, %215 : vector<10x1xf32>
    %217 = vector.broadcast %12 : f32 to vector<10x1xf32>
    %218 = arith.mulf %217, %200 : vector<10x1xf32>
    %219 = vector.broadcast %13 : f32 to vector<10x1xf32>
    %220 = arith.mulf %219, %202 : vector<10x1xf32>
    %221 = arith.addf %218, %220 : vector<10x1xf32>
    %222 = vector.broadcast %14 : f32 to vector<10x1xf32>
    %223 = arith.mulf %222, %204 : vector<10x1xf32>
    %224 = arith.addf %221, %223 : vector<10x1xf32>
    %225 = vector.broadcast %15 : f32 to vector<10x1xf32>
    %226 = arith.mulf %225, %216 : vector<10x1xf32>
    %227 = arith.addf %224, %226 : vector<10x1xf32>
    %228 = vector.broadcast %16 : f32 to vector<10x1xf32>
    %229 = arith.mulf %228, %122 : vector<10x1xf32>
    %230 = vector.broadcast %17 : f32 to vector<10x1xf32>
    %231 = arith.mulf %230, %227 : vector<10x1xf32>
    %232 = arith.addf %229, %231 : vector<10x1xf32>
    %233 = vector.shape_cast %232 : vector<10x1xf32> to vector<5x2xf32>
    %234 = tpu.transpose %233, [1, 0] : vector<5x2xf32> -> vector<2x5xf32>
    %c0_53 = arith.constant 0 : index
    %c0_54 = arith.constant 0 : index
    %235 = vector.load %arg6[%c0_53, %c0_54] : memref<2x5xf32, #tpu.memory_space<vmem>>, vector<2x5xf32>
    tpu.vector_store %arg6[%c0_53, %c0_54], %234 {strides = array<i32>} : memref<2x5xf32, #tpu.memory_space<vmem>>, vector<2x5xf32>,
    return
  }
  func.func @transform_0(%arg0: i32, %arg1: memref<18xf32, #tpu.memory_space<smem>>) -> (i32, i32, i32) {
    %c0_i32 = arith.constant 0 : i32
    %c0_i32_0 = arith.constant 0 : i32
    %c0_i32_1 = arith.constant 0 : i32
    %c0_i32_2 = arith.constant 0 : i32
    return %c0_i32, %c0_i32_0, %c0_i32_1 : i32, i32, i32
  }
  func.func @transform_1(%arg0: i32, %arg1: memref<18xf32, #tpu.memory_space<smem>>) -> (i32, i32, i32, i32) {
    %c0_i32 = arith.constant 0 : i32
    %c0_i32_0 = arith.constant 0 : i32
    %c0_i32_1 = arith.constant 0 : i32
    %c0_i32_2 = arith.constant 0 : i32
    %c0_i32_3 = arith.constant 0 : i32
    return %c0_i32, %c0_i32_0, %c0_i32_1, %c0_i32_2 : i32, i32, i32, i32
  }
  func.func @transform_2(%arg0: i32, %arg1: memref<18xf32, #tpu.memory_space<smem>>) -> (i32, i32, i32) {
    %c0_i32 = arith.constant 0 : i32
    %c0_i32_0 = arith.constant 0 : i32
    %c0_i32_1 = arith.constant 0 : i32
    %c0_i32_2 = arith.constant 0 : i32
    return %c0_i32, %c0_i32_0, %c0_i32_1 : i32, i32, i32
  }
  func.func @transform_3(%arg0: i32, %arg1: memref<18xf32, #tpu.memory_space<smem>>) -> (i32, i32, i32, i32) {
    %c0_i32 = arith.constant 0 : i32
    %c0_i32_0 = arith.constant 0 : i32
    %c0_i32_1 = arith.constant 0 : i32
    %c0_i32_2 = arith.constant 0 : i32
    %c0_i32_3 = arith.constant 0 : i32
    return %c0_i32, %c0_i32_0, %c0_i32_1, %c0_i32_2 : i32, i32, i32, i32
  }
  func.func @transform_4(%arg0: i32, %arg1: memref<18xf32, #tpu.memory_space<smem>>) -> (i32, i32) {
    %c0_i32 = arith.constant 0 : i32
    %c0_i32_0 = arith.constant 0 : i32
    %c0_i32_1 = arith.constant 0 : i32
    return %c0_i32, %c0_i32_0 : i32, i32
  }
}

</mosaic_0001>

<llo_original>
// kernel: cell_forward.1
$region0: #{cell_forward.1}
  #allocation0 [shape = 'u32[]', space=smem, size = 0x4, offset = 0x4, fixed_abs, tag = 'smem constant byte address 0x4 - core index']
  #allocation1 [shape = 'u32[144,128]{1,0:T(1,128)}', space=vmem, size = 0x12000, scoped, tag = 'internal scratch']
  #allocation2 [shape = 's32[1]{0}', space=sflag, size = 0x4, scoped, tag = 'scoped memory for cell_forward.1']
  #allocation3 [shape = 'u8[512]{0}', space=smem, size = 0x200, scoped, tag = 'prefetched SMEM operand 0']
  %s0 = inlined_call_operand.vmem [shape: f32[18], index: 0, kind: input, shape index: {}]
  %s1 = inlined_call_operand.hbm [shape: f32[2,8,128], index: 1, kind: input, shape index: {}]
  %s2 = inlined_call_operand.hbm [shape: f32[5,2,8,128], index: 2, kind: input, shape index: {}]
  %s3 = inlined_call_operand.vmem [shape: f32[2,8,128], index: 3, kind: input, shape index: {}]
  %s4 = inlined_call_operand.hbm [shape: f32[5,2,8,128], index: 4, kind: input, shape index: {}]
  %s5 = inlined_call_operand.hbm [shape: f32[2,5], index: 5, kind: output, shape index: {}]
  %s6 = sld [smem:[#allocation0]]
  $region38: #{cell_forward.1} parent=0
    _
  %s8 = ssub.s32 1, %s6
  %s9 = scalar_select 0, %s8, %s6
  %s10 = sshll.u32 %s0, 4
  %s11 = int_to_ptr.vmem [resolvable:$true] %s10
  %13 = dma.vmem_to_smem %s11, 16, [#allocation3], [#allocation2]
  %14 = dma.done [#allocation2], 16
  %15 = sfence
  $region1: #{cell_forward.1} parent=0
    #allocation4 [shape = 'u8[8192]{0}', space=vmem, size = 0x2000, scoped, tag = 'input window, operand 1, single buffered']
    #allocation5 [shape = 's32[1]{0}', space=sflag, size = 0x4, scoped, tag = 'scoped memory for cell_forward.1']
    #allocation6 [shape = 's32[1]{0}', space=sflag, size = 0x4, scoped, tag = 'scoped memory for cell_forward.1']
    #allocation7 [shape = 'u8[40960]{0}', space=vmem, size = 0xa000, scoped, tag = 'input window, operand 2, single buffered']
    #allocation8 [shape = 's32[1]{0}', space=sflag, size = 0x4, scoped, tag = 'scoped memory for cell_forward.1']
    #allocation9 [shape = 'u8[40960]{0}', space=vmem, size = 0xa000, scoped, tag = 'input window, operand 4, single buffered']
    #allocation10 [shape = 'u8[1024]{0}', space=vmem, size = 0x400, scoped, tag = 'output window, operand 0, single buffered']
    %16 = vsyncpa [#allocation5], 0
    %17 = vsyncpa [#allocation8], 0
    %18 = vsyncpa [#allocation6], 0
    // Predicated region
    $region2: #{cell_forward.1} parent=1 // pred_check
      _
    $region3: #{cell_forward.1} parent=1 // pred_check_branch
      %20 = sbr.rel (0) target = $region5
    $region4: #{cell_forward.1} parent=1 // pred_region
      %s22 = ssub.s32 256, 256
      %23 = vsyncadd [#allocation5], %s22
      %s24 = sshll.u32 [#allocation4], 4
      %s25 = int_to_ptr.vmem [resolvable:$true] %s24
      %30 = dma.hbm_to_vmem [thread:$0]  %s1, 256, %s25, [#allocation5], 128, 128, 8
    $region5: #{cell_forward.1} parent=1 // pred_fallthru
      _
    // Predicated region
    $region6: #{cell_forward.1} parent=1 // pred_check
      _
    $region7: #{cell_forward.1} parent=1 // pred_check_branch
      %32 = sbr.rel (0) target = $region9
    $region8: #{cell_forward.1} parent=1 // pred_region
      %s34 = ssub.s32 1280, 1280
      %35 = vsyncadd [#allocation8], %s34
      %s36 = sshll.u32 [#allocation7], 4
      %s37 = int_to_ptr.vmem [resolvable:$true] %s36
      %42 = dma.hbm_to_vmem [thread:$0]  %s2, 1280, %s37, [#allocation8], 128, 128, 8
    $region9: #{cell_forward.1} parent=1 // pred_fallthru
      _
    // Predicated region
    $region10: #{cell_forward.1} parent=1 // pred_check
      _
    $region11: #{cell_forward.1} parent=1 // pred_check_branch
      %44 = sbr.rel (0) target = $region13
    $region12: #{cell_forward.1} parent=1 // pred_region
      _
    $region13: #{cell_forward.1} parent=1 // pred_fallthru
      _
    // Predicated region
    $region14: #{cell_forward.1} parent=1 // pred_check
      _
    $region15: #{cell_forward.1} parent=1 // pred_check_branch
      %46 = sbr.rel (0) target = $region17
    $region16: #{cell_forward.1} parent=1 // pred_region
      %s48 = ssub.s32 1280, 1280
      %49 = vsyncadd [#allocation8], %s48
      %s50 = sshll.u32 [#allocation9], 4
      %s51 = int_to_ptr.vmem [resolvable:$true] %s50
      %56 = dma.hbm_to_vmem [thread:$0]  %s4, 1280, %s51, [#allocation8], 128, 128, 8
    $region17: #{cell_forward.1} parent=1 // pred_fallthru
      _
    // Predicated region
    $region18: #{cell_forward.1} parent=1 // pred_check
      _
    $region19: #{cell_forward.1} parent=1 // pred_check_branch
      %58 = sbr.rel (0) target = $region21
    $region20: #{cell_forward.1} parent=1 // pred_region
      %59 = dma.done [#allocation5], 256
    $region21: #{cell_forward.1} parent=1 // pred_fallthru
      _
    // Predicated region
    $region22: #{cell_forward.1} parent=1 // pred_check
      _
    $region23: #{cell_forward.1} parent=1 // pred_check_branch
      %61 = sbr.rel (0) target = $region25
    $region24: #{cell_forward.1} parent=1 // pred_region
      %62 = dma.done [#allocation8], 1280
    $region25: #{cell_forward.1} parent=1 // pred_fallthru
      _
    // Predicated region
    $region26: #{cell_forward.1} parent=1 // pred_check
      _
    $region27: #{cell_forward.1} parent=1 // pred_check_branch
      %64 = sbr.rel (0) target = $region29
    $region28: #{cell_forward.1} parent=1 // pred_region
      %65 = dma.done [#allocation8], 1280
    $region29: #{cell_forward.1} parent=1 // pred_fallthru
      _
    %s66 = sld [smem:[#allocation3]]
    %s67 = sld [smem:[#allocation3 + $0x1]]
    %s68 = sld [smem:[#allocation3 + $0x2]]
    %s69 = sld [smem:[#allocation3 + $0x3]]
    %s70 = sld [smem:[#allocation3 + $0x4]]
    %s71 = sld [smem:[#allocation3 + $0x5]]
    %s72 = sld [smem:[#allocation3 + $0x6]]
    %s73 = sld [smem:[#allocation3 + $0x7]]
    %s74 = sld [smem:[#allocation3 + $0x8]]
    %s75 = sld [smem:[#allocation3 + $0x9]]
    %s76 = sld [smem:[#allocation3 + $0xa]]
    %s77 = sld [smem:[#allocation3 + $0xb]]
    %s78 = sld [smem:[#allocation3 + $0xc]]
    %s79 = sld [smem:[#allocation3 + $0xd]]
    %s80 = sld [smem:[#allocation3 + $0xe]]
    %s81 = sld [smem:[#allocation3 + $0xf]]
    %s82 = sld [smem:[#allocation3 + $0x10]]
    %s83 = sld [smem:[#allocation3 + $0x11]]
    %v84 = vld [vmem:[#allocation4] sm:$0xff]
    %v85 = vld [vmem:[#allocation4 + $0x8] sm:$0xff]
    %v86 = vmul.f32 %v84, %v84
    %v87 = vmul.f32 %v85, %v85
    %88 = vadd.xlane.f32.xlu0 %v86
    %v89 = vpop.xlane.xlu0 %88
    %90 = vadd.xlane.f32.xlu0 %v87
    %v91 = vpop.xlane.xlu0 %90
    %v92 = vrot.slane %v86, 4
    %v93 = vadd.f32 %v86, %v92
    %v94 = vrot.slane %v93, 2
    %v95 = vadd.f32 %v93, %v94
    %v96 = vrot.slane %v95, 1
    %v97 = vadd.f32 %v95, %v96
    %v98 = vrot.slane %v87, 4
    %v99 = vadd.f32 %v87, %v98
    %v100 = vrot.slane %v99, 2
    %v101 = vadd.f32 %v99, %v100
    %v102 = vrot.slane %v101, 1
    %v103 = vadd.f32 %v101, %v102
    %v104 = vrot.slane %v89, 4
    %v105 = vadd.f32 %v89, %v104
    %v106 = vrot.slane %v105, 2
    %v107 = vadd.f32 %v105, %v106
    %v108 = vrot.slane %v107, 1
    %v109 = vadd.f32 %v107, %v108
    %v110 = vrot.slane %v91, 4
    %v111 = vadd.f32 %v91, %v110
    %v112 = vrot.slane %v111, 2
    %v113 = vadd.f32 %v111, %v112
    %v114 = vrot.slane %v113, 1
    %v115 = vadd.f32 %v113, %v114
    %v116 = vrsqrt.pop %v97
    %v117 = vmul.f32 %v97, %v116
    %vm118 = vcmp.eq.f32.partialorder %v97, inf
    %v119 = vsel %vm118, %v97, %v117
    %vm120 = vcmp.eq.f32.partialorder %v97, 0.0
    %v121 = vand.u32 %v97, 2147483648
    %v122 = vsel %vm120, %v121, %v119
    %v123 = vrsqrt.pop %v103
    %v124 = vmul.f32 %v103, %v123
    %vm125 = vcmp.eq.f32.partialorder %v103, inf
    %v126 = vsel %vm125, %v103, %v124
    %vm127 = vcmp.eq.f32.partialorder %v103, 0.0
    %v128 = vand.u32 %v103, 2147483648
    %v129 = vsel %vm127, %v128, %v126
    %v130 = vadd.f32 %v122, 1e-12
    %v131 = vadd.f32 %v129, 1e-12
    %v132 = vrcp.pop %v130
    %v133 = vrcp.pop %v131
    %v134 = vstv %s67
    %v135 = vmul.f32 %v134, %v132
    %v136 = vmul.f32 %v134, %v133
    %v137 = vstv %s66
    %v138 = vadd.f32 %v137, %v135
    %v139 = vadd.f32 %v137, %v136
    %v140 = vrsqrt.pop %v109
    %v141 = vmul.f32 %v109, %v140
    %vm142 = vcmp.eq.f32.partialorder %v109, inf
    %v143 = vsel %vm142, %v109, %v141
    %vm144 = vcmp.eq.f32.partialorder %v109, 0.0
    %v145 = vand.u32 %v109, 2147483648
    %v146 = vsel %vm144, %v145, %v143
    %v147 = vrsqrt.pop %v115
    %v148 = vmul.f32 %v115, %v147
    %vm149 = vcmp.eq.f32.partialorder %v115, inf
    %v150 = vsel %vm149, %v115, %v148
    %vm151 = vcmp.eq.f32.partialorder %v115, 0.0
    %v152 = vand.u32 %v115, 2147483648
    %v153 = vsel %vm151, %v152, %v150
    %v154 = vadd.f32 %v146, 1e-12
    %v155 = vadd.f32 %v153, 1e-12
    %v156 = vrcp.pop %v154
    %v157 = vrcp.pop %v155
    %v158 = vstv %s68
    %v159 = vmul.f32 %v158, %v156
    %v160 = vmul.f32 %v158, %v157
    %v161 = vadd.f32 %v138, %v159
    %v162 = vadd.f32 %v139, %v160
    %v163 = vrsqrt.pop %v89
    %v164 = vmul.f32 %v89, %v163
    %vm165 = vcmp.eq.f32.partialorder %v89, inf
    %v166 = vsel %vm165, %v89, %v164
    %vm167 = vcmp.eq.f32.partialorder %v89, 0.0
    %v168 = vand.u32 %v89, 2147483648
    %v169 = vsel %vm167, %v168, %v166
    %v170 = vrsqrt.pop %v91
    %v171 = vmul.f32 %v91, %v170
    %vm172 = vcmp.eq.f32.partialorder %v91, inf
    %v173 = vsel %vm172, %v91, %v171
    %vm174 = vcmp.eq.f32.partialorder %v91, 0.0
    %v175 = vand.u32 %v91, 2147483648
    %v176 = vsel %vm174, %v175, %v173
    %v177 = vadd.f32 %v169, 1e-12
    %v178 = vadd.f32 %v176, 1e-12
    %v179 = vrcp.pop %v177
    %v180 = vrcp.pop %v178
    %v181 = vstv %s69
    %v182 = vmul.f32 %v181, %v179
    %v183 = vmul.f32 %v181, %v180
    %v184 = vadd.f32 %v161, %v182
    %v185 = vadd.f32 %v162, %v183
    %v186 = vmul.f32 %v84, %v184
    %v187 = vmul.f32 %v85, %v185
    %v188 = vld [vmem:[#allocation7] sm:$0xff]
    %v189 = vld [vmem:[#allocation7 + $0x8] sm:$0xff]
    %v190 = vld [vmem:[#allocation7 + $0x10] sm:$0xff]
    %v191 = vld [vmem:[#allocation7 + $0x18] sm:$0xff]
    %v192 = vld [vmem:[#allocation7 + $0x20] sm:$0xff]
    %v193 = vld [vmem:[#allocation7 + $0x28] sm:$0xff]
    %v194 = vld [vmem:[#allocation7 + $0x30] sm:$0xff]
    %v195 = vld [vmem:[#allocation7 + $0x38] sm:$0xff]
    %v196 = vld [vmem:[#allocation7 + $0x40] sm:$0xff]
    %v197 = vld [vmem:[#allocation7 + $0x48] sm:$0xff]
    %v198 = vmul.f32 %v188, %v188
    %v199 = vmul.f32 %v189, %v189
    %v200 = vmul.f32 %v190, %v190
    %v201 = vmul.f32 %v191, %v191
    %v202 = vmul.f32 %v192, %v192
    %v203 = vmul.f32 %v193, %v193
    %v204 = vmul.f32 %v194, %v194
    %v205 = vmul.f32 %v195, %v195
    %v206 = vmul.f32 %v196, %v196
    %v207 = vmul.f32 %v197, %v197
    %208 = vadd.xlane.f32.xlu0 %v198
    %v209 = vpop.xlane.xlu0 %208
    %210 = vadd.xlane.f32.xlu0 %v199
    %v211 = vpop.xlane.xlu0 %210
    %212 = vadd.xlane.f32.xlu0 %v200
    %v213 = vpop.xlane.xlu0 %212
    %214 = vadd.xlane.f32.xlu0 %v201
    %v215 = vpop.xlane.xlu0 %214
    %216 = vadd.xlane.f32.xlu0 %v202
    %v217 = vpop.xlane.xlu0 %216
    %218 = vadd.xlane.f32.xlu0 %v203
    %v219 = vpop.xlane.xlu0 %218
    %220 = vadd.xlane.f32.xlu0 %v204
    %v221 = vpop.xlane.xlu0 %220
    %222 = vadd.xlane.f32.xlu0 %v205
    %v223 = vpop.xlane.xlu0 %222
    %224 = vadd.xlane.f32.xlu0 %v206
    %v225 = vpop.xlane.xlu0 %224
    %226 = vadd.xlane.f32.xlu0 %v207
    %v227 = vpop.xlane.xlu0 %226
    %v228 = vrot.slane %v198, 4
    %v229 = vadd.f32 %v198, %v228
    %v230 = vrot.slane %v229, 2
    %v231 = vadd.f32 %v229, %v230
    %v232 = vrot.slane %v231, 1
    %v233 = vadd.f32 %v231, %v232
    %v234 = vrot.slane %v199, 4
    %v235 = vadd.f32 %v199, %v234
    %v236 = vrot.slane %v235, 2
    %v237 = vadd.f32 %v235, %v236
    %v238 = vrot.slane %v237, 1
    %v239 = vadd.f32 %v237, %v238
    %v240 = vrot.slane %v200, 4
    %v241 = vadd.f32 %v200, %v240
    %v242 = vrot.slane %v241, 2
    %v243 = vadd.f32 %v241, %v242
    %v244 = vrot.slane %v243, 1
    %v245 = vadd.f32 %v243, %v244
    %v246 = vrot.slane %v201, 4
    %v247 = vadd.f32 %v201, %v246
    %v248 = vrot.slane %v247, 2
    %v249 = vadd.f32 %v247, %v248
    %v250 = vrot.slane %v249, 1
    %v251 = vadd.f32 %v249, %v250
    %v252 = vrot.slane %v202, 4
    %v253 = vadd.f32 %v202, %v252
    %v254 = vrot.slane %v253, 2
    %v255 = vadd.f32 %v253, %v254
    %v256 = vrot.slane %v255, 1
    %v257 = vadd.f32 %v255, %v256
    %v258 = vrot.slane %v203, 4
    %v259 = vadd.f32 %v203, %v258
    %v260 = vrot.slane %v259, 2
    %v261 = vadd.f32 %v259, %v260
    %v262 = vrot.slane %v261, 1
    %v263 = vadd.f32 %v261, %v262
    %v264 = vrot.slane %v204, 4
    %v265 = vadd.f32 %v204, %v264
    %v266 = vrot.slane %v265, 2
    %v267 = vadd.f32 %v265, %v266
    %v268 = vrot.slane %v267, 1
    %v269 = vadd.f32 %v267, %v268
    %v270 = vrot.slane %v205, 4
    %v271 = vadd.f32 %v205, %v270
    %v272 = vrot.slane %v271, 2
    %v273 = vadd.f32 %v271, %v272
    %v274 = vrot.slane %v273, 1
    %v275 = vadd.f32 %v273, %v274
    %v276 = vrot.slane %v206, 4
    %v277 = vadd.f32 %v206, %v276
    %v278 = vrot.slane %v277, 2
    %v279 = vadd.f32 %v277, %v278
    %v280 = vrot.slane %v279, 1
    %v281 = vadd.f32 %v279, %v280
    %v282 = vrot.slane %v207, 4
    %v283 = vadd.f32 %v207, %v282
    %v284 = vrot.slane %v283, 2
    %v285 = vadd.f32 %v283, %v284
    %v286 = vrot.slane %v285, 1
    %v287 = vadd.f32 %v285, %v286
    %v288 = vrot.slane %v209, 4
    %v289 = vadd.f32 %v209, %v288
    %v290 = vrot.slane %v289, 2
    %v291 = vadd.f32 %v289, %v290
    %v292 = vrot.slane %v291, 1
    %v293 = vadd.f32 %v291, %v292
    %v294 = vrot.slane %v211, 4
    %v295 = vadd.f32 %v211, %v294
    %v296 = vrot.slane %v295, 2
    %v297 = vadd.f32 %v295, %v296
    %v298 = vrot.slane %v297, 1
    %v299 = vadd.f32 %v297, %v298
    %v300 = vrot.slane %v213, 4
    %v301 = vadd.f32 %v213, %v300
    %v302 = vrot.slane %v301, 2
    %v303 = vadd.f32 %v301, %v302
    %v304 = vrot.slane %v303, 1
    %v305 = vadd.f32 %v303, %v304
    %v306 = vrot.slane %v215, 4
    %v307 = vadd.f32 %v215, %v306
    %v308 = vrot.slane %v307, 2
    %v309 = vadd.f32 %v307, %v308
    %v310 = vrot.slane %v309, 1
    %v311 = vadd.f32 %v309, %v310
    %v312 = vrot.slane %v217, 4
    %v313 = vadd.f32 %v217, %v312
    %v314 = vrot.slane %v313, 2
    %v315 = vadd.f32 %v313, %v314
    %v316 = vrot.slane %v315, 1
    %v317 = vadd.f32 %v315, %v316
    %v318 = vrot.slane %v219, 4
    %v319 = vadd.f32 %v219, %v318
    %v320 = vrot.slane %v319, 2
    %v321 = vadd.f32 %v319, %v320
    %v322 = vrot.slane %v321, 1
    %v323 = vadd.f32 %v321, %v322
    %v324 = vrot.slane %v221, 4
    %v325 = vadd.f32 %v221, %v324
    %v326 = vrot.slane %v325, 2
    %v327 = vadd.f32 %v325, %v326
    %v328 = vrot.slane %v327, 1
    %v329 = vadd.f32 %v327, %v328
    %v330 = vrot.slane %v223, 4
    %v331 = vadd.f32 %v223, %v330
    %v332 = vrot.slane %v331, 2
    %v333 = vadd.f32 %v331, %v332
    %v334 = vrot.slane %v333, 1
    %v335 = vadd.f32 %v333, %v334
    %v336 = vrot.slane %v225, 4
    %v337 = vadd.f32 %v225, %v336
    %v338 = vrot.slane %v337, 2
    %v339 = vadd.f32 %v337, %v338
    %v340 = vrot.slane %v339, 1
    %v341 = vadd.f32 %v339, %v340
    %v342 = vrot.slane %v227, 4
    %v343 = vadd.f32 %v227, %v342
    %v344 = vrot.slane %v343, 2
    %v345 = vadd.f32 %v343, %v344
    %v346 = vrot.slane %v345, 1
    %v347 = vadd.f32 %v345, %v346
    %v348 = vrsqrt.pop %v233
    %v349 = vmul.f32 %v233, %v348
    %vm350 = vcmp.eq.f32.partialorder %v233, inf
    %v351 = vsel %vm350, %v233, %v349
    %vm352 = vcmp.eq.f32.partialorder %v233, 0.0
    %v353 = vand.u32 %v233, 2147483648
    %v354 = vsel %vm352, %v353, %v351
    %v355 = vrsqrt.pop %v239
    %v356 = vmul.f32 %v239, %v355
    %vm357 = vcmp.eq.f32.partialorder %v239, inf
    %v358 = vsel %vm357, %v239, %v356
    %vm359 = vcmp.eq.f32.partialorder %v239, 0.0
    %v360 = vand.u32 %v239, 2147483648
    %v361 = vsel %vm359, %v360, %v358
    %v362 = vrsqrt.pop %v245
    %v363 = vmul.f32 %v245, %v362
    %vm364 = vcmp.eq.f32.partialorder %v245, inf
    %v365 = vsel %vm364, %v245, %v363
    %vm366 = vcmp.eq.f32.partialorder %v245, 0.0
    %v367 = vand.u32 %v245, 2147483648
    %v368 = vsel %vm366, %v367, %v365
    %v369 = vrsqrt.pop %v251
    %v370 = vmul.f32 %v251, %v369
    %vm371 = vcmp.eq.f32.partialorder %v251, inf
    %v372 = vsel %vm371, %v251, %v370
    %vm373 = vcmp.eq.f32.partialorder %v251, 0.0
    %v374 = vand.u32 %v251, 2147483648
    %v375 = vsel %vm373, %v374, %v372
    %v376 = vrsqrt.pop %v257
    %v377 = vmul.f32 %v257, %v376
    %vm378 = vcmp.eq.f32.partialorder %v257, inf
    %v379 = vsel %vm378, %v257, %v377
    %vm380 = vcmp.eq.f32.partialorder %v257, 0.0
    %v381 = vand.u32 %v257, 2147483648
    %v382 = vsel %vm380, %v381, %v379
    %v383 = vrsqrt.pop %v263
    %v384 = vmul.f32 %v263, %v383
    %vm385 = vcmp.eq.f32.partialorder %v263, inf
    %v386 = vsel %vm385, %v263, %v384
    %vm387 = vcmp.eq.f32.partialorder %v263, 0.0
    %v388 = vand.u32 %v263, 2147483648
    %v389 = vsel %vm387, %v388, %v386
    %v390 = vrsqrt.pop %v269
    %v391 = vmul.f32 %v269, %v390
    %vm392 = vcmp.eq.f32.partialorder %v269, inf
    %v393 = vsel %vm392, %v269, %v391
    %vm394 = vcmp.eq.f32.partialorder %v269, 0.0
    %v395 = vand.u32 %v269, 2147483648
    %v396 = vsel %vm394, %v395, %v393
    %v397 = vrsqrt.pop %v275
    %v398 = vmul.f32 %v275, %v397
    %vm399 = vcmp.eq.f32.partialorder %v275, inf
    %v400 = vsel %vm399, %v275, %v398
    %vm401 = vcmp.eq.f32.partialorder %v275, 0.0
    %v402 = vand.u32 %v275, 2147483648
    %v403 = vsel %vm401, %v402, %v400
    %v404 = vrsqrt.pop %v281
    %v405 = vmul.f32 %v281, %v404
    %vm406 = vcmp.eq.f32.partialorder %v281, inf
    %v407 = vsel %vm406, %v281, %v405
    %vm408 = vcmp.eq.f32.partialorder %v281, 0.0
    %v409 = vand.u32 %v281, 2147483648
    %v410 = vsel %vm408, %v409, %v407
    %v411 = vrsqrt.pop %v287
    %v412 = vmul.f32 %v287, %v411
    %vm413 = vcmp.eq.f32.partialorder %v287, inf
    %v414 = vsel %vm413, %v287, %v412
    %vm415 = vcmp.eq.f32.partialorder %v287, 0.0
    %v416 = vand.u32 %v287, 2147483648
    %v417 = vsel %vm415, %v416, %v414
    %v418 = vadd.f32 %v354, 1e-12
    %v419 = vadd.f32 %v361, 1e-12
    %v420 = vadd.f32 %v368, 1e-12
    %v421 = vadd.f32 %v375, 1e-12
    %v422 = vadd.f32 %v382, 1e-12
    %v423 = vadd.f32 %v389, 1e-12
    %v424 = vadd.f32 %v396, 1e-12
    %v425 = vadd.f32 %v403, 1e-12
    %v426 = vadd.f32 %v410, 1e-12
    %v427 = vadd.f32 %v417, 1e-12
    %v428 = vrcp.pop %v418
    %v429 = vrcp.pop %v419
    %v430 = vrcp.pop %v420
    %v431 = vrcp.pop %v421
    %v432 = vrcp.pop %v422
    %v433 = vrcp.pop %v423
    %v434 = vrcp.pop %v424
    %v435 = vrcp.pop %v425
    %v436 = vrcp.pop %v426
    %v437 = vrcp.pop %v427
    %v438 = vmul.f32 %v134, %v428
    %v439 = vmul.f32 %v134, %v429
    %v440 = vmul.f32 %v134, %v430
    %v441 = vmul.f32 %v134, %v431
    %v442 = vmul.f32 %v134, %v432
    %v443 = vmul.f32 %v134, %v433
    %v444 = vmul.f32 %v134, %v434
    %v445 = vmul.f32 %v134, %v435
    %v446 = vmul.f32 %v134, %v436
    %v447 = vmul.f32 %v134, %v437
    %v448 = vadd.f32 %v137, %v438
    %v449 = vadd.f32 %v137, %v439
    %v450 = vadd.f32 %v137, %v440
    %v451 = vadd.f32 %v137, %v441
    %v452 = vadd.f32 %v137, %v442
    %v453 = vadd.f32 %v137, %v443
    %v454 = vadd.f32 %v137, %v444
    %v455 = vadd.f32 %v137, %v445
    %v456 = vadd.f32 %v137, %v446
    %v457 = vadd.f32 %v137, %v447
    %v458 = vrsqrt.pop %v293
    %v459 = vmul.f32 %v293, %v458
    %vm460 = vcmp.eq.f32.partialorder %v293, inf
    %v461 = vsel %vm460, %v293, %v459
    %vm462 = vcmp.eq.f32.partialorder %v293, 0.0
    %v463 = vand.u32 %v293, 2147483648
    %v464 = vsel %vm462, %v463, %v461
    %v465 = vrsqrt.pop %v299
    %v466 = vmul.f32 %v299, %v465
    %vm467 = vcmp.eq.f32.partialorder %v299, inf
    %v468 = vsel %vm467, %v299, %v466
    %vm469 = vcmp.eq.f32.partialorder %v299, 0.0
    %v470 = vand.u32 %v299, 2147483648
    %v471 = vsel %vm469, %v470, %v468
    %v472 = vrsqrt.pop %v305
    %v473 = vmul.f32 %v305, %v472
    %vm474 = vcmp.eq.f32.partialorder %v305, inf
    %v475 = vsel %vm474, %v305, %v473
    %vm476 = vcmp.eq.f32.partialorder %v305, 0.0
    %v477 = vand.u32 %v305, 2147483648
    %v478 = vsel %vm476, %v477, %v475
    %v479 = vrsqrt.pop %v311
    %v480 = vmul.f32 %v311, %v479
    %vm481 = vcmp.eq.f32.partialorder %v311, inf
    %v482 = vsel %vm481, %v311, %v480
    %vm483 = vcmp.eq.f32.partialorder %v311, 0.0
    %v484 = vand.u32 %v311, 2147483648
    %v485 = vsel %vm483, %v484, %v482
    %v486 = vrsqrt.pop %v317
    %v487 = vmul.f32 %v317, %v486
    %vm488 = vcmp.eq.f32.partialorder %v317, inf
    %v489 = vsel %vm488, %v317, %v487
    %vm490 = vcmp.eq.f32.partialorder %v317, 0.0
    %v491 = vand.u32 %v317, 2147483648
    %v492 = vsel %vm490, %v491, %v489
    %v493 = vrsqrt.pop %v323
    %v494 = vmul.f32 %v323, %v493
    %vm495 = vcmp.eq.f32.partialorder %v323, inf
    %v496 = vsel %vm495, %v323, %v494
    %vm497 = vcmp.eq.f32.partialorder %v323, 0.0
    %v498 = vand.u32 %v323, 2147483648
    %v499 = vsel %vm497, %v498, %v496
    %v500 = vrsqrt.pop %v329
    %v501 = vmul.f32 %v329, %v500
    %vm502 = vcmp.eq.f32.partialorder %v329, inf
    %v503 = vsel %vm502, %v329, %v501
    %vm504 = vcmp.eq.f32.partialorder %v329, 0.0
    %v505 = vand.u32 %v329, 2147483648
    %v506 = vsel %vm504, %v505, %v503
    %v507 = vrsqrt.pop %v335
    %v508 = vmul.f32 %v335, %v507
    %vm509 = vcmp.eq.f32.partialorder %v335, inf
    %v510 = vsel %vm509, %v335, %v508
    %vm511 = vcmp.eq.f32.partialorder %v335, 0.0
    %v512 = vand.u32 %v335, 2147483648
    %v513 = vsel %vm511, %v512, %v510
    %v514 = vrsqrt.pop %v341
    %v515 = vmul.f32 %v341, %v514
    %vm516 = vcmp.eq.f32.partialorder %v341, inf
    %v517 = vsel %vm516, %v341, %v515
    %vm518 = vcmp.eq.f32.partialorder %v341, 0.0
    %v519 = vand.u32 %v341, 2147483648
    %v520 = vsel %vm518, %v519, %v517
    %v521 = vrsqrt.pop %v347
    %v522 = vmul.f32 %v347, %v521
    %vm523 = vcmp.eq.f32.partialorder %v347, inf
    %v524 = vsel %vm523, %v347, %v522
    %vm525 = vcmp.eq.f32.partialorder %v347, 0.0
    %v526 = vand.u32 %v347, 2147483648
    %v527 = vsel %vm525, %v526, %v524
    %v528 = vadd.f32 %v464, 1e-12
    %v529 = vadd.f32 %v471, 1e-12
    %v530 = vadd.f32 %v478, 1e-12
    %v531 = vadd.f32 %v485, 1e-12
    %v532 = vadd.f32 %v492, 1e-12
    %v533 = vadd.f32 %v499, 1e-12
    %v534 = vadd.f32 %v506, 1e-12
    %v535 = vadd.f32 %v513, 1e-12
    %v536 = vadd.f32 %v520, 1e-12
    %v537 = vadd.f32 %v527, 1e-12
    %v538 = vrcp.pop %v528
    %v539 = vrcp.pop %v529
    %v540 = vrcp.pop %v530
    %v541 = vrcp.pop %v531
    %v542 = vrcp.pop %v532
    %v543 = vrcp.pop %v533
    %v544 = vrcp.pop %v534
    %v545 = vrcp.pop %v535
    %v546 = vrcp.pop %v536
    %v547 = vrcp.pop %v537
    %v548 = vmul.f32 %v158, %v538
    %v549 = vmul.f32 %v158, %v539
    %v550 = vmul.f32 %v158, %v540
    %v551 = vmul.f32 %v158, %v541
    %v552 = vmul.f32 %v158, %v542
    %v553 = vmul.f32 %v158, %v543
    %v554 = vmul.f32 %v158, %v544
    %v555 = vmul.f32 %v158, %v545
    %v556 = vmul.f32 %v158, %v546
    %v557 = vmul.f32 %v158, %v547
    %v558 = vadd.f32 %v448, %v548
    %v559 = vadd.f32 %v449, %v549
    %v560 = vadd.f32 %v450, %v550
    %v561 = vadd.f32 %v451, %v551
    %v562 = vadd.f32 %v452, %v552
    %v563 = vadd.f32 %v453, %v553
    %v564 = vadd.f32 %v454, %v554
    %v565 = vadd.f32 %v455, %v555
    %v566 = vadd.f32 %v456, %v556
    %v567 = vadd.f32 %v457, %v557
    %v568 = vrsqrt.pop %v209
    %v569 = vmul.f32 %v209, %v568
    %vm570 = vcmp.eq.f32.partialorder %v209, inf
    %v571 = vsel %vm570, %v209, %v569
    %vm572 = vcmp.eq.f32.partialorder %v209, 0.0
    %v573 = vand.u32 %v209, 2147483648
    %v574 = vsel %vm572, %v573, %v571
    %v575 = vrsqrt.pop %v211
    %v576 = vmul.f32 %v211, %v575
    %vm577 = vcmp.eq.f32.partialorder %v211, inf
    %v578 = vsel %vm577, %v211, %v576
    %vm579 = vcmp.eq.f32.partialorder %v211, 0.0
    %v580 = vand.u32 %v211, 2147483648
    %v581 = vsel %vm579, %v580, %v578
    %v582 = vrsqrt.pop %v213
    %v583 = vmul.f32 %v213, %v582
    %vm584 = vcmp.eq.f32.partialorder %v213, inf
    %v585 = vsel %vm584, %v213, %v583
    %vm586 = vcmp.eq.f32.partialorder %v213, 0.0
    %v587 = vand.u32 %v213, 2147483648
    %v588 = vsel %vm586, %v587, %v585
    %v589 = vrsqrt.pop %v215
    %v590 = vmul.f32 %v215, %v589
    %vm591 = vcmp.eq.f32.partialorder %v215, inf
    %v592 = vsel %vm591, %v215, %v590
    %vm593 = vcmp.eq.f32.partialorder %v215, 0.0
    %v594 = vand.u32 %v215, 2147483648
    %v595 = vsel %vm593, %v594, %v592
    %v596 = vrsqrt.pop %v217
    %v597 = vmul.f32 %v217, %v596
    %vm598 = vcmp.eq.f32.partialorder %v217, inf
    %v599 = vsel %vm598, %v217, %v597
    %vm600 = vcmp.eq.f32.partialorder %v217, 0.0
    %v601 = vand.u32 %v217, 2147483648
    %v602 = vsel %vm600, %v601, %v599
    %v603 = vrsqrt.pop %v219
    %v604 = vmul.f32 %v219, %v603
    %vm605 = vcmp.eq.f32.partialorder %v219, inf
    %v606 = vsel %vm605, %v219, %v604
    %vm607 = vcmp.eq.f32.partialorder %v219, 0.0
    %v608 = vand.u32 %v219, 2147483648
    %v609 = vsel %vm607, %v608, %v606
    %v610 = vrsqrt.pop %v221
    %v611 = vmul.f32 %v221, %v610
    %vm612 = vcmp.eq.f32.partialorder %v221, inf
    %v613 = vsel %vm612, %v221, %v611
    %vm614 = vcmp.eq.f32.partialorder %v221, 0.0
    %v615 = vand.u32 %v221, 2147483648
    %v616 = vsel %vm614, %v615, %v613
    %v617 = vrsqrt.pop %v223
    %v618 = vmul.f32 %v223, %v617
    %vm619 = vcmp.eq.f32.partialorder %v223, inf
    %v620 = vsel %vm619, %v223, %v618
    %vm621 = vcmp.eq.f32.partialorder %v223, 0.0
    %v622 = vand.u32 %v223, 2147483648
    %v623 = vsel %vm621, %v622, %v620
    %v624 = vrsqrt.pop %v225
    %v625 = vmul.f32 %v225, %v624
    %vm626 = vcmp.eq.f32.partialorder %v225, inf
    %v627 = vsel %vm626, %v225, %v625
    %vm628 = vcmp.eq.f32.partialorder %v225, 0.0
    %v629 = vand.u32 %v225, 2147483648
    %v630 = vsel %vm628, %v629, %v627
    %v631 = vrsqrt.pop %v227
    %v632 = vmul.f32 %v227, %v631
    %vm633 = vcmp.eq.f32.partialorder %v227, inf
    %v634 = vsel %vm633, %v227, %v632
    %vm635 = vcmp.eq.f32.partialorder %v227, 0.0
    %v636 = vand.u32 %v227, 2147483648
    %v637 = vsel %vm635, %v636, %v634
    %v638 = vadd.f32 %v574, 1e-12
    %v639 = vadd.f32 %v581, 1e-12
    %v640 = vadd.f32 %v588, 1e-12
    %v641 = vadd.f32 %v595, 1e-12
    %v642 = vadd.f32 %v602, 1e-12
    %v643 = vadd.f32 %v609, 1e-12
    %v644 = vadd.f32 %v616, 1e-12
    %v645 = vadd.f32 %v623, 1e-12
    %v646 = vadd.f32 %v630, 1e-12
    %v647 = vadd.f32 %v637, 1e-12
    %v648 = vrcp.pop %v638
    %v649 = vrcp.pop %v639
    %v650 = vrcp.pop %v640
    %v651 = vrcp.pop %v641
    %v652 = vrcp.pop %v642
    %v653 = vrcp.pop %v643
    %v654 = vrcp.pop %v644
    %v655 = vrcp.pop %v645
    %v656 = vrcp.pop %v646
    %v657 = vrcp.pop %v647
    %v658 = vmul.f32 %v181, %v648
    %v659 = vmul.f32 %v181, %v649
    %v660 = vmul.f32 %v181, %v650
    %v661 = vmul.f32 %v181, %v651
    %v662 = vmul.f32 %v181, %v652
    %v663 = vmul.f32 %v181, %v653
    %v664 = vmul.f32 %v181, %v654
    %v665 = vmul.f32 %v181, %v655
    %v666 = vmul.f32 %v181, %v656
    %v667 = vmul.f32 %v181, %v657
    %v668 = vadd.f32 %v558, %v658
    %v669 = vadd.f32 %v559, %v659
    %v670 = vadd.f32 %v560, %v660
    %v671 = vadd.f32 %v561, %v661
    %v672 = vadd.f32 %v562, %v662
    %v673 = vadd.f32 %v563, %v663
    %v674 = vadd.f32 %v564, %v664
    %v675 = vadd.f32 %v565, %v665
    %v676 = vadd.f32 %v566, %v666
    %v677 = vadd.f32 %v567, %v667
    %v678 = vmul.f32 %v188, %v668
    %v679 = vmul.f32 %v189, %v669
    %v680 = vmul.f32 %v190, %v670
    %v681 = vmul.f32 %v191, %v671
    %v682 = vmul.f32 %v192, %v672
    %v683 = vmul.f32 %v193, %v673
    %v684 = vmul.f32 %v194, %v674
    %v685 = vmul.f32 %v195, %v675
    %v686 = vmul.f32 %v196, %v676
    %v687 = vmul.f32 %v197, %v677
    %v688 = vcombine.high %v186, 0.0
    %v690 = vunpack.c.l.s4 1983009808
    %v691 = vunpack.c.0.s8 %v690
    %v692 = vlaneseq
    %v693 = vshrl.u32 %v692, 7
    %v694 = vsub.s32 %v691, %v693
    %v695 = vrot.slane %v186, %v694
    %v697 = vunpack.c.l.s4 1983009808
    %v698 = vunpack.c.0.s8 %v697
    %v699 = vlaneseq
    %v700 = vshrl.u32 %v699, 7
    %v701 = vsub.s32 %v698, %v700
    %v702 = vrot.slane %v688, %v701
    %v703 = vcombine.high %v187, 0.0
    %v705 = vunpack.c.l.s4 1983009808
    %v706 = vunpack.c.0.s8 %v705
    %v707 = vlaneseq
    %v708 = vshrl.u32 %v707, 7
    %v709 = vsub.s32 %v706, %v708
    %v710 = vrot.slane %v187, %v709
    %v712 = vunpack.c.l.s4 1983009808
    %v713 = vunpack.c.0.s8 %v712
    %v714 = vlaneseq
    %v715 = vshrl.u32 %v714, 7
    %v716 = vsub.s32 %v713, %v715
    %v717 = vrot.slane %v703, %v716
    %v718 = vcombine.low %v695, %v710
    %v719 = vcombine.high %v695, %v710
    %v721 = vunpack.c.l.s4 1934713408
    %v722 = vunpack.c.0.s8 %v721
    %v723 = vlaneseq
    %v724 = vshrl.u32 %v723, 7
    %v725 = vsub.s32 %v722, %v724
    %v726 = vrot.slane %v718, %v725
    %v728 = vunpack.c.l.s4 1934713408
    %v729 = vunpack.c.0.s8 %v728
    %v730 = vlaneseq
    %v731 = vshrl.u32 %v730, 7
    %v732 = vsub.s32 %v729, %v731
    %v733 = vrot.slane %v719, %v732
    %v734 = vcombine.low %v702, %v717
    %v735 = vcombine.high %v702, %v717
    %v737 = vunpack.c.l.s4 1934713408
    %v738 = vunpack.c.0.s8 %v737
    %v739 = vlaneseq
    %v740 = vshrl.u32 %v739, 7
    %v741 = vsub.s32 %v738, %v740
    %v742 = vrot.slane %v734, %v741
    %v744 = vunpack.c.l.s4 1934713408
    %v745 = vunpack.c.0.s8 %v744
    %v746 = vlaneseq
    %v747 = vshrl.u32 %v746, 7
    %v748 = vsub.s32 %v745, %v747
    %v749 = vrot.slane %v735, %v748
    %v750 = vcombine.high %v726, 0.0
    %v751 = vcombine.high %v733, 0.0
    %v752 = vcombine.high %v742, 0.0
    %v753 = vcombine.high %v749, 0.0
    %v754 = vcombine.low %v678, %v680
    %v755 = vcombine.high %v678, %v680
    %v757 = vunpack.c.l.s4 1983009808
    %v758 = vunpack.c.0.s8 %v757
    %v759 = vlaneseq
    %v760 = vshrl.u32 %v759, 7
    %v761 = vsub.s32 %v758, %v760
    %v762 = vrot.slane %v754, %v761
    %v764 = vunpack.c.l.s4 1983009808
    %v765 = vunpack.c.0.s8 %v764
    %v766 = vlaneseq
    %v767 = vshrl.u32 %v766, 7
    %v768 = vsub.s32 %v765, %v767
    %v769 = vrot.slane %v755, %v768
    %v770 = vcombine.low %v679, %v681
    %v771 = vcombine.high %v679, %v681
    %v773 = vunpack.c.l.s4 1983009808
    %v774 = vunpack.c.0.s8 %v773
    %v775 = vlaneseq
    %v776 = vshrl.u32 %v775, 7
    %v777 = vsub.s32 %v774, %v776
    %v778 = vrot.slane %v770, %v777
    %v780 = vunpack.c.l.s4 1983009808
    %v781 = vunpack.c.0.s8 %v780
    %v782 = vlaneseq
    %v783 = vshrl.u32 %v782, 7
    %v784 = vsub.s32 %v781, %v783
    %v785 = vrot.slane %v771, %v784
    %v786 = vcombine.low %v682, %v684
    %v787 = vcombine.high %v682, %v684
    %v789 = vunpack.c.l.s4 1983009808
    %v790 = vunpack.c.0.s8 %v789
    %v791 = vlaneseq
    %v792 = vshrl.u32 %v791, 7
    %v793 = vsub.s32 %v790, %v792
    %v794 = vrot.slane %v786, %v793
    %v796 = vunpack.c.l.s4 1983009808
    %v797 = vunpack.c.0.s8 %v796
    %v798 = vlaneseq
    %v799 = vshrl.u32 %v798, 7
    %v800 = vsub.s32 %v797, %v799
    %v801 = vrot.slane %v787, %v800
    %v802 = vcombine.low %v683, %v685
    %v803 = vcombine.high %v683, %v685
    %v805 = vunpack.c.l.s4 1983009808
    %v806 = vunpack.c.0.s8 %v805
    %v807 = vlaneseq
    %v808 = vshrl.u32 %v807, 7
    %v809 = vsub.s32 %v806, %v808
    %v810 = vrot.slane %v802, %v809
    %v812 = vunpack.c.l.s4 1983009808
    %v813 = vunpack.c.0.s8 %v812
    %v814 = vlaneseq
    %v815 = vshrl.u32 %v814, 7
    %v816 = vsub.s32 %v813, %v815
    %v817 = vrot.slane %v803, %v816
    %v818 = vcombine.low %v762, %v778
    %v819 = vcombine.high %v762, %v778
    %v821 = vunpack.c.l.s4 1934713408
    %v822 = vunpack.c.0.s8 %v821
    %v823 = vlaneseq
    %v824 = vshrl.u32 %v823, 7
    %v825 = vsub.s32 %v822, %v824
    %v826 = vrot.slane %v818, %v825
    %v828 = vunpack.c.l.s4 1934713408
    %v829 = vunpack.c.0.s8 %v828
    %v830 = vlaneseq
    %v831 = vshrl.u32 %v830, 7
    %v832 = vsub.s32 %v829, %v831
    %v833 = vrot.slane %v819, %v832
    %v834 = vcombine.low %v769, %v785
    %v835 = vcombine.high %v769, %v785
    %v837 = vunpack.c.l.s4 1934713408
    %v838 = vunpack.c.0.s8 %v837
    %v839 = vlaneseq
    %v840 = vshrl.u32 %v839, 7
    %v841 = vsub.s32 %v838, %v840
    %v842 = vrot.slane %v834, %v841
    %v844 = vunpack.c.l.s4 1934713408
    %v845 = vunpack.c.0.s8 %v844
    %v846 = vlaneseq
    %v847 = vshrl.u32 %v846, 7
    %v848 = vsub.s32 %v845, %v847
    %v849 = vrot.slane %v835, %v848
    %v850 = vcombine.low %v794, %v810
    %v851 = vcombine.high %v794, %v810
    %v853 = vunpack.c.l.s4 1934713408
    %v854 = vunpack.c.0.s8 %v853
    %v855 = vlaneseq
    %v856 = vshrl.u32 %v855, 7
    %v857 = vsub.s32 %v854, %v856
    %v858 = vrot.slane %v850, %v857
    %v860 = vunpack.c.l.s4 1934713408
    %v861 = vunpack.c.0.s8 %v860
    %v862 = vlaneseq
    %v863 = vshrl.u32 %v862, 7
    %v864 = vsub.s32 %v861, %v863
    %v865 = vrot.slane %v851, %v864
    %v866 = vcombine.low %v801, %v817
    %v867 = vcombine.high %v801, %v817
    %v869 = vunpack.c.l.s4 1934713408
    %v870 = vunpack.c.0.s8 %v869
    %v871 = vlaneseq
    %v872 = vshrl.u32 %v871, 7
    %v873 = vsub.s32 %v870, %v872
    %v874 = vrot.slane %v866, %v873
    %v876 = vunpack.c.l.s4 1934713408
    %v877 = vunpack.c.0.s8 %v876
    %v878 = vlaneseq
    %v879 = vshrl.u32 %v878, 7
    %v880 = vsub.s32 %v877, %v879
    %v881 = vrot.slane %v867, %v880
    %v882 = vcombine.low %v826, %v858
    %v883 = vcombine.high %v826, %v858
    %v884 = vcombine.low %v833, %v865
    %v885 = vcombine.high %v833, %v865
    %v886 = vcombine.low %v842, %v874
    %v887 = vcombine.high %v842, %v874
    %v888 = vcombine.low %v849, %v881
    %v889 = vcombine.high %v849, %v881
    %v890 = vcombine.high %v686, 0.0
    %v892 = vunpack.c.l.s4 1983009808
    %v893 = vunpack.c.0.s8 %v892
    %v894 = vlaneseq
    %v895 = vshrl.u32 %v894, 7
    %v896 = vsub.s32 %v893, %v895
    %v897 = vrot.slane %v686, %v896
    %v899 = vunpack.c.l.s4 1983009808
    %v900 = vunpack.c.0.s8 %v899
    %v901 = vlaneseq
    %v902 = vshrl.u32 %v901, 7
    %v903 = vsub.s32 %v900, %v902
    %v904 = vrot.slane %v890, %v903
    %v905 = vcombine.high %v687, 0.0
    %v907 = vunpack.c.l.s4 1983009808
    %v908 = vunpack.c.0.s8 %v907
    %v909 = vlaneseq
    %v910 = vshrl.u32 %v909, 7
    %v911 = vsub.s32 %v908, %v910
    %v912 = vrot.slane %v687, %v911
    %v914 = vunpack.c.l.s4 1983009808
    %v915 = vunpack.c.0.s8 %v914
    %v916 = vlaneseq
    %v917 = vshrl.u32 %v916, 7
    %v918 = vsub.s32 %v915, %v917
    %v919 = vrot.slane %v905, %v918
    %v920 = vcombine.low %v897, %v912
    %v921 = vcombine.high %v897, %v912
    %v923 = vunpack.c.l.s4 1934713408
    %v924 = vunpack.c.0.s8 %v923
    %v925 = vlaneseq
    %v926 = vshrl.u32 %v925, 7
    %v927 = vsub.s32 %v924, %v926
    %v928 = vrot.slane %v920, %v927
    %v930 = vunpack.c.l.s4 1934713408
    %v931 = vunpack.c.0.s8 %v930
    %v932 = vlaneseq
    %v933 = vshrl.u32 %v932, 7
    %v934 = vsub.s32 %v931, %v933
    %v935 = vrot.slane %v921, %v934
    %v936 = vcombine.low %v904, %v919
    %v937 = vcombine.high %v904, %v919
    %v939 = vunpack.c.l.s4 1934713408
    %v940 = vunpack.c.0.s8 %v939
    %v941 = vlaneseq
    %v942 = vshrl.u32 %v941, 7
    %v943 = vsub.s32 %v940, %v942
    %v944 = vrot.slane %v936, %v943
    %v946 = vunpack.c.l.s4 1934713408
    %v947 = vunpack.c.0.s8 %v946
    %v948 = vlaneseq
    %v949 = vshrl.u32 %v948, 7
    %v950 = vsub.s32 %v947, %v949
    %v951 = vrot.slane %v937, %v950
    %v952 = vcombine.high %v928, 0.0
    %v953 = vcombine.high %v935, 0.0
    %v954 = vcombine.high %v944, 0.0
    %v955 = vcombine.high %v951, 0.0
    %v964 = vcombine.low %v726, %v750
    %v965 = vcombine.low %v733, %v751
    %v967 = vunpack.c.l.s4 1983009808
    %v968 = vunpack.c.0.s8 %v967
    %v969 = vlaneseq
    %v970 = vshrl.u32 %v969, 7
    %v971 = vsub.s32 %v968, %v970
    %v972 = vrot.slane %v964, %v971
    %v974 = vunpack.c.l.s4 1983009808
    %v975 = vunpack.c.0.s8 %v974
    %v976 = vlaneseq
    %v977 = vshrl.u32 %v976, 7
    %v978 = vsub.s32 %v975, %v977
    %v979 = vrot.slane %v965, %v978
    %v980 = vcombine.low %v972, %v979
    %v981 = vcombine.low %v742, %v752
    %v982 = vcombine.low %v749, %v753
    %v984 = vunpack.c.l.s4 1983009808
    %v985 = vunpack.c.0.s8 %v984
    %v986 = vlaneseq
    %v987 = vshrl.u32 %v986, 7
    %v988 = vsub.s32 %v985, %v987
    %v989 = vrot.slane %v981, %v988
    %v991 = vunpack.c.l.s4 1983009808
    %v992 = vunpack.c.0.s8 %v991
    %v993 = vlaneseq
    %v994 = vshrl.u32 %v993, 7
    %v995 = vsub.s32 %v992, %v994
    %v996 = vrot.slane %v982, %v995
    %v997 = vcombine.low %v989, %v996
    %v1016 = vcombine.low %v882, %v883
    %v1017 = vcombine.high %v882, %v883
    %v1018 = vcombine.low %v884, %v885
    %v1019 = vcombine.high %v884, %v885
    %v1021 = vunpack.c.l.s4 1983009808
    %v1022 = vunpack.c.0.s8 %v1021
    %v1023 = vlaneseq
    %v1024 = vshrl.u32 %v1023, 7
    %v1025 = vsub.s32 %v1022, %v1024
    %v1026 = vrot.slane %v1016, %v1025
    %v1028 = vunpack.c.l.s4 1983009808
    %v1029 = vunpack.c.0.s8 %v1028
    %v1030 = vlaneseq
    %v1031 = vshrl.u32 %v1030, 7
    %v1032 = vsub.s32 %v1029, %v1031
    %v1033 = vrot.slane %v1017, %v1032
    %v1035 = vunpack.c.l.s4 1983009808
    %v1036 = vunpack.c.0.s8 %v1035
    %v1037 = vlaneseq
    %v1038 = vshrl.u32 %v1037, 7
    %v1039 = vsub.s32 %v1036, %v1038
    %v1040 = vrot.slane %v1018, %v1039
    %v1042 = vunpack.c.l.s4 1983009808
    %v1043 = vunpack.c.0.s8 %v1042
    %v1044 = vlaneseq
    %v1045 = vshrl.u32 %v1044, 7
    %v1046 = vsub.s32 %v1043, %v1045
    %v1047 = vrot.slane %v1019, %v1046
    %v1048 = vcombine.low %v1026, %v1040
    %v1049 = vcombine.high %v1026, %v1040
    %v1050 = vcombine.low %v1033, %v1047
    %v1051 = vcombine.high %v1033, %v1047
    %v1052 = vcombine.low %v886, %v887
    %v1053 = vcombine.high %v886, %v887
    %v1054 = vcombine.low %v888, %v889
    %v1055 = vcombine.high %v888, %v889
    %v1057 = vunpack.c.l.s4 1983009808
    %v1058 = vunpack.c.0.s8 %v1057
    %v1059 = vlaneseq
    %v1060 = vshrl.u32 %v1059, 7
    %v1061 = vsub.s32 %v1058, %v1060
    %v1062 = vrot.slane %v1052, %v1061
    %v1064 = vunpack.c.l.s4 1983009808
    %v1065 = vunpack.c.0.s8 %v1064
    %v1066 = vlaneseq
    %v1067 = vshrl.u32 %v1066, 7
    %v1068 = vsub.s32 %v1065, %v1067
    %v1069 = vrot.slane %v1053, %v1068
    %v1071 = vunpack.c.l.s4 1983009808
    %v1072 = vunpack.c.0.s8 %v1071
    %v1073 = vlaneseq
    %v1074 = vshrl.u32 %v1073, 7
    %v1075 = vsub.s32 %v1072, %v1074
    %v1076 = vrot.slane %v1054, %v1075
    %v1078 = vunpack.c.l.s4 1983009808
    %v1079 = vunpack.c.0.s8 %v1078
    %v1080 = vlaneseq
    %v1081 = vshrl.u32 %v1080, 7
    %v1082 = vsub.s32 %v1079, %v1081
    %v1083 = vrot.slane %v1055, %v1082
    %v1084 = vcombine.low %v1062, %v1076
    %v1085 = vcombine.high %v1062, %v1076
    %v1086 = vcombine.low %v1069, %v1083
    %v1087 = vcombine.high %v1069, %v1083
    %v1088 = vcombine.low %v928, %v952
    %v1089 = vcombine.low %v935, %v953
    %v1091 = vunpack.c.l.s4 1983009808
    %v1092 = vunpack.c.0.s8 %v1091
    %v1093 = vlaneseq
    %v1094 = vshrl.u32 %v1093, 7
    %v1095 = vsub.s32 %v1092, %v1094
    %v1096 = vrot.slane %v1088, %v1095
    %v1098 = vunpack.c.l.s4 1983009808
    %v1099 = vunpack.c.0.s8 %v1098
    %v1100 = vlaneseq
    %v1101 = vshrl.u32 %v1100, 7
    %v1102 = vsub.s32 %v1099, %v1101
    %v1103 = vrot.slane %v1089, %v1102
    %v1104 = vcombine.low %v1096, %v1103
    %v1105 = vcombine.low %v944, %v954
    %v1106 = vcombine.low %v951, %v955
    %v1108 = vunpack.c.l.s4 1983009808
    %v1109 = vunpack.c.0.s8 %v1108
    %v1110 = vlaneseq
    %v1111 = vshrl.u32 %v1110, 7
    %v1112 = vsub.s32 %v1109, %v1111
    %v1113 = vrot.slane %v1105, %v1112
    %v1115 = vunpack.c.l.s4 1983009808
    %v1116 = vunpack.c.0.s8 %v1115
    %v1117 = vlaneseq
    %v1118 = vshrl.u32 %v1117, 7
    %v1119 = vsub.s32 %v1116, %v1118
    %v1120 = vrot.slane %v1106, %v1119
    %v1121 = vcombine.low %v1113, %v1120
    %v1132 = vsub.f32 %v980, %v1048
    %v1133 = vsub.f32 %v997, %v1084
    %v1134 = vsub.f32 %v980, %v1049
    %v1135 = vsub.f32 %v997, %v1085
    %v1136 = vsub.f32 %v980, %v1050
    %v1137 = vsub.f32 %v997, %v1086
    %v1138 = vsub.f32 %v980, %v1051
    %v1139 = vsub.f32 %v997, %v1087
    %v1140 = vsub.f32 %v980, %v1104
    %v1141 = vsub.f32 %v997, %v1121
    %v1142 = vmul.f32 %v980, %v1048
    %v1143 = vmul.f32 %v997, %v1084
    %v1144 = vmul.f32 %v980, %v1049
    %v1145 = vmul.f32 %v997, %v1085
    %v1146 = vmul.f32 %v980, %v1050
    %v1147 = vmul.f32 %v997, %v1086
    %v1148 = vmul.f32 %v980, %v1051
    %v1149 = vmul.f32 %v997, %v1087
    %v1150 = vmul.f32 %v980, %v1104
    %v1151 = vmul.f32 %v997, %v1121
    %v1162 = vcombine.low %v1142, %v1144
    %v1163 = vcombine.high %v1142, %v1144
    %v1164 = vcombine.low %v1146, %v1148
    %v1165 = vcombine.high %v1146, %v1148
    %v1167 = vunpack.c.l.s4 1983009808
    %v1168 = vunpack.c.0.s8 %v1167
    %v1169 = vlaneseq
    %v1170 = vshrl.u32 %v1169, 7
    %v1171 = vsub.s32 %v1168, %v1170
    %v1172 = vrot.slane %v1162, %v1171
    %v1174 = vunpack.c.l.s4 1983009808
    %v1175 = vunpack.c.0.s8 %v1174
    %v1176 = vlaneseq
    %v1177 = vshrl.u32 %v1176, 7
    %v1178 = vsub.s32 %v1175, %v1177
    %v1179 = vrot.slane %v1163, %v1178
    %v1181 = vunpack.c.l.s4 1983009808
    %v1182 = vunpack.c.0.s8 %v1181
    %v1183 = vlaneseq
    %v1184 = vshrl.u32 %v1183, 7
    %v1185 = vsub.s32 %v1182, %v1184
    %v1186 = vrot.slane %v1164, %v1185
    %v1188 = vunpack.c.l.s4 1983009808
    %v1189 = vunpack.c.0.s8 %v1188
    %v1190 = vlaneseq
    %v1191 = vshrl.u32 %v1190, 7
    %v1192 = vsub.s32 %v1189, %v1191
    %v1193 = vrot.slane %v1165, %v1192
    %v1194 = vcombine.low %v1172, %v1186
    %v1195 = vcombine.high %v1172, %v1186
    %v1196 = vcombine.low %v1179, %v1193
    %v1197 = vcombine.high %v1179, %v1193
    %v1198 = vcombine.low %v1143, %v1145
    %v1199 = vcombine.high %v1143, %v1145
    %v1200 = vcombine.low %v1147, %v1149
    %v1201 = vcombine.high %v1147, %v1149
    %v1203 = vunpack.c.l.s4 1983009808
    %v1204 = vunpack.c.0.s8 %v1203
    %v1205 = vlaneseq
    %v1206 = vshrl.u32 %v1205, 7
    %v1207 = vsub.s32 %v1204, %v1206
    %v1208 = vrot.slane %v1198, %v1207
    %v1210 = vunpack.c.l.s4 1983009808
    %v1211 = vunpack.c.0.s8 %v1210
    %v1212 = vlaneseq
    %v1213 = vshrl.u32 %v1212, 7
    %v1214 = vsub.s32 %v1211, %v1213
    %v1215 = vrot.slane %v1199, %v1214
    %v1217 = vunpack.c.l.s4 1983009808
    %v1218 = vunpack.c.0.s8 %v1217
    %v1219 = vlaneseq
    %v1220 = vshrl.u32 %v1219, 7
    %v1221 = vsub.s32 %v1218, %v1220
    %v1222 = vrot.slane %v1200, %v1221
    %v1224 = vunpack.c.l.s4 1983009808
    %v1225 = vunpack.c.0.s8 %v1224
    %v1226 = vlaneseq
    %v1227 = vshrl.u32 %v1226, 7
    %v1228 = vsub.s32 %v1225, %v1227
    %v1229 = vrot.slane %v1201, %v1228
    %v1230 = vcombine.low %v1208, %v1222
    %v1231 = vcombine.high %v1208, %v1222
    %v1232 = vcombine.low %v1215, %v1229
    %v1233 = vcombine.high %v1215, %v1229
    %v1234 = vcombine.high %v1150, %v1150
    %v1236 = vunpack.c.l.s4 1983009808
    %v1237 = vunpack.c.0.s8 %v1236
    %v1238 = vlaneseq
    %v1239 = vshrl.u32 %v1238, 7
    %v1240 = vsub.s32 %v1237, %v1239
    %v1241 = vrot.slane %v1150, %v1240
    %v1243 = vunpack.c.l.s4 1983009808
    %v1244 = vunpack.c.0.s8 %v1243
    %v1245 = vlaneseq
    %v1246 = vshrl.u32 %v1245, 7
    %v1247 = vsub.s32 %v1244, %v1246
    %v1248 = vrot.slane %v1234, %v1247
    %v1249 = vcombine.high %v1241, %v1241
    %v1250 = vcombine.high %v1248, %v1248
    %v1251 = vcombine.high %v1151, %v1151
    %v1253 = vunpack.c.l.s4 1983009808
    %v1254 = vunpack.c.0.s8 %v1253
    %v1255 = vlaneseq
    %v1256 = vshrl.u32 %v1255, 7
    %v1257 = vsub.s32 %v1254, %v1256
    %v1258 = vrot.slane %v1151, %v1257
    %v1260 = vunpack.c.l.s4 1983009808
    %v1261 = vunpack.c.0.s8 %v1260
    %v1262 = vlaneseq
    %v1263 = vshrl.u32 %v1262, 7
    %v1264 = vsub.s32 %v1261, %v1263
    %v1265 = vrot.slane %v1251, %v1264
    %v1266 = vcombine.high %v1258, %v1258
    %v1267 = vcombine.high %v1265, %v1265
    %1284 = vmatprep.subr.mxu0 0.0
    %1285 = vmatpush1.msra.mxu0 1.0
    %1286 = vmatprep.subr.mxu0 0.0
    %1287 = vmatpush1.msra.mxu0 1.0
    %1288 = vmatprep.subr.mxu0 0.0
    %1289 = vmatpush1.msra.mxu0 1.0
    %1290 = vmatprep.subr.mxu0 0.0
    %1291 = vmatpush1.msra.mxu0 1.0
    %1292 = vmatprep.subr.mxu0 0.0
    %1293 = vmatpush1.msra.mxu0 1.0
    %1294 = vmatprep.subr.mxu0 0.0
    %1295 = vmatpush1.msra.mxu0 1.0
    %1296 = vmatprep.subr.mxu0 0.0
    %1297 = vmatpush1.msra.mxu0 1.0
    %1298 = vmatprep.subr.mxu0 0.0
    %1299 = vmatpush1.msra.mxu0 1.0
    %1300 = vmatprep.subr.mxu0 0.0
    %1301 = vmatpush1.msra.mxu0 1.0
    %1302 = vmatprep.subr.mxu0 0.0
    %1303 = vmatpush1.msra.mxu0 1.0
    %1304 = vmatprep.subr.mxu0 0.0
    %1305 = vmatpush1.msra.mxu0 1.0
    %1306 = vmatprep.subr.mxu0 0.0
    %1307 = vmatpush1.msra.mxu0 1.0
    %1308 = vmatprep.subr.mxu0 0.0
    %1309 = vmatpush1.msra.mxu0 1.0
    %1310 = vmatprep.subr.mxu0 0.0
    %1311 = vmatpush1.msra.mxu0 1.0
    %1312 = vmatprep.subr.mxu0 0.0
    %1313 = vmatpush1.msra.mxu0 1.0
    %1314 = vmatprep.subr.mxu0 0.0
    %1315 = vmatpush1.msra.mxu0 1.0
    %1316 = vmatprep.subr.mxu0 0.0
    %1317 = vmatpush1.msra.mxu0 1.0
    %1318 = vmatprep.subr.mxu0 0.0
    %1319 = vmatpush1.msra.mxu0 1.0
    %1320 = vmatprep.subr.mxu0 0.0
    %1321 = vmatpush1.msra.mxu0 1.0
    %1322 = vmatprep.subr.mxu0 0.0
    %1323 = vmatpush1.msra.mxu0 1.0
    %1324 = vmatprep.subr.mxu0 0.0
    %1325 = vmatpush1.msra.mxu0 1.0
    %1326 = vmatprep.subr.mxu0 0.0
    %1327 = vmatpush1.msra.mxu0 1.0
    %1328 = vmatprep.subr.mxu0 0.0
    %1329 = vmatpush1.msra.mxu0 1.0
    %1330 = vmatprep.subr.mxu0 0.0
    %1331 = vmatpush1.msra.mxu0 1.0
    %1332 = vmatprep.subr.mxu0 0.0
    %1333 = vmatpush1.msra.mxu0 1.0
    %1334 = vmatprep.subr.mxu0 0.0
    %1335 = vmatpush1.msra.mxu0 1.0
    %1336 = vmatprep.subr.mxu0 0.0
    %1337 = vmatpush1.msra.mxu0 1.0
    %1338 = vmatprep.subr.mxu0 0.0
    %1339 = vmatpush1.msra.mxu0 1.0
    %1340 = vmatprep.subr.mxu0 0.0
    %1341 = vmatpush1.msra.mxu0 1.0
    %1342 = vmatprep.subr.mxu0 0.0
    %1343 = vmatpush1.msra.mxu0 1.0
    %1344 = vmatprep.subr.mxu0 0.0
    %1345 = vmatpush1.msra.mxu0 1.0
    %1346 = vmatprep.subr.mxu0 0.0
    %1347 = vmatpush1.msra.mxu0 1.0
    %1348 = vmatprep.mubr.f32.mxu0 %v1195
    %1349 = vmatmul.mubr.f32.gmra.mrb[0].mxu0 %v1194
    %v1350 = vpop.f32.mrb[0].mxu0
    %v1351 = vadd.f32 0.0, %v1350
    %v1352 = vpop.f32.mrb[0].mxu0
    %1353 = vmatprep.mubr.f32.mxu0 %v1249
    %1354 = vmatmul.mubr.f32.gmra.mrb[0].mxu0 %v1241
    %v1355 = vpop.f32.mrb[0].mxu0
    %v1356 = vadd.f32 0.0, %v1355
    %v1357 = vpop.f32.mrb[0].mxu0
    %1358 = vdwg.mxu0
    %1359 = vmatprep.subr.mxu0 0.0
    %1360 = vmatpush1.msra.mxu0 1.0
    %1361 = vmatprep.subr.mxu0 0.0
    %1362 = vmatpush1.msra.mxu0 1.0
    %1363 = vmatprep.subr.mxu0 0.0
    %1364 = vmatpush1.msra.mxu0 1.0
    %1365 = vmatprep.subr.mxu0 0.0
    %1366 = vmatpush1.msra.mxu0 1.0
    %1367 = vmatprep.subr.mxu0 0.0
    %1368 = vmatpush1.msra.mxu0 1.0
    %1369 = vmatprep.subr.mxu0 0.0
    %1370 = vmatpush1.msra.mxu0 1.0
    %1371 = vmatprep.subr.mxu0 0.0
    %1372 = vmatpush1.msra.mxu0 1.0
    %1373 = vmatprep.subr.mxu0 0.0
    %1374 = vmatpush1.msra.mxu0 1.0
    %1375 = vmatprep.subr.mxu0 0.0
    %1376 = vmatpush1.msra.mxu0 1.0
    %1377 = vmatprep.subr.mxu0 0.0
    %1378 = vmatpush1.msra.mxu0 1.0
    %1379 = vmatprep.subr.mxu0 0.0
    %1380 = vmatpush1.msra.mxu0 1.0
    %1381 = vmatprep.subr.mxu0 0.0
    %1382 = vmatpush1.msra.mxu0 1.0
    %1383 = vmatprep.subr.mxu0 0.0
    %1384 = vmatpush1.msra.mxu0 1.0
    %1385 = vmatprep.subr.mxu0 0.0
    %1386 = vmatpush1.msra.mxu0 1.0
    %1387 = vmatprep.subr.mxu0 0.0
    %1388 = vmatpush1.msra.mxu0 1.0
    %1389 = vmatprep.subr.mxu0 0.0
    %1390 = vmatpush1.msra.mxu0 1.0
    %1391 = vmatprep.subr.mxu0 0.0
    %1392 = vmatpush1.msra.mxu0 1.0
    %1393 = vmatprep.subr.mxu0 0.0
    %1394 = vmatpush1.msra.mxu0 1.0
    %1395 = vmatprep.subr.mxu0 0.0
    %1396 = vmatpush1.msra.mxu0 1.0
    %1397 = vmatprep.subr.mxu0 0.0
    %1398 = vmatpush1.msra.mxu0 1.0
    %1399 = vmatprep.subr.mxu0 0.0
    %1400 = vmatpush1.msra.mxu0 1.0
    %1401 = vmatprep.subr.mxu0 0.0
    %1402 = vmatpush1.msra.mxu0 1.0
    %1403 = vmatprep.subr.mxu0 0.0
    %1404 = vmatpush1.msra.mxu0 1.0
    %1405 = vmatprep.subr.mxu0 0.0
    %1406 = vmatpush1.msra.mxu0 1.0
    %1407 = vmatprep.subr.mxu0 0.0
    %1408 = vmatpush1.msra.mxu0 1.0
    %1409 = vmatprep.subr.mxu0 0.0
    %1410 = vmatpush1.msra.mxu0 1.0
    %1411 = vmatprep.subr.mxu0 0.0
    %1412 = vmatpush1.msra.mxu0 1.0
    %1413 = vmatprep.subr.mxu0 0.0
    %1414 = vmatpush1.msra.mxu0 1.0
    %1415 = vmatprep.subr.mxu0 0.0
    %1416 = vmatpush1.msra.mxu0 1.0
    %1417 = vmatprep.subr.mxu0 0.0
    %1418 = vmatpush1.msra.mxu0 1.0
    %1419 = vmatprep.subr.mxu0 0.0
    %1420 = vmatpush1.msra.mxu0 1.0
    %1421 = vmatprep.subr.mxu0 0.0
    %1422 = vmatpush1.msra.mxu0 1.0
    %1423 = vmatprep.mubr.f32.mxu0 %v1197
    %1424 = vmatmul.mubr.f32.gmra.mrb[0].mxu0 %v1196
    %v1425 = vpop.f32.mrb[0].mxu0
    %v1426 = vadd.f32 %v1351, %v1425
    %v1427 = vpop.f32.mrb[0].mxu0
    %1428 = vmatprep.mubr.f32.mxu0 %v1250
    %1429 = vmatmul.mubr.f32.gmra.mrb[0].mxu0 %v1248
    %v1430 = vpop.f32.mrb[0].mxu0
    %v1431 = vadd.f32 %v1356, %v1430
    %v1432 = vpop.f32.mrb[0].mxu0
    %1433 = vdwg.mxu0
    %1434 = vmatprep.subr.mxu0 0.0
    %1435 = vmatpush1.msra.mxu0 1.0
    %1436 = vmatprep.subr.mxu0 0.0
    %1437 = vmatpush1.msra.mxu0 1.0
    %1438 = vmatprep.subr.mxu0 0.0
    %1439 = vmatpush1.msra.mxu0 1.0
    %1440 = vmatprep.subr.mxu0 0.0
    %1441 = vmatpush1.msra.mxu0 1.0
    %1442 = vmatprep.subr.mxu0 0.0
    %1443 = vmatpush1.msra.mxu0 1.0
    %1444 = vmatprep.subr.mxu0 0.0
    %1445 = vmatpush1.msra.mxu0 1.0
    %1446 = vmatprep.subr.mxu0 0.0
    %1447 = vmatpush1.msra.mxu0 1.0
    %1448 = vmatprep.subr.mxu0 0.0
    %1449 = vmatpush1.msra.mxu0 1.0
    %1450 = vmatprep.subr.mxu0 0.0
    %1451 = vmatpush1.msra.mxu0 1.0
    %1452 = vmatprep.subr.mxu0 0.0
    %1453 = vmatpush1.msra.mxu0 1.0
    %1454 = vmatprep.subr.mxu0 0.0
    %1455 = vmatpush1.msra.mxu0 1.0
    %1456 = vmatprep.subr.mxu0 0.0
    %1457 = vmatpush1.msra.mxu0 1.0
    %1458 = vmatprep.subr.mxu0 0.0
    %1459 = vmatpush1.msra.mxu0 1.0
    %1460 = vmatprep.subr.mxu0 0.0
    %1461 = vmatpush1.msra.mxu0 1.0
    %1462 = vmatprep.subr.mxu0 0.0
    %1463 = vmatpush1.msra.mxu0 1.0
    %1464 = vmatprep.subr.mxu0 0.0
    %1465 = vmatpush1.msra.mxu0 1.0
    %1466 = vmatprep.subr.mxu0 0.0
    %1467 = vmatpush1.msra.mxu0 1.0
    %1468 = vmatprep.subr.mxu0 0.0
    %1469 = vmatpush1.msra.mxu0 1.0
    %1470 = vmatprep.subr.mxu0 0.0
    %1471 = vmatpush1.msra.mxu0 1.0
    %1472 = vmatprep.subr.mxu0 0.0
    %1473 = vmatpush1.msra.mxu0 1.0
    %1474 = vmatprep.subr.mxu0 0.0
    %1475 = vmatpush1.msra.mxu0 1.0
    %1476 = vmatprep.subr.mxu0 0.0
    %1477 = vmatpush1.msra.mxu0 1.0
    %1478 = vmatprep.subr.mxu0 0.0
    %1479 = vmatpush1.msra.mxu0 1.0
    %1480 = vmatprep.subr.mxu0 0.0
    %1481 = vmatpush1.msra.mxu0 1.0
    %1482 = vmatprep.subr.mxu0 0.0
    %1483 = vmatpush1.msra.mxu0 1.0
    %1484 = vmatprep.subr.mxu0 0.0
    %1485 = vmatpush1.msra.mxu0 1.0
    %1486 = vmatprep.subr.mxu0 0.0
    %1487 = vmatpush1.msra.mxu0 1.0
    %1488 = vmatprep.subr.mxu0 0.0
    %1489 = vmatpush1.msra.mxu0 1.0
    %1490 = vmatprep.subr.mxu0 0.0
    %1491 = vmatpush1.msra.mxu0 1.0
    %1492 = vmatprep.subr.mxu0 0.0
    %1493 = vmatpush1.msra.mxu0 1.0
    %1494 = vmatprep.subr.mxu0 0.0
    %1495 = vmatpush1.msra.mxu0 1.0
    %1496 = vmatprep.subr.mxu0 0.0
    %1497 = vmatpush1.msra.mxu0 1.0
    %1498 = vmatprep.mubr.f32.mxu0 %v1231
    %1499 = vmatmul.mubr.f32.gmra.mrb[0].mxu0 %v1230
    %v1500 = vpop.f32.mrb[0].mxu0
    %v1501 = vadd.f32 %v1426, %v1500
    %v1502 = vpop.f32.mrb[0].mxu0
    %1503 = vmatprep.mubr.f32.mxu0 %v1266
    %1504 = vmatmul.mubr.f32.gmra.mrb[0].mxu0 %v1258
    %v1505 = vpop.f32.mrb[0].mxu0
    %v1506 = vadd.f32 %v1431, %v1505
    %v1507 = vpop.f32.mrb[0].mxu0
    %1508 = vdwg.mxu0
    %1509 = vmatprep.subr.mxu0 0.0
    %1510 = vmatpush1.msra.mxu0 1.0
    %1511 = vmatprep.subr.mxu0 0.0
    %1512 = vmatpush1.msra.mxu0 1.0
    %1513 = vmatprep.subr.mxu0 0.0
    %1514 = vmatpush1.msra.mxu0 1.0
    %1515 = vmatprep.subr.mxu0 0.0
    %1516 = vmatpush1.msra.mxu0 1.0
    %1517 = vmatprep.subr.mxu0 0.0
    %1518 = vmatpush1.msra.mxu0 1.0
    %1519 = vmatprep.subr.mxu0 0.0
    %1520 = vmatpush1.msra.mxu0 1.0
    %1521 = vmatprep.subr.mxu0 0.0
    %1522 = vmatpush1.msra.mxu0 1.0
    %1523 = vmatprep.subr.mxu0 0.0
    %1524 = vmatpush1.msra.mxu0 1.0
    %1525 = vmatprep.subr.mxu0 0.0
    %1526 = vmatpush1.msra.mxu0 1.0
    %1527 = vmatprep.subr.mxu0 0.0
    %1528 = vmatpush1.msra.mxu0 1.0
    %1529 = vmatprep.subr.mxu0 0.0
    %1530 = vmatpush1.msra.mxu0 1.0
    %1531 = vmatprep.subr.mxu0 0.0
    %1532 = vmatpush1.msra.mxu0 1.0
    %1533 = vmatprep.subr.mxu0 0.0
    %1534 = vmatpush1.msra.mxu0 1.0
    %1535 = vmatprep.subr.mxu0 0.0
    %1536 = vmatpush1.msra.mxu0 1.0
    %1537 = vmatprep.subr.mxu0 0.0
    %1538 = vmatpush1.msra.mxu0 1.0
    %1539 = vmatprep.subr.mxu0 0.0
    %1540 = vmatpush1.msra.mxu0 1.0
    %1541 = vmatprep.subr.mxu0 0.0
    %1542 = vmatpush1.msra.mxu0 1.0
    %1543 = vmatprep.subr.mxu0 0.0
    %1544 = vmatpush1.msra.mxu0 1.0
    %1545 = vmatprep.subr.mxu0 0.0
    %1546 = vmatpush1.msra.mxu0 1.0
    %1547 = vmatprep.subr.mxu0 0.0
    %1548 = vmatpush1.msra.mxu0 1.0
    %1549 = vmatprep.subr.mxu0 0.0
    %1550 = vmatpush1.msra.mxu0 1.0
    %1551 = vmatprep.subr.mxu0 0.0
    %1552 = vmatpush1.msra.mxu0 1.0
    %1553 = vmatprep.subr.mxu0 0.0
    %1554 = vmatpush1.msra.mxu0 1.0
    %1555 = vmatprep.subr.mxu0 0.0
    %1556 = vmatpush1.msra.mxu0 1.0
    %1557 = vmatprep.subr.mxu0 0.0
    %1558 = vmatpush1.msra.mxu0 1.0
    %1559 = vmatprep.subr.mxu0 0.0
    %1560 = vmatpush1.msra.mxu0 1.0
    %1561 = vmatprep.subr.mxu0 0.0
    %1562 = vmatpush1.msra.mxu0 1.0
    %1563 = vmatprep.subr.mxu0 0.0
    %1564 = vmatpush1.msra.mxu0 1.0
    %1565 = vmatprep.subr.mxu0 0.0
    %1566 = vmatpush1.msra.mxu0 1.0
    %1567 = vmatprep.subr.mxu0 0.0
    %1568 = vmatpush1.msra.mxu0 1.0
    %1569 = vmatprep.subr.mxu0 0.0
    %1570 = vmatpush1.msra.mxu0 1.0
    %1571 = vmatprep.subr.mxu0 0.0
    %1572 = vmatpush1.msra.mxu0 1.0
    %1573 = vmatprep.mubr.f32.mxu0 %v1233
    %1574 = vmatmul.mubr.f32.gmra.mrb[0].mxu0 %v1232
    %v1575 = vpop.f32.mrb[0].mxu0
    %v1576 = vadd.f32 %v1501, %v1575
    %v1577 = vpop.f32.mrb[0].mxu0
    %1578 = vmatprep.mubr.f32.mxu0 %v1267
    %1579 = vmatmul.mubr.f32.gmra.mrb[0].mxu0 %v1265
    %v1580 = vpop.f32.mrb[0].mxu0
    %v1581 = vadd.f32 %v1506, %v1580
    %v1582 = vpop.f32.mrb[0].mxu0
    %1583 = vdwg.mxu0
    %v1584 = vand.u32 2147483647, %v1132
    %v1585 = vand.u32 2147483647, %v1133
    %v1586 = vand.u32 2147483647, %v1134
    %v1587 = vand.u32 2147483647, %v1135
    %v1588 = vand.u32 2147483647, %v1136
    %v1589 = vand.u32 2147483647, %v1137
    %v1590 = vand.u32 2147483647, %v1138
    %v1591 = vand.u32 2147483647, %v1139
    %v1592 = vand.u32 2147483647, %v1140
    %v1593 = vand.u32 2147483647, %v1141
    %v1604 = vcombine.low %v1584, %v1586
    %v1605 = vcombine.high %v1584, %v1586
    %v1606 = vcombine.low %v1588, %v1590
    %v1607 = vcombine.high %v1588, %v1590
    %v1609 = vunpack.c.l.s4 1983009808
    %v1610 = vunpack.c.0.s8 %v1609
    %v1611 = vlaneseq
    %v1612 = vshrl.u32 %v1611, 7
    %v1613 = vsub.s32 %v1610, %v1612
    %v1614 = vrot.slane %v1604, %v1613
    %v1616 = vunpack.c.l.s4 1983009808
    %v1617 = vunpack.c.0.s8 %v1616
    %v1618 = vlaneseq
    %v1619 = vshrl.u32 %v1618, 7
    %v1620 = vsub.s32 %v1617, %v1619
    %v1621 = vrot.slane %v1605, %v1620
    %v1623 = vunpack.c.l.s4 1983009808
    %v1624 = vunpack.c.0.s8 %v1623
    %v1625 = vlaneseq
    %v1626 = vshrl.u32 %v1625, 7
    %v1627 = vsub.s32 %v1624, %v1626
    %v1628 = vrot.slane %v1606, %v1627
    %v1630 = vunpack.c.l.s4 1983009808
    %v1631 = vunpack.c.0.s8 %v1630
    %v1632 = vlaneseq
    %v1633 = vshrl.u32 %v1632, 7
    %v1634 = vsub.s32 %v1631, %v1633
    %v1635 = vrot.slane %v1607, %v1634
    %v1636 = vcombine.low %v1614, %v1628
    %v1637 = vcombine.high %v1614, %v1628
    %v1638 = vcombine.low %v1621, %v1635
    %v1639 = vcombine.high %v1621, %v1635
    %v1640 = vcombine.low %v1585, %v1587
    %v1641 = vcombine.high %v1585, %v1587
    %v1642 = vcombine.low %v1589, %v1591
    %v1643 = vcombine.high %v1589, %v1591
    %v1645 = vunpack.c.l.s4 1983009808
    %v1646 = vunpack.c.0.s8 %v1645
    %v1647 = vlaneseq
    %v1648 = vshrl.u32 %v1647, 7
    %v1649 = vsub.s32 %v1646, %v1648
    %v1650 = vrot.slane %v1640, %v1649
    %v1652 = vunpack.c.l.s4 1983009808
    %v1653 = vunpack.c.0.s8 %v1652
    %v1654 = vlaneseq
    %v1655 = vshrl.u32 %v1654, 7
    %v1656 = vsub.s32 %v1653, %v1655
    %v1657 = vrot.slane %v1641, %v1656
    %v1659 = vunpack.c.l.s4 1983009808
    %v1660 = vunpack.c.0.s8 %v1659
    %v1661 = vlaneseq
    %v1662 = vshrl.u32 %v1661, 7
    %v1663 = vsub.s32 %v1660, %v1662
    %v1664 = vrot.slane %v1642, %v1663
    %v1666 = vunpack.c.l.s4 1983009808
    %v1667 = vunpack.c.0.s8 %v1666
    %v1668 = vlaneseq
    %v1669 = vshrl.u32 %v1668, 7
    %v1670 = vsub.s32 %v1667, %v1669
    %v1671 = vrot.slane %v1643, %v1670
    %v1672 = vcombine.low %v1650, %v1664
    %v1673 = vcombine.high %v1650, %v1664
    %v1674 = vcombine.low %v1657, %v1671
    %v1675 = vcombine.high %v1657, %v1671
    %v1676 = vcombine.high %v1592, %v1592
    %v1678 = vunpack.c.l.s4 1983009808
    %v1679 = vunpack.c.0.s8 %v1678
    %v1680 = vlaneseq
    %v1681 = vshrl.u32 %v1680, 7
    %v1682 = vsub.s32 %v1679, %v1681
    %v1683 = vrot.slane %v1592, %v1682
    %v1685 = vunpack.c.l.s4 1983009808
    %v1686 = vunpack.c.0.s8 %v1685
    %v1687 = vlaneseq
    %v1688 = vshrl.u32 %v1687, 7
    %v1689 = vsub.s32 %v1686, %v1688
    %v1690 = vrot.slane %v1676, %v1689
    %v1691 = vcombine.high %v1683, %v1683
    %v1692 = vcombine.high %v1690, %v1690
    %v1693 = vcombine.high %v1593, %v1593
    %v1695 = vunpack.c.l.s4 1983009808
    %v1696 = vunpack.c.0.s8 %v1695
    %v1697 = vlaneseq
    %v1698 = vshrl.u32 %v1697, 7
    %v1699 = vsub.s32 %v1696, %v1698
    %v1700 = vrot.slane %v1593, %v1699
    %v1702 = vunpack.c.l.s4 1983009808
    %v1703 = vunpack.c.0.s8 %v1702
    %v1704 = vlaneseq
    %v1705 = vshrl.u32 %v1704, 7
    %v1706 = vsub.s32 %v1703, %v1705
    %v1707 = vrot.slane %v1693, %v1706
    %v1708 = vcombine.high %v1700, %v1700
    %v1709 = vcombine.high %v1707, %v1707
    %1726 = vmatprep.subr.mxu0 0.0
    %1727 = vmatpush1.msra.mxu0 1.0
    %1728 = vmatprep.subr.mxu0 0.0
    %1729 = vmatpush1.msra.mxu0 1.0
    %1730 = vmatprep.subr.mxu0 0.0
    %1731 = vmatpush1.msra.mxu0 1.0
    %1732 = vmatprep.subr.mxu0 0.0
    %1733 = vmatpush1.msra.mxu0 1.0
    %1734 = vmatprep.subr.mxu0 0.0
    %1735 = vmatpush1.msra.mxu0 1.0
    %1736 = vmatprep.subr.mxu0 0.0
    %1737 = vmatpush1.msra.mxu0 1.0
    %1738 = vmatprep.subr.mxu0 0.0
    %1739 = vmatpush1.msra.mxu0 1.0
    %1740 = vmatprep.subr.mxu0 0.0
    %1741 = vmatpush1.msra.mxu0 1.0
    %1742 = vmatprep.subr.mxu0 0.0
    %1743 = vmatpush1.msra.mxu0 1.0
    %1744 = vmatprep.subr.mxu0 0.0
    %1745 = vmatpush1.msra.mxu0 1.0
    %1746 = vmatprep.subr.mxu0 0.0
    %1747 = vmatpush1.msra.mxu0 1.0
    %1748 = vmatprep.subr.mxu0 0.0
    %1749 = vmatpush1.msra.mxu0 1.0
    %1750 = vmatprep.subr.mxu0 0.0
    %1751 = vmatpush1.msra.mxu0 1.0
    %1752 = vmatprep.subr.mxu0 0.0
    %1753 = vmatpush1.msra.mxu0 1.0
    %1754 = vmatprep.subr.mxu0 0.0
    %1755 = vmatpush1.msra.mxu0 1.0
    %1756 = vmatprep.subr.mxu0 0.0
    %1757 = vmatpush1.msra.mxu0 1.0
    %1758 = vmatprep.subr.mxu0 0.0
    %1759 = vmatpush1.msra.mxu0 1.0
    %1760 = vmatprep.subr.mxu0 0.0
    %1761 = vmatpush1.msra.mxu0 1.0
    %1762 = vmatprep.subr.mxu0 0.0
    %1763 = vmatpush1.msra.mxu0 1.0
    %1764 = vmatprep.subr.mxu0 0.0
    %1765 = vmatpush1.msra.mxu0 1.0
    %1766 = vmatprep.subr.mxu0 0.0
    %1767 = vmatpush1.msra.mxu0 1.0
    %1768 = vmatprep.subr.mxu0 0.0
    %1769 = vmatpush1.msra.mxu0 1.0
    %1770 = vmatprep.subr.mxu0 0.0
    %1771 = vmatpush1.msra.mxu0 1.0
    %1772 = vmatprep.subr.mxu0 0.0
    %1773 = vmatpush1.msra.mxu0 1.0
    %1774 = vmatprep.subr.mxu0 0.0
    %1775 = vmatpush1.msra.mxu0 1.0
    %1776 = vmatprep.subr.mxu0 0.0
    %1777 = vmatpush1.msra.mxu0 1.0
    %1778 = vmatprep.subr.mxu0 0.0
    %1779 = vmatpush1.msra.mxu0 1.0
    %1780 = vmatprep.subr.mxu0 0.0
    %1781 = vmatpush1.msra.mxu0 1.0
    %1782 = vmatprep.subr.mxu0 0.0
    %1783 = vmatpush1.msra.mxu0 1.0
    %1784 = vmatprep.subr.mxu0 0.0
    %1785 = vmatpush1.msra.mxu0 1.0
    %1786 = vmatprep.subr.mxu0 0.0
    %1787 = vmatpush1.msra.mxu0 1.0
    %1788 = vmatprep.subr.mxu0 0.0
    %1789 = vmatpush1.msra.mxu0 1.0
    %1790 = vmatprep.mubr.f32.mxu0 %v1637
    %1791 = vmatmul.mubr.f32.gmra.mrb[0].mxu0 %v1636
    %v1792 = vpop.f32.mrb[0].mxu0
    %v1793 = vadd.f32 0.0, %v1792
    %v1794 = vpop.f32.mrb[0].mxu0
    %1795 = vmatprep.mubr.f32.mxu0 %v1691
    %1796 = vmatmul.mubr.f32.gmra.mrb[0].mxu0 %v1683
    %v1797 = vpop.f32.mrb[0].mxu0
    %v1798 = vadd.f32 0.0, %v1797
    %v1799 = vpop.f32.mrb[0].mxu0
    %1800 = vdwg.mxu0
    %1801 = vmatprep.subr.mxu0 0.0
    %1802 = vmatpush1.msra.mxu0 1.0
    %1803 = vmatprep.subr.mxu0 0.0
    %1804 = vmatpush1.msra.mxu0 1.0
    %1805 = vmatprep.subr.mxu0 0.0
    %1806 = vmatpush1.msra.mxu0 1.0
    %1807 = vmatprep.subr.mxu0 0.0
    %1808 = vmatpush1.msra.mxu0 1.0
    %1809 = vmatprep.subr.mxu0 0.0
    %1810 = vmatpush1.msra.mxu0 1.0
    %1811 = vmatprep.subr.mxu0 0.0
    %1812 = vmatpush1.msra.mxu0 1.0
    %1813 = vmatprep.subr.mxu0 0.0
    %1814 = vmatpush1.msra.mxu0 1.0
    %1815 = vmatprep.subr.mxu0 0.0
    %1816 = vmatpush1.msra.mxu0 1.0
    %1817 = vmatprep.subr.mxu0 0.0
    %1818 = vmatpush1.msra.mxu0 1.0
    %1819 = vmatprep.subr.mxu0 0.0
    %1820 = vmatpush1.msra.mxu0 1.0
    %1821 = vmatprep.subr.mxu0 0.0
    %1822 = vmatpush1.msra.mxu0 1.0
    %1823 = vmatprep.subr.mxu0 0.0
    %1824 = vmatpush1.msra.mxu0 1.0
    %1825 = vmatprep.subr.mxu0 0.0
    %1826 = vmatpush1.msra.mxu0 1.0
    %1827 = vmatprep.subr.mxu0 0.0
    %1828 = vmatpush1.msra.mxu0 1.0
    %1829 = vmatprep.subr.mxu0 0.0
    %1830 = vmatpush1.msra.mxu0 1.0
    %1831 = vmatprep.subr.mxu0 0.0
    %1832 = vmatpush1.msra.mxu0 1.0
    %1833 = vmatprep.subr.mxu0 0.0
    %1834 = vmatpush1.msra.mxu0 1.0
    %1835 = vmatprep.subr.mxu0 0.0
    %1836 = vmatpush1.msra.mxu0 1.0
    %1837 = vmatprep.subr.mxu0 0.0
    %1838 = vmatpush1.msra.mxu0 1.0
    %1839 = vmatprep.subr.mxu0 0.0
    %1840 = vmatpush1.msra.mxu0 1.0
    %1841 = vmatprep.subr.mxu0 0.0
    %1842 = vmatpush1.msra.mxu0 1.0
    %1843 = vmatprep.subr.mxu0 0.0
    %1844 = vmatpush1.msra.mxu0 1.0
    %1845 = vmatprep.subr.mxu0 0.0
    %1846 = vmatpush1.msra.mxu0 1.0
    %1847 = vmatprep.subr.mxu0 0.0
    %1848 = vmatpush1.msra.mxu0 1.0
    %1849 = vmatprep.subr.mxu0 0.0
    %1850 = vmatpush1.msra.mxu0 1.0
    %1851 = vmatprep.subr.mxu0 0.0
    %1852 = vmatpush1.msra.mxu0 1.0
    %1853 = vmatprep.subr.mxu0 0.0
    %1854 = vmatpush1.msra.mxu0 1.0
    %1855 = vmatprep.subr.mxu0 0.0
    %1856 = vmatpush1.msra.mxu0 1.0
    %1857 = vmatprep.subr.mxu0 0.0
    %1858 = vmatpush1.msra.mxu0 1.0
    %1859 = vmatprep.subr.mxu0 0.0
    %1860 = vmatpush1.msra.mxu0 1.0
    %1861 = vmatprep.subr.mxu0 0.0
    %1862 = vmatpush1.msra.mxu0 1.0
    %1863 = vmatprep.subr.mxu0 0.0
    %1864 = vmatpush1.msra.mxu0 1.0
    %1865 = vmatprep.mubr.f32.mxu0 %v1639
    %1866 = vmatmul.mubr.f32.gmra.mrb[0].mxu0 %v1638
    %v1867 = vpop.f32.mrb[0].mxu0
    %v1868 = vadd.f32 %v1793, %v1867
    %v1869 = vpop.f32.mrb[0].mxu0
    %1870 = vmatprep.mubr.f32.mxu0 %v1692
    %1871 = vmatmul.mubr.f32.gmra.mrb[0].mxu0 %v1690
    %v1872 = vpop.f32.mrb[0].mxu0
    %v1873 = vadd.f32 %v1798, %v1872
    %v1874 = vpop.f32.mrb[0].mxu0
    %1875 = vdwg.mxu0
    %1876 = vmatprep.subr.mxu0 0.0
    %1877 = vmatpush1.msra.mxu0 1.0
    %1878 = vmatprep.subr.mxu0 0.0
    %1879 = vmatpush1.msra.mxu0 1.0
    %1880 = vmatprep.subr.mxu0 0.0
    %1881 = vmatpush1.msra.mxu0 1.0
    %1882 = vmatprep.subr.mxu0 0.0
    %1883 = vmatpush1.msra.mxu0 1.0
    %1884 = vmatprep.subr.mxu0 0.0
    %1885 = vmatpush1.msra.mxu0 1.0
    %1886 = vmatprep.subr.mxu0 0.0
    %1887 = vmatpush1.msra.mxu0 1.0
    %1888 = vmatprep.subr.mxu0 0.0
    %1889 = vmatpush1.msra.mxu0 1.0
    %1890 = vmatprep.subr.mxu0 0.0
    %1891 = vmatpush1.msra.mxu0 1.0
    %1892 = vmatprep.subr.mxu0 0.0
    %1893 = vmatpush1.msra.mxu0 1.0
    %1894 = vmatprep.subr.mxu0 0.0
    %1895 = vmatpush1.msra.mxu0 1.0
    %1896 = vmatprep.subr.mxu0 0.0
    %1897 = vmatpush1.msra.mxu0 1.0
    %1898 = vmatprep.subr.mxu0 0.0
    %1899 = vmatpush1.msra.mxu0 1.0
    %1900 = vmatprep.subr.mxu0 0.0
    %1901 = vmatpush1.msra.mxu0 1.0
    %1902 = vmatprep.subr.mxu0 0.0
    %1903 = vmatpush1.msra.mxu0 1.0
    %1904 = vmatprep.subr.mxu0 0.0
    %1905 = vmatpush1.msra.mxu0 1.0
    %1906 = vmatprep.subr.mxu0 0.0
    %1907 = vmatpush1.msra.mxu0 1.0
    %1908 = vmatprep.subr.mxu0 0.0
    %1909 = vmatpush1.msra.mxu0 1.0
    %1910 = vmatprep.subr.mxu0 0.0
    %1911 = vmatpush1.msra.mxu0 1.0
    %1912 = vmatprep.subr.mxu0 0.0
    %1913 = vmatpush1.msra.mxu0 1.0
    %1914 = vmatprep.subr.mxu0 0.0
    %1915 = vmatpush1.msra.mxu0 1.0
    %1916 = vmatprep.subr.mxu0 0.0
    %1917 = vmatpush1.msra.mxu0 1.0
    %1918 = vmatprep.subr.mxu0 0.0
    %1919 = vmatpush1.msra.mxu0 1.0
    %1920 = vmatprep.subr.mxu0 0.0
    %1921 = vmatpush1.msra.mxu0 1.0
    %1922 = vmatprep.subr.mxu0 0.0
    %1923 = vmatpush1.msra.mxu0 1.0
    %1924 = vmatprep.subr.mxu0 0.0
    %1925 = vmatpush1.msra.mxu0 1.0
    %1926 = vmatprep.subr.mxu0 0.0
    %1927 = vmatpush1.msra.mxu0 1.0
    %1928 = vmatprep.subr.mxu0 0.0
    %1929 = vmatpush1.msra.mxu0 1.0
    %1930 = vmatprep.subr.mxu0 0.0
    %1931 = vmatpush1.msra.mxu0 1.0
    %1932 = vmatprep.subr.mxu0 0.0
    %1933 = vmatpush1.msra.mxu0 1.0
    %1934 = vmatprep.subr.mxu0 0.0
    %1935 = vmatpush1.msra.mxu0 1.0
    %1936 = vmatprep.subr.mxu0 0.0
    %1937 = vmatpush1.msra.mxu0 1.0
    %1938 = vmatprep.subr.mxu0 0.0
    %1939 = vmatpush1.msra.mxu0 1.0
    %1940 = vmatprep.mubr.f32.mxu0 %v1673
    %1941 = vmatmul.mubr.f32.gmra.mrb[0].mxu0 %v1672
    %v1942 = vpop.f32.mrb[0].mxu0
    %v1943 = vadd.f32 %v1868, %v1942
    %v1944 = vpop.f32.mrb[0].mxu0
    %1945 = vmatprep.mubr.f32.mxu0 %v1708
    %1946 = vmatmul.mubr.f32.gmra.mrb[0].mxu0 %v1700
    %v1947 = vpop.f32.mrb[0].mxu0
    %v1948 = vadd.f32 %v1873, %v1947
    %v1949 = vpop.f32.mrb[0].mxu0
    %1950 = vdwg.mxu0
    %1951 = vmatprep.subr.mxu0 0.0
    %1952 = vmatpush1.msra.mxu0 1.0
    %1953 = vmatprep.subr.mxu0 0.0
    %1954 = vmatpush1.msra.mxu0 1.0
    %1955 = vmatprep.subr.mxu0 0.0
    %1956 = vmatpush1.msra.mxu0 1.0
    %1957 = vmatprep.subr.mxu0 0.0
    %1958 = vmatpush1.msra.mxu0 1.0
    %1959 = vmatprep.subr.mxu0 0.0
    %1960 = vmatpush1.msra.mxu0 1.0
    %1961 = vmatprep.subr.mxu0 0.0
    %1962 = vmatpush1.msra.mxu0 1.0
    %1963 = vmatprep.subr.mxu0 0.0
    %1964 = vmatpush1.msra.mxu0 1.0
    %1965 = vmatprep.subr.mxu0 0.0
    %1966 = vmatpush1.msra.mxu0 1.0
    %1967 = vmatprep.subr.mxu0 0.0
    %1968 = vmatpush1.msra.mxu0 1.0
    %1969 = vmatprep.subr.mxu0 0.0
    %1970 = vmatpush1.msra.mxu0 1.0
    %1971 = vmatprep.subr.mxu0 0.0
    %1972 = vmatpush1.msra.mxu0 1.0
    %1973 = vmatprep.subr.mxu0 0.0
    %1974 = vmatpush1.msra.mxu0 1.0
    %1975 = vmatprep.subr.mxu0 0.0
    %1976 = vmatpush1.msra.mxu0 1.0
    %1977 = vmatprep.subr.mxu0 0.0
    %1978 = vmatpush1.msra.mxu0 1.0
    %1979 = vmatprep.subr.mxu0 0.0
    %1980 = vmatpush1.msra.mxu0 1.0
    %1981 = vmatprep.subr.mxu0 0.0
    %1982 = vmatpush1.msra.mxu0 1.0
    %1983 = vmatprep.subr.mxu0 0.0
    %1984 = vmatpush1.msra.mxu0 1.0
    %1985 = vmatprep.subr.mxu0 0.0
    %1986 = vmatpush1.msra.mxu0 1.0
    %1987 = vmatprep.subr.mxu0 0.0
    %1988 = vmatpush1.msra.mxu0 1.0
    %1989 = vmatprep.subr.mxu0 0.0
    %1990 = vmatpush1.msra.mxu0 1.0
    %1991 = vmatprep.subr.mxu0 0.0
    %1992 = vmatpush1.msra.mxu0 1.0
    %1993 = vmatprep.subr.mxu0 0.0
    %1994 = vmatpush1.msra.mxu0 1.0
    %1995 = vmatprep.subr.mxu0 0.0
    %1996 = vmatpush1.msra.mxu0 1.0
    %1997 = vmatprep.subr.mxu0 0.0
    %1998 = vmatpush1.msra.mxu0 1.0
    %1999 = vmatprep.subr.mxu0 0.0
    %2000 = vmatpush1.msra.mxu0 1.0
    %2001 = vmatprep.subr.mxu0 0.0
    %2002 = vmatpush1.msra.mxu0 1.0
    %2003 = vmatprep.subr.mxu0 0.0
    %2004 = vmatpush1.msra.mxu0 1.0
    %2005 = vmatprep.subr.mxu0 0.0
    %2006 = vmatpush1.msra.mxu0 1.0
    %2007 = vmatprep.subr.mxu0 0.0
    %2008 = vmatpush1.msra.mxu0 1.0
    %2009 = vmatprep.subr.mxu0 0.0
    %2010 = vmatpush1.msra.mxu0 1.0
    %2011 = vmatprep.subr.mxu0 0.0
    %2012 = vmatpush1.msra.mxu0 1.0
    %2013 = vmatprep.subr.mxu0 0.0
    %2014 = vmatpush1.msra.mxu0 1.0
    %2015 = vmatprep.mubr.f32.mxu0 %v1675
    %2016 = vmatmul.mubr.f32.gmra.mrb[0].mxu0 %v1674
    %v2017 = vpop.f32.mrb[0].mxu0
    %v2018 = vadd.f32 %v1943, %v2017
    %v2019 = vpop.f32.mrb[0].mxu0
    %2020 = vmatprep.mubr.f32.mxu0 %v1709
    %2021 = vmatmul.mubr.f32.gmra.mrb[0].mxu0 %v1707
    %v2022 = vpop.f32.mrb[0].mxu0
    %v2023 = vadd.f32 %v1948, %v2022
    %v2024 = vpop.f32.mrb[0].mxu0
    %2025 = vdwg.mxu0
    %v2026 = vmul.f32 %v1132, %v1132
    %v2027 = vmul.f32 %v1133, %v1133
    %v2028 = vmul.f32 %v1134, %v1134
    %v2029 = vmul.f32 %v1135, %v1135
    %v2030 = vmul.f32 %v1136, %v1136
    %v2031 = vmul.f32 %v1137, %v1137
    %v2032 = vmul.f32 %v1138, %v1138
    %v2033 = vmul.f32 %v1139, %v1139
    %v2034 = vmul.f32 %v1140, %v1140
    %v2035 = vmul.f32 %v1141, %v1141
    %v2046 = vcombine.low %v2026, %v2028
    %v2047 = vcombine.high %v2026, %v2028
    %v2048 = vcombine.low %v2030, %v2032
    %v2049 = vcombine.high %v2030, %v2032
    %v2051 = vunpack.c.l.s4 1983009808
    %v2052 = vunpack.c.0.s8 %v2051
    %v2053 = vlaneseq
    %v2054 = vshrl.u32 %v2053, 7
    %v2055 = vsub.s32 %v2052, %v2054
    %v2056 = vrot.slane %v2046, %v2055
    %v2058 = vunpack.c.l.s4 1983009808
    %v2059 = vunpack.c.0.s8 %v2058
    %v2060 = vlaneseq
    %v2061 = vshrl.u32 %v2060, 7
    %v2062 = vsub.s32 %v2059, %v2061
    %v2063 = vrot.slane %v2047, %v2062
    %v2065 = vunpack.c.l.s4 1983009808
    %v2066 = vunpack.c.0.s8 %v2065
    %v2067 = vlaneseq
    %v2068 = vshrl.u32 %v2067, 7
    %v2069 = vsub.s32 %v2066, %v2068
    %v2070 = vrot.slane %v2048, %v2069
    %v2072 = vunpack.c.l.s4 1983009808
    %v2073 = vunpack.c.0.s8 %v2072
    %v2074 = vlaneseq
    %v2075 = vshrl.u32 %v2074, 7
    %v2076 = vsub.s32 %v2073, %v2075
    %v2077 = vrot.slane %v2049, %v2076
    %v2078 = vcombine.low %v2056, %v2070
    %v2079 = vcombine.high %v2056, %v2070
    %v2080 = vcombine.low %v2063, %v2077
    %v2081 = vcombine.high %v2063, %v2077
    %v2082 = vcombine.low %v2027, %v2029
    %v2083 = vcombine.high %v2027, %v2029
    %v2084 = vcombine.low %v2031, %v2033
    %v2085 = vcombine.high %v2031, %v2033
    %v2087 = vunpack.c.l.s4 1983009808
    %v2088 = vunpack.c.0.s8 %v2087
    %v2089 = vlaneseq
    %v2090 = vshrl.u32 %v2089, 7
    %v2091 = vsub.s32 %v2088, %v2090
    %v2092 = vrot.slane %v2082, %v2091
    %v2094 = vunpack.c.l.s4 1983009808
    %v2095 = vunpack.c.0.s8 %v2094
    %v2096 = vlaneseq
    %v2097 = vshrl.u32 %v2096, 7
    %v2098 = vsub.s32 %v2095, %v2097
    %v2099 = vrot.slane %v2083, %v2098
    %v2101 = vunpack.c.l.s4 1983009808
    %v2102 = vunpack.c.0.s8 %v2101
    %v2103 = vlaneseq
    %v2104 = vshrl.u32 %v2103, 7
    %v2105 = vsub.s32 %v2102, %v2104
    %v2106 = vrot.slane %v2084, %v2105
    %v2108 = vunpack.c.l.s4 1983009808
    %v2109 = vunpack.c.0.s8 %v2108
    %v2110 = vlaneseq
    %v2111 = vshrl.u32 %v2110, 7
    %v2112 = vsub.s32 %v2109, %v2111
    %v2113 = vrot.slane %v2085, %v2112
    %v2114 = vcombine.low %v2092, %v2106
    %v2115 = vcombine.high %v2092, %v2106
    %v2116 = vcombine.low %v2099, %v2113
    %v2117 = vcombine.high %v2099, %v2113
    %v2118 = vcombine.high %v2034, %v2034
    %v2120 = vunpack.c.l.s4 1983009808
    %v2121 = vunpack.c.0.s8 %v2120
    %v2122 = vlaneseq
    %v2123 = vshrl.u32 %v2122, 7
    %v2124 = vsub.s32 %v2121, %v2123
    %v2125 = vrot.slane %v2034, %v2124
    %v2127 = vunpack.c.l.s4 1983009808
    %v2128 = vunpack.c.0.s8 %v2127
    %v2129 = vlaneseq
    %v2130 = vshrl.u32 %v2129, 7
    %v2131 = vsub.s32 %v2128, %v2130
    %v2132 = vrot.slane %v2118, %v2131
    %v2133 = vcombine.high %v2125, %v2125
    %v2134 = vcombine.high %v2132, %v2132
    %v2135 = vcombine.high %v2035, %v2035
    %v2137 = vunpack.c.l.s4 1983009808
    %v2138 = vunpack.c.0.s8 %v2137
    %v2139 = vlaneseq
    %v2140 = vshrl.u32 %v2139, 7
    %v2141 = vsub.s32 %v2138, %v2140
    %v2142 = vrot.slane %v2035, %v2141
    %v2144 = vunpack.c.l.s4 1983009808
    %v2145 = vunpack.c.0.s8 %v2144
    %v2146 = vlaneseq
    %v2147 = vshrl.u32 %v2146, 7
    %v2148 = vsub.s32 %v2145, %v2147
    %v2149 = vrot.slane %v2135, %v2148
    %v2150 = vcombine.high %v2142, %v2142
    %v2151 = vcombine.high %v2149, %v2149
    %2168 = vmatprep.subr.mxu0 0.0
    %2169 = vmatpush1.msra.mxu0 1.0
    %2170 = vmatprep.subr.mxu0 0.0
    %2171 = vmatpush1.msra.mxu0 1.0
    %2172 = vmatprep.subr.mxu0 0.0
    %2173 = vmatpush1.msra.mxu0 1.0
    %2174 = vmatprep.subr.mxu0 0.0
    %2175 = vmatpush1.msra.mxu0 1.0
    %2176 = vmatprep.subr.mxu0 0.0
    %2177 = vmatpush1.msra.mxu0 1.0
    %2178 = vmatprep.subr.mxu0 0.0
    %2179 = vmatpush1.msra.mxu0 1.0
    %2180 = vmatprep.subr.mxu0 0.0
    %2181 = vmatpush1.msra.mxu0 1.0
    %2182 = vmatprep.subr.mxu0 0.0
    %2183 = vmatpush1.msra.mxu0 1.0
    %2184 = vmatprep.subr.mxu0 0.0
    %2185 = vmatpush1.msra.mxu0 1.0
    %2186 = vmatprep.subr.mxu0 0.0
    %2187 = vmatpush1.msra.mxu0 1.0
    %2188 = vmatprep.subr.mxu0 0.0
    %2189 = vmatpush1.msra.mxu0 1.0
    %2190 = vmatprep.subr.mxu0 0.0
    %2191 = vmatpush1.msra.mxu0 1.0
    %2192 = vmatprep.subr.mxu0 0.0
    %2193 = vmatpush1.msra.mxu0 1.0
    %2194 = vmatprep.subr.mxu0 0.0
    %2195 = vmatpush1.msra.mxu0 1.0
    %2196 = vmatprep.subr.mxu0 0.0
    %2197 = vmatpush1.msra.mxu0 1.0
    %2198 = vmatprep.subr.mxu0 0.0
    %2199 = vmatpush1.msra.mxu0 1.0
    %2200 = vmatprep.subr.mxu0 0.0
    %2201 = vmatpush1.msra.mxu0 1.0
    %2202 = vmatprep.subr.mxu0 0.0
    %2203 = vmatpush1.msra.mxu0 1.0
    %2204 = vmatprep.subr.mxu0 0.0
    %2205 = vmatpush1.msra.mxu0 1.0
    %2206 = vmatprep.subr.mxu0 0.0
    %2207 = vmatpush1.msra.mxu0 1.0
    %2208 = vmatprep.subr.mxu0 0.0
    %2209 = vmatpush1.msra.mxu0 1.0
    %2210 = vmatprep.subr.mxu0 0.0
    %2211 = vmatpush1.msra.mxu0 1.0
    %2212 = vmatprep.subr.mxu0 0.0
    %2213 = vmatpush1.msra.mxu0 1.0
    %2214 = vmatprep.subr.mxu0 0.0
    %2215 = vmatpush1.msra.mxu0 1.0
    %2216 = vmatprep.subr.mxu0 0.0
    %2217 = vmatpush1.msra.mxu0 1.0
    %2218 = vmatprep.subr.mxu0 0.0
    %2219 = vmatpush1.msra.mxu0 1.0
    %2220 = vmatprep.subr.mxu0 0.0
    %2221 = vmatpush1.msra.mxu0 1.0
    %2222 = vmatprep.subr.mxu0 0.0
    %2223 = vmatpush1.msra.mxu0 1.0
    %2224 = vmatprep.subr.mxu0 0.0
    %2225 = vmatpush1.msra.mxu0 1.0
    %2226 = vmatprep.subr.mxu0 0.0
    %2227 = vmatpush1.msra.mxu0 1.0
    %2228 = vmatprep.subr.mxu0 0.0
    %2229 = vmatpush1.msra.mxu0 1.0
    %2230 = vmatprep.subr.mxu0 0.0
    %2231 = vmatpush1.msra.mxu0 1.0
    %2232 = vmatprep.mubr.f32.mxu0 %v2079
    %2233 = vmatmul.mubr.f32.gmra.mrb[0].mxu0 %v2078
    %v2234 = vpop.f32.mrb[0].mxu0
    %v2235 = vadd.f32 0.0, %v2234
    %v2236 = vpop.f32.mrb[0].mxu0
    %2237 = vmatprep.mubr.f32.mxu0 %v2133
    %2238 = vmatmul.mubr.f32.gmra.mrb[0].mxu0 %v2125
    %v2239 = vpop.f32.mrb[0].mxu0
    %v2240 = vadd.f32 0.0, %v2239
    %v2241 = vpop.f32.mrb[0].mxu0
    %2242 = vdwg.mxu0
    %2243 = vmatprep.subr.mxu0 0.0
    %2244 = vmatpush1.msra.mxu0 1.0
    %2245 = vmatprep.subr.mxu0 0.0
    %2246 = vmatpush1.msra.mxu0 1.0
    %2247 = vmatprep.subr.mxu0 0.0
    %2248 = vmatpush1.msra.mxu0 1.0
    %2249 = vmatprep.subr.mxu0 0.0
    %2250 = vmatpush1.msra.mxu0 1.0
    %2251 = vmatprep.subr.mxu0 0.0
    %2252 = vmatpush1.msra.mxu0 1.0
    %2253 = vmatprep.subr.mxu0 0.0
    %2254 = vmatpush1.msra.mxu0 1.0
    %2255 = vmatprep.subr.mxu0 0.0
    %2256 = vmatpush1.msra.mxu0 1.0
    %2257 = vmatprep.subr.mxu0 0.0
    %2258 = vmatpush1.msra.mxu0 1.0
    %2259 = vmatprep.subr.mxu0 0.0
    %2260 = vmatpush1.msra.mxu0 1.0
    %2261 = vmatprep.subr.mxu0 0.0
    %2262 = vmatpush1.msra.mxu0 1.0
    %2263 = vmatprep.subr.mxu0 0.0
    %2264 = vmatpush1.msra.mxu0 1.0
    %2265 = vmatprep.subr.mxu0 0.0
    %2266 = vmatpush1.msra.mxu0 1.0
    %2267 = vmatprep.subr.mxu0 0.0
    %2268 = vmatpush1.msra.mxu0 1.0
    %2269 = vmatprep.subr.mxu0 0.0
    %2270 = vmatpush1.msra.mxu0 1.0
    %2271 = vmatprep.subr.mxu0 0.0
    %2272 = vmatpush1.msra.mxu0 1.0
    %2273 = vmatprep.subr.mxu0 0.0
    %2274 = vmatpush1.msra.mxu0 1.0
    %2275 = vmatprep.subr.mxu0 0.0
    %2276 = vmatpush1.msra.mxu0 1.0
    %2277 = vmatprep.subr.mxu0 0.0
    %2278 = vmatpush1.msra.mxu0 1.0
    %2279 = vmatprep.subr.mxu0 0.0
    %2280 = vmatpush1.msra.mxu0 1.0
    %2281 = vmatprep.subr.mxu0 0.0
    %2282 = vmatpush1.msra.mxu0 1.0
    %2283 = vmatprep.subr.mxu0 0.0
    %2284 = vmatpush1.msra.mxu0 1.0
    %2285 = vmatprep.subr.mxu0 0.0
    %2286 = vmatpush1.msra.mxu0 1.0
    %2287 = vmatprep.subr.mxu0 0.0
    %2288 = vmatpush1.msra.mxu0 1.0
    %2289 = vmatprep.subr.mxu0 0.0
    %2290 = vmatpush1.msra.mxu0 1.0
    %2291 = vmatprep.subr.mxu0 0.0
    %2292 = vmatpush1.msra.mxu0 1.0
    %2293 = vmatprep.subr.mxu0 0.0
    %2294 = vmatpush1.msra.mxu0 1.0
    %2295 = vmatprep.subr.mxu0 0.0
    %2296 = vmatpush1.msra.mxu0 1.0
    %2297 = vmatprep.subr.mxu0 0.0
    %2298 = vmatpush1.msra.mxu0 1.0
    %2299 = vmatprep.subr.mxu0 0.0
    %2300 = vmatpush1.msra.mxu0 1.0
    %2301 = vmatprep.subr.mxu0 0.0
    %2302 = vmatpush1.msra.mxu0 1.0
    %2303 = vmatprep.subr.mxu0 0.0
    %2304 = vmatpush1.msra.mxu0 1.0
    %2305 = vmatprep.subr.mxu0 0.0
    %2306 = vmatpush1.msra.mxu0 1.0
    %2307 = vmatprep.mubr.f32.mxu0 %v2081
    %2308 = vmatmul.mubr.f32.gmra.mrb[0].mxu0 %v2080
    %v2309 = vpop.f32.mrb[0].mxu0
    %v2310 = vadd.f32 %v2235, %v2309
    %v2311 = vpop.f32.mrb[0].mxu0
    %2312 = vmatprep.mubr.f32.mxu0 %v2134
    %2313 = vmatmul.mubr.f32.gmra.mrb[0].mxu0 %v2132
    %v2314 = vpop.f32.mrb[0].mxu0
    %v2315 = vadd.f32 %v2240, %v2314
    %v2316 = vpop.f32.mrb[0].mxu0
    %2317 = vdwg.mxu0
    %2318 = vmatprep.subr.mxu0 0.0
    %2319 = vmatpush1.msra.mxu0 1.0
    %2320 = vmatprep.subr.mxu0 0.0
    %2321 = vmatpush1.msra.mxu0 1.0
    %2322 = vmatprep.subr.mxu0 0.0
    %2323 = vmatpush1.msra.mxu0 1.0
    %2324 = vmatprep.subr.mxu0 0.0
    %2325 = vmatpush1.msra.mxu0 1.0
    %2326 = vmatprep.subr.mxu0 0.0
    %2327 = vmatpush1.msra.mxu0 1.0
    %2328 = vmatprep.subr.mxu0 0.0
    %2329 = vmatpush1.msra.mxu0 1.0
    %2330 = vmatprep.subr.mxu0 0.0
    %2331 = vmatpush1.msra.mxu0 1.0
    %2332 = vmatprep.subr.mxu0 0.0
    %2333 = vmatpush1.msra.mxu0 1.0
    %2334 = vmatprep.subr.mxu0 0.0
    %2335 = vmatpush1.msra.mxu0 1.0
    %2336 = vmatprep.subr.mxu0 0.0
    %2337 = vmatpush1.msra.mxu0 1.0
    %2338 = vmatprep.subr.mxu0 0.0
    %2339 = vmatpush1.msra.mxu0 1.0
    %2340 = vmatprep.subr.mxu0 0.0
    %2341 = vmatpush1.msra.mxu0 1.0
    %2342 = vmatprep.subr.mxu0 0.0
    %2343 = vmatpush1.msra.mxu0 1.0
    %2344 = vmatprep.subr.mxu0 0.0
    %2345 = vmatpush1.msra.mxu0 1.0
    %2346 = vmatprep.subr.mxu0 0.0
    %2347 = vmatpush1.msra.mxu0 1.0
    %2348 = vmatprep.subr.mxu0 0.0
    %2349 = vmatpush1.msra.mxu0 1.0
    %2350 = vmatprep.subr.mxu0 0.0
    %2351 = vmatpush1.msra.mxu0 1.0
    %2352 = vmatprep.subr.mxu0 0.0
    %2353 = vmatpush1.msra.mxu0 1.0
    %2354 = vmatprep.subr.mxu0 0.0
    %2355 = vmatpush1.msra.mxu0 1.0
    %2356 = vmatprep.subr.mxu0 0.0
    %2357 = vmatpush1.msra.mxu0 1.0
    %2358 = vmatprep.subr.mxu0 0.0
    %2359 = vmatpush1.msra.mxu0 1.0
    %2360 = vmatprep.subr.mxu0 0.0
    %2361 = vmatpush1.msra.mxu0 1.0
    %2362 = vmatprep.subr.mxu0 0.0
    %2363 = vmatpush1.msra.mxu0 1.0
    %2364 = vmatprep.subr.mxu0 0.0
    %2365 = vmatpush1.msra.mxu0 1.0
    %2366 = vmatprep.subr.mxu0 0.0
    %2367 = vmatpush1.msra.mxu0 1.0
    %2368 = vmatprep.subr.mxu0 0.0
    %2369 = vmatpush1.msra.mxu0 1.0
    %2370 = vmatprep.subr.mxu0 0.0
    %2371 = vmatpush1.msra.mxu0 1.0
    %2372 = vmatprep.subr.mxu0 0.0
    %2373 = vmatpush1.msra.mxu0 1.0
    %2374 = vmatprep.subr.mxu0 0.0
    %2375 = vmatpush1.msra.mxu0 1.0
    %2376 = vmatprep.subr.mxu0 0.0
    %2377 = vmatpush1.msra.mxu0 1.0
    %2378 = vmatprep.subr.mxu0 0.0
    %2379 = vmatpush1.msra.mxu0 1.0
    %2380 = vmatprep.subr.mxu0 0.0
    %2381 = vmatpush1.msra.mxu0 1.0
    %2382 = vmatprep.mubr.f32.mxu0 %v2115
    %2383 = vmatmul.mubr.f32.gmra.mrb[0].mxu0 %v2114
    %v2384 = vpop.f32.mrb[0].mxu0
    %v2385 = vadd.f32 %v2310, %v2384
    %v2386 = vpop.f32.mrb[0].mxu0
    %2387 = vmatprep.mubr.f32.mxu0 %v2150
    %2388 = vmatmul.mubr.f32.gmra.mrb[0].mxu0 %v2142
    %v2389 = vpop.f32.mrb[0].mxu0
    %v2390 = vadd.f32 %v2315, %v2389
    %v2391 = vpop.f32.mrb[0].mxu0
    %2392 = vdwg.mxu0
    %2393 = vmatprep.subr.mxu0 0.0
    %2394 = vmatpush1.msra.mxu0 1.0
    %2395 = vmatprep.subr.mxu0 0.0
    %2396 = vmatpush1.msra.mxu0 1.0
    %2397 = vmatprep.subr.mxu0 0.0
    %2398 = vmatpush1.msra.mxu0 1.0
    %2399 = vmatprep.subr.mxu0 0.0
    %2400 = vmatpush1.msra.mxu0 1.0
    %2401 = vmatprep.subr.mxu0 0.0
    %2402 = vmatpush1.msra.mxu0 1.0
    %2403 = vmatprep.subr.mxu0 0.0
    %2404 = vmatpush1.msra.mxu0 1.0
    %2405 = vmatprep.subr.mxu0 0.0
    %2406 = vmatpush1.msra.mxu0 1.0
    %2407 = vmatprep.subr.mxu0 0.0
    %2408 = vmatpush1.msra.mxu0 1.0
    %2409 = vmatprep.subr.mxu0 0.0
    %2410 = vmatpush1.msra.mxu0 1.0
    %2411 = vmatprep.subr.mxu0 0.0
    %2412 = vmatpush1.msra.mxu0 1.0
    %2413 = vmatprep.subr.mxu0 0.0
    %2414 = vmatpush1.msra.mxu0 1.0
    %2415 = vmatprep.subr.mxu0 0.0
    %2416 = vmatpush1.msra.mxu0 1.0
    %2417 = vmatprep.subr.mxu0 0.0
    %2418 = vmatpush1.msra.mxu0 1.0
    %2419 = vmatprep.subr.mxu0 0.0
    %2420 = vmatpush1.msra.mxu0 1.0
    %2421 = vmatprep.subr.mxu0 0.0
    %2422 = vmatpush1.msra.mxu0 1.0
    %2423 = vmatprep.subr.mxu0 0.0
    %2424 = vmatpush1.msra.mxu0 1.0
    %2425 = vmatprep.subr.mxu0 0.0
    %2426 = vmatpush1.msra.mxu0 1.0
    %2427 = vmatprep.subr.mxu0 0.0
    %2428 = vmatpush1.msra.mxu0 1.0
    %2429 = vmatprep.subr.mxu0 0.0
    %2430 = vmatpush1.msra.mxu0 1.0
    %2431 = vmatprep.subr.mxu0 0.0
    %2432 = vmatpush1.msra.mxu0 1.0
    %2433 = vmatprep.subr.mxu0 0.0
    %2434 = vmatpush1.msra.mxu0 1.0
    %2435 = vmatprep.subr.mxu0 0.0
    %2436 = vmatpush1.msra.mxu0 1.0
    %2437 = vmatprep.subr.mxu0 0.0
    %2438 = vmatpush1.msra.mxu0 1.0
    %2439 = vmatprep.subr.mxu0 0.0
    %2440 = vmatpush1.msra.mxu0 1.0
    %2441 = vmatprep.subr.mxu0 0.0
    %2442 = vmatpush1.msra.mxu0 1.0
    %2443 = vmatprep.subr.mxu0 0.0
    %2444 = vmatpush1.msra.mxu0 1.0
    %2445 = vmatprep.subr.mxu0 0.0
    %2446 = vmatpush1.msra.mxu0 1.0
    %2447 = vmatprep.subr.mxu0 0.0
    %2448 = vmatpush1.msra.mxu0 1.0
    %2449 = vmatprep.subr.mxu0 0.0
    %2450 = vmatpush1.msra.mxu0 1.0
    %2451 = vmatprep.subr.mxu0 0.0
    %2452 = vmatpush1.msra.mxu0 1.0
    %2453 = vmatprep.subr.mxu0 0.0
    %2454 = vmatpush1.msra.mxu0 1.0
    %2455 = vmatprep.subr.mxu0 0.0
    %2456 = vmatpush1.msra.mxu0 1.0
    %2457 = vmatprep.mubr.f32.mxu0 %v2117
    %2458 = vmatmul.mubr.f32.gmra.mrb[0].mxu0 %v2116
    %v2459 = vpop.f32.mrb[0].mxu0
    %v2460 = vadd.f32 %v2385, %v2459
    %v2461 = vpop.f32.mrb[0].mxu0
    %2462 = vmatprep.mubr.f32.mxu0 %v2151
    %2463 = vmatmul.mubr.f32.gmra.mrb[0].mxu0 %v2149
    %v2464 = vpop.f32.mrb[0].mxu0
    %v2465 = vadd.f32 %v2390, %v2464
    %v2466 = vpop.f32.mrb[0].mxu0
    %2467 = vdwg.mxu0
    %2468 = vmatprep.subr.mxu0 0.0
    %2469 = vmatpush1.msra.mxu0 1.0
    %2470 = vmatprep.subr.mxu0 0.0
    %2471 = vmatpush1.msra.mxu0 1.0
    %2472 = vmatprep.subr.mxu0 0.0
    %2473 = vmatpush1.msra.mxu0 1.0
    %2474 = vmatprep.subr.mxu0 0.0
    %2475 = vmatpush1.msra.mxu0 1.0
    %2476 = vmatprep.subr.mxu0 0.0
    %2477 = vmatpush1.msra.mxu0 1.0
    %2478 = vmatprep.subr.mxu0 0.0
    %2479 = vmatpush1.msra.mxu0 1.0
    %2480 = vmatprep.subr.mxu0 0.0
    %2481 = vmatpush1.msra.mxu0 1.0
    %2482 = vmatprep.subr.mxu0 0.0
    %2483 = vmatpush1.msra.mxu0 1.0
    %2484 = vmatprep.subr.mxu0 0.0
    %2485 = vmatpush1.msra.mxu0 1.0
    %2486 = vmatprep.subr.mxu0 0.0
    %2487 = vmatpush1.msra.mxu0 1.0
    %2488 = vmatprep.subr.mxu0 0.0
    %2489 = vmatpush1.msra.mxu0 1.0
    %2490 = vmatprep.subr.mxu0 0.0
    %2491 = vmatpush1.msra.mxu0 1.0
    %2492 = vmatprep.subr.mxu0 0.0
    %2493 = vmatpush1.msra.mxu0 1.0
    %2494 = vmatprep.subr.mxu0 0.0
    %2495 = vmatpush1.msra.mxu0 1.0
    %2496 = vmatprep.subr.mxu0 0.0
    %2497 = vmatpush1.msra.mxu0 1.0
    %2498 = vmatprep.subr.mxu0 0.0
    %2499 = vmatpush1.msra.mxu0 1.0
    %2500 = vmatprep.subr.mxu0 0.0
    %2501 = vmatpush1.msra.mxu0 1.0
    %2502 = vmatprep.subr.mxu0 0.0
    %2503 = vmatpush1.msra.mxu0 1.0
    %2504 = vmatprep.subr.mxu0 0.0
    %2505 = vmatpush1.msra.mxu0 1.0
    %2506 = vmatprep.subr.mxu0 0.0
    %2507 = vmatpush1.msra.mxu0 1.0
    %2508 = vmatprep.subr.mxu0 0.0
    %2509 = vmatpush1.msra.mxu0 1.0
    %2510 = vmatprep.subr.mxu0 0.0
    %2511 = vmatpush1.msra.mxu0 1.0
    %2512 = vmatprep.subr.mxu0 0.0
    %2513 = vmatpush1.msra.mxu0 1.0
    %2514 = vmatprep.subr.mxu0 0.0
    %2515 = vmatpush1.msra.mxu0 1.0
    %2516 = vmatprep.subr.mxu0 0.0
    %2517 = vmatpush1.msra.mxu0 1.0
    %2518 = vmatprep.subr.mxu0 0.0
    %2519 = vmatpush1.msra.mxu0 1.0
    %2520 = vmatprep.subr.mxu0 0.0
    %2521 = vmatpush1.msra.mxu0 1.0
    %2522 = vmatprep.subr.mxu0 0.0
    %2523 = vmatpush1.msra.mxu0 1.0
    %2524 = vmatprep.subr.mxu0 0.0
    %2525 = vmatpush1.msra.mxu0 1.0
    %2526 = vmatprep.subr.mxu0 0.0
    %2527 = vmatpush1.msra.mxu0 1.0
    %2528 = vmatprep.subr.mxu0 0.0
    %2529 = vmatpush1.msra.mxu0 1.0
    %2530 = vmatprep.subr.mxu0 0.0
    %2531 = vmatpush1.msra.mxu0 1.0
    %2532 = vmatprep.mubr.f32.mxu0 %v883
    %2533 = vmatmul.mubr.f32.gmra.mrb[0].mxu0 %v882
    %v2534 = vpop.f32.mrb[0].mxu0
    %v2535 = vadd.f32 0.0, %v2534
    %v2536 = vpop.f32.mrb[0].mxu0
    %2537 = vmatprep.mubr.f32.mxu0 %v952
    %2538 = vmatmul.mubr.f32.gmra.mrb[0].mxu0 %v928
    %v2539 = vpop.f32.mrb[0].mxu0
    %v2540 = vadd.f32 0.0, %v2539
    %v2541 = vpop.f32.mrb[0].mxu0
    %2542 = vdwg.mxu0
    %2543 = vmatprep.subr.mxu0 0.0
    %2544 = vmatpush1.msra.mxu0 1.0
    %2545 = vmatprep.subr.mxu0 0.0
    %2546 = vmatpush1.msra.mxu0 1.0
    %2547 = vmatprep.subr.mxu0 0.0
    %2548 = vmatpush1.msra.mxu0 1.0
    %2549 = vmatprep.subr.mxu0 0.0
    %2550 = vmatpush1.msra.mxu0 1.0
    %2551 = vmatprep.subr.mxu0 0.0
    %2552 = vmatpush1.msra.mxu0 1.0
    %2553 = vmatprep.subr.mxu0 0.0
    %2554 = vmatpush1.msra.mxu0 1.0
    %2555 = vmatprep.subr.mxu0 0.0
    %2556 = vmatpush1.msra.mxu0 1.0
    %2557 = vmatprep.subr.mxu0 0.0
    %2558 = vmatpush1.msra.mxu0 1.0
    %2559 = vmatprep.subr.mxu0 0.0
    %2560 = vmatpush1.msra.mxu0 1.0
    %2561 = vmatprep.subr.mxu0 0.0
    %2562 = vmatpush1.msra.mxu0 1.0
    %2563 = vmatprep.subr.mxu0 0.0
    %2564 = vmatpush1.msra.mxu0 1.0
    %2565 = vmatprep.subr.mxu0 0.0
    %2566 = vmatpush1.msra.mxu0 1.0
    %2567 = vmatprep.subr.mxu0 0.0
    %2568 = vmatpush1.msra.mxu0 1.0
    %2569 = vmatprep.subr.mxu0 0.0
    %2570 = vmatpush1.msra.mxu0 1.0
    %2571 = vmatprep.subr.mxu0 0.0
    %2572 = vmatpush1.msra.mxu0 1.0
    %2573 = vmatprep.subr.mxu0 0.0
    %2574 = vmatpush1.msra.mxu0 1.0
    %2575 = vmatprep.subr.mxu0 0.0
    %2576 = vmatpush1.msra.mxu0 1.0
    %2577 = vmatprep.subr.mxu0 0.0
    %2578 = vmatpush1.msra.mxu0 1.0
    %2579 = vmatprep.subr.mxu0 0.0
    %2580 = vmatpush1.msra.mxu0 1.0
    %2581 = vmatprep.subr.mxu0 0.0
    %2582 = vmatpush1.msra.mxu0 1.0
    %2583 = vmatprep.subr.mxu0 0.0
    %2584 = vmatpush1.msra.mxu0 1.0
    %2585 = vmatprep.subr.mxu0 0.0
    %2586 = vmatpush1.msra.mxu0 1.0
    %2587 = vmatprep.subr.mxu0 0.0
    %2588 = vmatpush1.msra.mxu0 1.0
    %2589 = vmatprep.subr.mxu0 0.0
    %2590 = vmatpush1.msra.mxu0 1.0
    %2591 = vmatprep.subr.mxu0 0.0
    %2592 = vmatpush1.msra.mxu0 1.0
    %2593 = vmatprep.subr.mxu0 0.0
    %2594 = vmatpush1.msra.mxu0 1.0
    %2595 = vmatprep.subr.mxu0 0.0
    %2596 = vmatpush1.msra.mxu0 1.0
    %2597 = vmatprep.subr.mxu0 0.0
    %2598 = vmatpush1.msra.mxu0 1.0
    %2599 = vmatprep.subr.mxu0 0.0
    %2600 = vmatpush1.msra.mxu0 1.0
    %2601 = vmatprep.subr.mxu0 0.0
    %2602 = vmatpush1.msra.mxu0 1.0
    %2603 = vmatprep.subr.mxu0 0.0
    %2604 = vmatpush1.msra.mxu0 1.0
    %2605 = vmatprep.subr.mxu0 0.0
    %2606 = vmatpush1.msra.mxu0 1.0
    %2607 = vmatprep.mubr.f32.mxu0 %v885
    %2608 = vmatmul.mubr.f32.gmra.mrb[0].mxu0 %v884
    %v2609 = vpop.f32.mrb[0].mxu0
    %v2610 = vadd.f32 %v2535, %v2609
    %v2611 = vpop.f32.mrb[0].mxu0
    %2612 = vmatprep.mubr.f32.mxu0 %v953
    %2613 = vmatmul.mubr.f32.gmra.mrb[0].mxu0 %v935
    %v2614 = vpop.f32.mrb[0].mxu0
    %v2615 = vadd.f32 %v2540, %v2614
    %v2616 = vpop.f32.mrb[0].mxu0
    %2617 = vdwg.mxu0
    %2618 = vmatprep.subr.mxu0 0.0
    %2619 = vmatpush1.msra.mxu0 1.0
    %2620 = vmatprep.subr.mxu0 0.0
    %2621 = vmatpush1.msra.mxu0 1.0
    %2622 = vmatprep.subr.mxu0 0.0
    %2623 = vmatpush1.msra.mxu0 1.0
    %2624 = vmatprep.subr.mxu0 0.0
    %2625 = vmatpush1.msra.mxu0 1.0
    %2626 = vmatprep.subr.mxu0 0.0
    %2627 = vmatpush1.msra.mxu0 1.0
    %2628 = vmatprep.subr.mxu0 0.0
    %2629 = vmatpush1.msra.mxu0 1.0
    %2630 = vmatprep.subr.mxu0 0.0
    %2631 = vmatpush1.msra.mxu0 1.0
    %2632 = vmatprep.subr.mxu0 0.0
    %2633 = vmatpush1.msra.mxu0 1.0
    %2634 = vmatprep.subr.mxu0 0.0
    %2635 = vmatpush1.msra.mxu0 1.0
    %2636 = vmatprep.subr.mxu0 0.0
    %2637 = vmatpush1.msra.mxu0 1.0
    %2638 = vmatprep.subr.mxu0 0.0
    %2639 = vmatpush1.msra.mxu0 1.0
    %2640 = vmatprep.subr.mxu0 0.0
    %2641 = vmatpush1.msra.mxu0 1.0
    %2642 = vmatprep.subr.mxu0 0.0
    %2643 = vmatpush1.msra.mxu0 1.0
    %2644 = vmatprep.subr.mxu0 0.0
    %2645 = vmatpush1.msra.mxu0 1.0
    %2646 = vmatprep.subr.mxu0 0.0
    %2647 = vmatpush1.msra.mxu0 1.0
    %2648 = vmatprep.subr.mxu0 0.0
    %2649 = vmatpush1.msra.mxu0 1.0
    %2650 = vmatprep.subr.mxu0 0.0
    %2651 = vmatpush1.msra.mxu0 1.0
    %2652 = vmatprep.subr.mxu0 0.0
    %2653 = vmatpush1.msra.mxu0 1.0
    %2654 = vmatprep.subr.mxu0 0.0
    %2655 = vmatpush1.msra.mxu0 1.0
    %2656 = vmatprep.subr.mxu0 0.0
    %2657 = vmatpush1.msra.mxu0 1.0
    %2658 = vmatprep.subr.mxu0 0.0
    %2659 = vmatpush1.msra.mxu0 1.0
    %2660 = vmatprep.subr.mxu0 0.0
    %2661 = vmatpush1.msra.mxu0 1.0
    %2662 = vmatprep.subr.mxu0 0.0
    %2663 = vmatpush1.msra.mxu0 1.0
    %2664 = vmatprep.subr.mxu0 0.0
    %2665 = vmatpush1.msra.mxu0 1.0
    %2666 = vmatprep.subr.mxu0 0.0
    %2667 = vmatpush1.msra.mxu0 1.0
    %2668 = vmatprep.subr.mxu0 0.0
    %2669 = vmatpush1.msra.mxu0 1.0
    %2670 = vmatprep.subr.mxu0 0.0
    %2671 = vmatpush1.msra.mxu0 1.0
    %2672 = vmatprep.subr.mxu0 0.0
    %2673 = vmatpush1.msra.mxu0 1.0
    %2674 = vmatprep.subr.mxu0 0.0
    %2675 = vmatpush1.msra.mxu0 1.0
    %2676 = vmatprep.subr.mxu0 0.0
    %2677 = vmatpush1.msra.mxu0 1.0
    %2678 = vmatprep.subr.mxu0 0.0
    %2679 = vmatpush1.msra.mxu0 1.0
    %2680 = vmatprep.subr.mxu0 0.0
    %2681 = vmatpush1.msra.mxu0 1.0
    %2682 = vmatprep.mubr.f32.mxu0 %v887
    %2683 = vmatmul.mubr.f32.gmra.mrb[0].mxu0 %v886
    %v2684 = vpop.f32.mrb[0].mxu0
    %v2685 = vadd.f32 %v2610, %v2684
    %v2686 = vpop.f32.mrb[0].mxu0
    %2687 = vmatprep.mubr.f32.mxu0 %v954
    %2688 = vmatmul.mubr.f32.gmra.mrb[0].mxu0 %v944
    %v2689 = vpop.f32.mrb[0].mxu0
    %v2690 = vadd.f32 %v2615, %v2689
    %v2691 = vpop.f32.mrb[0].mxu0
    %2692 = vdwg.mxu0
    %2693 = vmatprep.subr.mxu0 0.0
    %2694 = vmatpush1.msra.mxu0 1.0
    %2695 = vmatprep.subr.mxu0 0.0
    %2696 = vmatpush1.msra.mxu0 1.0
    %2697 = vmatprep.subr.mxu0 0.0
    %2698 = vmatpush1.msra.mxu0 1.0
    %2699 = vmatprep.subr.mxu0 0.0
    %2700 = vmatpush1.msra.mxu0 1.0
    %2701 = vmatprep.subr.mxu0 0.0
    %2702 = vmatpush1.msra.mxu0 1.0
    %2703 = vmatprep.subr.mxu0 0.0
    %2704 = vmatpush1.msra.mxu0 1.0
    %2705 = vmatprep.subr.mxu0 0.0
    %2706 = vmatpush1.msra.mxu0 1.0
    %2707 = vmatprep.subr.mxu0 0.0
    %2708 = vmatpush1.msra.mxu0 1.0
    %2709 = vmatprep.subr.mxu0 0.0
    %2710 = vmatpush1.msra.mxu0 1.0
    %2711 = vmatprep.subr.mxu0 0.0
    %2712 = vmatpush1.msra.mxu0 1.0
    %2713 = vmatprep.subr.mxu0 0.0
    %2714 = vmatpush1.msra.mxu0 1.0
    %2715 = vmatprep.subr.mxu0 0.0
    %2716 = vmatpush1.msra.mxu0 1.0
    %2717 = vmatprep.subr.mxu0 0.0
    %2718 = vmatpush1.msra.mxu0 1.0
    %2719 = vmatprep.subr.mxu0 0.0
    %2720 = vmatpush1.msra.mxu0 1.0
    %2721 = vmatprep.subr.mxu0 0.0
    %2722 = vmatpush1.msra.mxu0 1.0
    %2723 = vmatprep.subr.mxu0 0.0
    %2724 = vmatpush1.msra.mxu0 1.0
    %2725 = vmatprep.subr.mxu0 0.0
    %2726 = vmatpush1.msra.mxu0 1.0
    %2727 = vmatprep.subr.mxu0 0.0
    %2728 = vmatpush1.msra.mxu0 1.0
    %2729 = vmatprep.subr.mxu0 0.0
    %2730 = vmatpush1.msra.mxu0 1.0
    %2731 = vmatprep.subr.mxu0 0.0
    %2732 = vmatpush1.msra.mxu0 1.0
    %2733 = vmatprep.subr.mxu0 0.0
    %2734 = vmatpush1.msra.mxu0 1.0
    %2735 = vmatprep.subr.mxu0 0.0
    %2736 = vmatpush1.msra.mxu0 1.0
    %2737 = vmatprep.subr.mxu0 0.0
    %2738 = vmatpush1.msra.mxu0 1.0
    %2739 = vmatprep.subr.mxu0 0.0
    %2740 = vmatpush1.msra.mxu0 1.0
    %2741 = vmatprep.subr.mxu0 0.0
    %2742 = vmatpush1.msra.mxu0 1.0
    %2743 = vmatprep.subr.mxu0 0.0
    %2744 = vmatpush1.msra.mxu0 1.0
    %2745 = vmatprep.subr.mxu0 0.0
    %2746 = vmatpush1.msra.mxu0 1.0
    %2747 = vmatprep.subr.mxu0 0.0
    %2748 = vmatpush1.msra.mxu0 1.0
    %2749 = vmatprep.subr.mxu0 0.0
    %2750 = vmatpush1.msra.mxu0 1.0
    %2751 = vmatprep.subr.mxu0 0.0
    %2752 = vmatpush1.msra.mxu0 1.0
    %2753 = vmatprep.subr.mxu0 0.0
    %2754 = vmatpush1.msra.mxu0 1.0
    %2755 = vmatprep.subr.mxu0 0.0
    %2756 = vmatpush1.msra.mxu0 1.0
    %2757 = vmatprep.mubr.f32.mxu0 %v889
    %2758 = vmatmul.mubr.f32.gmra.mrb[0].mxu0 %v888
    %v2759 = vpop.f32.mrb[0].mxu0
    %v2760 = vadd.f32 %v2685, %v2759
    %v2761 = vpop.f32.mrb[0].mxu0
    %2762 = vmatprep.mubr.f32.mxu0 %v955
    %2763 = vmatmul.mubr.f32.gmra.mrb[0].mxu0 %v951
    %v2764 = vpop.f32.mrb[0].mxu0
    %v2765 = vadd.f32 %v2690, %v2764
    %v2766 = vpop.f32.mrb[0].mxu0
    %2767 = vdwg.mxu0
    %2768 = vmatprep.subr.mxu0 0.0
    %2769 = vmatpush1.msra.mxu0 1.0
    %2770 = vmatprep.subr.mxu0 0.0
    %2771 = vmatpush1.msra.mxu0 1.0
    %2772 = vmatprep.subr.mxu0 0.0
    %2773 = vmatpush1.msra.mxu0 1.0
    %2774 = vmatprep.subr.mxu0 0.0
    %2775 = vmatpush1.msra.mxu0 1.0
    %2776 = vmatprep.subr.mxu0 0.0
    %2777 = vmatpush1.msra.mxu0 1.0
    %2778 = vmatprep.subr.mxu0 0.0
    %2779 = vmatpush1.msra.mxu0 1.0
    %2780 = vmatprep.subr.mxu0 0.0
    %2781 = vmatpush1.msra.mxu0 1.0
    %2782 = vmatprep.subr.mxu0 0.0
    %2783 = vmatpush1.msra.mxu0 1.0
    %2784 = vmatprep.subr.mxu0 0.0
    %2785 = vmatpush1.msra.mxu0 1.0
    %2786 = vmatprep.subr.mxu0 0.0
    %2787 = vmatpush1.msra.mxu0 1.0
    %2788 = vmatprep.subr.mxu0 0.0
    %2789 = vmatpush1.msra.mxu0 1.0
    %2790 = vmatprep.subr.mxu0 0.0
    %2791 = vmatpush1.msra.mxu0 1.0
    %2792 = vmatprep.subr.mxu0 0.0
    %2793 = vmatpush1.msra.mxu0 1.0
    %2794 = vmatprep.subr.mxu0 0.0
    %2795 = vmatpush1.msra.mxu0 1.0
    %2796 = vmatprep.subr.mxu0 0.0
    %2797 = vmatpush1.msra.mxu0 1.0
    %2798 = vmatprep.subr.mxu0 0.0
    %2799 = vmatpush1.msra.mxu0 1.0
    %2800 = vmatprep.subr.mxu0 0.0
    %2801 = vmatpush1.msra.mxu0 1.0
    %2802 = vmatprep.subr.mxu0 0.0
    %2803 = vmatpush1.msra.mxu0 1.0
    %2804 = vmatprep.subr.mxu0 0.0
    %2805 = vmatpush1.msra.mxu0 1.0
    %2806 = vmatprep.subr.mxu0 0.0
    %2807 = vmatpush1.msra.mxu0 1.0
    %2808 = vmatprep.subr.mxu0 0.0
    %2809 = vmatpush1.msra.mxu0 1.0
    %2810 = vmatprep.subr.mxu0 0.0
    %2811 = vmatpush1.msra.mxu0 1.0
    %2812 = vmatprep.subr.mxu0 0.0
    %2813 = vmatpush1.msra.mxu0 1.0
    %2814 = vmatprep.subr.mxu0 0.0
    %2815 = vmatpush1.msra.mxu0 1.0
    %2816 = vmatprep.subr.mxu0 0.0
    %2817 = vmatpush1.msra.mxu0 1.0
    %2818 = vmatprep.subr.mxu0 0.0
    %2819 = vmatpush1.msra.mxu0 1.0
    %2820 = vmatprep.subr.mxu0 0.0
    %2821 = vmatpush1.msra.mxu0 1.0
    %2822 = vmatprep.subr.mxu0 0.0
    %2823 = vmatpush1.msra.mxu0 1.0
    %2824 = vmatprep.subr.mxu0 0.0
    %2825 = vmatpush1.msra.mxu0 1.0
    %2826 = vmatprep.subr.mxu0 0.0
    %2827 = vmatpush1.msra.mxu0 1.0
    %2828 = vmatprep.subr.mxu0 0.0
    %2829 = vmatpush1.msra.mxu0 1.0
    %2830 = vmatprep.subr.mxu0 0.0
    %2831 = vmatpush1.msra.mxu0 1.0
    %2832 = vmatprep.mubr.f32.mxu0 %v750
    %2833 = vmatmul.mubr.f32.gmra.mrb[0].mxu0 %v726
    %v2834 = vpop.f32.mrb[0].mxu0
    %v2835 = vadd.f32 0.0, %v2834
    %v2836 = vpop.f32.mrb[0].mxu0
    %2837 = vdwg.mxu0
    %2838 = vmatprep.subr.mxu0 0.0
    %2839 = vmatpush1.msra.mxu0 1.0
    %2840 = vmatprep.subr.mxu0 0.0
    %2841 = vmatpush1.msra.mxu0 1.0
    %2842 = vmatprep.subr.mxu0 0.0
    %2843 = vmatpush1.msra.mxu0 1.0
    %2844 = vmatprep.subr.mxu0 0.0
    %2845 = vmatpush1.msra.mxu0 1.0
    %2846 = vmatprep.subr.mxu0 0.0
    %2847 = vmatpush1.msra.mxu0 1.0
    %2848 = vmatprep.subr.mxu0 0.0
    %2849 = vmatpush1.msra.mxu0 1.0
    %2850 = vmatprep.subr.mxu0 0.0
    %2851 = vmatpush1.msra.mxu0 1.0
    %2852 = vmatprep.subr.mxu0 0.0
    %2853 = vmatpush1.msra.mxu0 1.0
    %2854 = vmatprep.subr.mxu0 0.0
    %2855 = vmatpush1.msra.mxu0 1.0
    %2856 = vmatprep.subr.mxu0 0.0
    %2857 = vmatpush1.msra.mxu0 1.0
    %2858 = vmatprep.subr.mxu0 0.0
    %2859 = vmatpush1.msra.mxu0 1.0
    %2860 = vmatprep.subr.mxu0 0.0
    %2861 = vmatpush1.msra.mxu0 1.0
    %2862 = vmatprep.subr.mxu0 0.0
    %2863 = vmatpush1.msra.mxu0 1.0
    %2864 = vmatprep.subr.mxu0 0.0
    %2865 = vmatpush1.msra.mxu0 1.0
    %2866 = vmatprep.subr.mxu0 0.0
    %2867 = vmatpush1.msra.mxu0 1.0
    %2868 = vmatprep.subr.mxu0 0.0
    %2869 = vmatpush1.msra.mxu0 1.0
    %2870 = vmatprep.subr.mxu0 0.0
    %2871 = vmatpush1.msra.mxu0 1.0
    %2872 = vmatprep.subr.mxu0 0.0
    %2873 = vmatpush1.msra.mxu0 1.0
    %2874 = vmatprep.subr.mxu0 0.0
    %2875 = vmatpush1.msra.mxu0 1.0
    %2876 = vmatprep.subr.mxu0 0.0
    %2877 = vmatpush1.msra.mxu0 1.0
    %2878 = vmatprep.subr.mxu0 0.0
    %2879 = vmatpush1.msra.mxu0 1.0
    %2880 = vmatprep.subr.mxu0 0.0
    %2881 = vmatpush1.msra.mxu0 1.0
    %2882 = vmatprep.subr.mxu0 0.0
    %2883 = vmatpush1.msra.mxu0 1.0
    %2884 = vmatprep.subr.mxu0 0.0
    %2885 = vmatpush1.msra.mxu0 1.0
    %2886 = vmatprep.subr.mxu0 0.0
    %2887 = vmatpush1.msra.mxu0 1.0
    %2888 = vmatprep.subr.mxu0 0.0
    %2889 = vmatpush1.msra.mxu0 1.0
    %2890 = vmatprep.subr.mxu0 0.0
    %2891 = vmatpush1.msra.mxu0 1.0
    %2892 = vmatprep.subr.mxu0 0.0
    %2893 = vmatpush1.msra.mxu0 1.0
    %2894 = vmatprep.subr.mxu0 0.0
    %2895 = vmatpush1.msra.mxu0 1.0
    %2896 = vmatprep.subr.mxu0 0.0
    %2897 = vmatpush1.msra.mxu0 1.0
    %2898 = vmatprep.subr.mxu0 0.0
    %2899 = vmatpush1.msra.mxu0 1.0
    %2900 = vmatprep.subr.mxu0 0.0
    %2901 = vmatpush1.msra.mxu0 1.0
    %2902 = vmatprep.mubr.f32.mxu0 %v751
    %2903 = vmatmul.mubr.f32.gmra.mrb[0].mxu0 %v733
    %v2904 = vpop.f32.mrb[0].mxu0
    %v2905 = vadd.f32 %v2835, %v2904
    %v2906 = vpop.f32.mrb[0].mxu0
    %2907 = vdwg.mxu0
    %2908 = vmatprep.subr.mxu0 0.0
    %2909 = vmatpush1.msra.mxu0 1.0
    %2910 = vmatprep.subr.mxu0 0.0
    %2911 = vmatpush1.msra.mxu0 1.0
    %2912 = vmatprep.subr.mxu0 0.0
    %2913 = vmatpush1.msra.mxu0 1.0
    %2914 = vmatprep.subr.mxu0 0.0
    %2915 = vmatpush1.msra.mxu0 1.0
    %2916 = vmatprep.subr.mxu0 0.0
    %2917 = vmatpush1.msra.mxu0 1.0
    %2918 = vmatprep.subr.mxu0 0.0
    %2919 = vmatpush1.msra.mxu0 1.0
    %2920 = vmatprep.subr.mxu0 0.0
    %2921 = vmatpush1.msra.mxu0 1.0
    %2922 = vmatprep.subr.mxu0 0.0
    %2923 = vmatpush1.msra.mxu0 1.0
    %2924 = vmatprep.subr.mxu0 0.0
    %2925 = vmatpush1.msra.mxu0 1.0
    %2926 = vmatprep.subr.mxu0 0.0
    %2927 = vmatpush1.msra.mxu0 1.0
    %2928 = vmatprep.subr.mxu0 0.0
    %2929 = vmatpush1.msra.mxu0 1.0
    %2930 = vmatprep.subr.mxu0 0.0
    %2931 = vmatpush1.msra.mxu0 1.0
    %2932 = vmatprep.subr.mxu0 0.0
    %2933 = vmatpush1.msra.mxu0 1.0
    %2934 = vmatprep.subr.mxu0 0.0
    %2935 = vmatpush1.msra.mxu0 1.0
    %2936 = vmatprep.subr.mxu0 0.0
    %2937 = vmatpush1.msra.mxu0 1.0
    %2938 = vmatprep.subr.mxu0 0.0
    %2939 = vmatpush1.msra.mxu0 1.0
    %2940 = vmatprep.subr.mxu0 0.0
    %2941 = vmatpush1.msra.mxu0 1.0
    %2942 = vmatprep.subr.mxu0 0.0
    %2943 = vmatpush1.msra.mxu0 1.0
    %2944 = vmatprep.subr.mxu0 0.0
    %2945 = vmatpush1.msra.mxu0 1.0
    %2946 = vmatprep.subr.mxu0 0.0
    %2947 = vmatpush1.msra.mxu0 1.0
    %2948 = vmatprep.subr.mxu0 0.0
    %2949 = vmatpush1.msra.mxu0 1.0
    %2950 = vmatprep.subr.mxu0 0.0
    %2951 = vmatpush1.msra.mxu0 1.0
    %2952 = vmatprep.subr.mxu0 0.0
    %2953 = vmatpush1.msra.mxu0 1.0
    %2954 = vmatprep.subr.mxu0 0.0
    %2955 = vmatpush1.msra.mxu0 1.0
    %2956 = vmatprep.subr.mxu0 0.0
    %2957 = vmatpush1.msra.mxu0 1.0
    %2958 = vmatprep.subr.mxu0 0.0
    %2959 = vmatpush1.msra.mxu0 1.0
    %2960 = vmatprep.subr.mxu0 0.0
    %2961 = vmatpush1.msra.mxu0 1.0
    %2962 = vmatprep.subr.mxu0 0.0
    %2963 = vmatpush1.msra.mxu0 1.0
    %2964 = vmatprep.subr.mxu0 0.0
    %2965 = vmatpush1.msra.mxu0 1.0
    %2966 = vmatprep.subr.mxu0 0.0
    %2967 = vmatpush1.msra.mxu0 1.0
    %2968 = vmatprep.subr.mxu0 0.0
    %2969 = vmatpush1.msra.mxu0 1.0
    %2970 = vmatprep.subr.mxu0 0.0
    %2971 = vmatpush1.msra.mxu0 1.0
    %2972 = vmatprep.mubr.f32.mxu0 %v752
    %2973 = vmatmul.mubr.f32.gmra.mrb[0].mxu0 %v742
    %v2974 = vpop.f32.mrb[0].mxu0
    %v2975 = vadd.f32 %v2905, %v2974
    %v2976 = vpop.f32.mrb[0].mxu0
    %2977 = vdwg.mxu0
    %2978 = vmatprep.subr.mxu0 0.0
    %2979 = vmatpush1.msra.mxu0 1.0
    %2980 = vmatprep.subr.mxu0 0.0
    %2981 = vmatpush1.msra.mxu0 1.0
    %2982 = vmatprep.subr.mxu0 0.0
    %2983 = vmatpush1.msra.mxu0 1.0
    %2984 = vmatprep.subr.mxu0 0.0
    %2985 = vmatpush1.msra.mxu0 1.0
    %2986 = vmatprep.subr.mxu0 0.0
    %2987 = vmatpush1.msra.mxu0 1.0
    %2988 = vmatprep.subr.mxu0 0.0
    %2989 = vmatpush1.msra.mxu0 1.0
    %2990 = vmatprep.subr.mxu0 0.0
    %2991 = vmatpush1.msra.mxu0 1.0
    %2992 = vmatprep.subr.mxu0 0.0
    %2993 = vmatpush1.msra.mxu0 1.0
    %2994 = vmatprep.subr.mxu0 0.0
    %2995 = vmatpush1.msra.mxu0 1.0
    %2996 = vmatprep.subr.mxu0 0.0
    %2997 = vmatpush1.msra.mxu0 1.0
    %2998 = vmatprep.subr.mxu0 0.0
    %2999 = vmatpush1.msra.mxu0 1.0
    %3000 = vmatprep.subr.mxu0 0.0
    %3001 = vmatpush1.msra.mxu0 1.0
    %3002 = vmatprep.subr.mxu0 0.0
    %3003 = vmatpush1.msra.mxu0 1.0
    %3004 = vmatprep.subr.mxu0 0.0
    %3005 = vmatpush1.msra.mxu0 1.0
    %3006 = vmatprep.subr.mxu0 0.0
    %3007 = vmatpush1.msra.mxu0 1.0
    %3008 = vmatprep.subr.mxu0 0.0
    %3009 = vmatpush1.msra.mxu0 1.0
    %3010 = vmatprep.subr.mxu0 0.0
    %3011 = vmatpush1.msra.mxu0 1.0
    %3012 = vmatprep.subr.mxu0 0.0
    %3013 = vmatpush1.msra.mxu0 1.0
    %3014 = vmatprep.subr.mxu0 0.0
    %3015 = vmatpush1.msra.mxu0 1.0
    %3016 = vmatprep.subr.mxu0 0.0
    %3017 = vmatpush1.msra.mxu0 1.0
    %3018 = vmatprep.subr.mxu0 0.0
    %3019 = vmatpush1.msra.mxu0 1.0
    %3020 = vmatprep.subr.mxu0 0.0
    %3021 = vmatpush1.msra.mxu0 1.0
    %3022 = vmatprep.subr.mxu0 0.0
    %3023 = vmatpush1.msra.mxu0 1.0
    %3024 = vmatprep.subr.mxu0 0.0
    %3025 = vmatpush1.msra.mxu0 1.0
    %3026 = vmatprep.subr.mxu0 0.0
    %3027 = vmatpush1.msra.mxu0 1.0
    %3028 = vmatprep.subr.mxu0 0.0
    %3029 = vmatpush1.msra.mxu0 1.0
    %3030 = vmatprep.subr.mxu0 0.0
    %3031 = vmatpush1.msra.mxu0 1.0
    %3032 = vmatprep.subr.mxu0 0.0
    %3033 = vmatpush1.msra.mxu0 1.0
    %3034 = vmatprep.subr.mxu0 0.0
    %3035 = vmatpush1.msra.mxu0 1.0
    %3036 = vmatprep.subr.mxu0 0.0
    %3037 = vmatpush1.msra.mxu0 1.0
    %3038 = vmatprep.subr.mxu0 0.0
    %3039 = vmatpush1.msra.mxu0 1.0
    %3040 = vmatprep.subr.mxu0 0.0
    %3041 = vmatpush1.msra.mxu0 1.0
    %3042 = vmatprep.mubr.f32.mxu0 %v753
    %3043 = vmatmul.mubr.f32.gmra.mrb[0].mxu0 %v749
    %v3044 = vpop.f32.mrb[0].mxu0
    %v3045 = vadd.f32 %v2975, %v3044
    %v3046 = vpop.f32.mrb[0].mxu0
    %3047 = vdwg.mxu0
    %v3050 = vcombine.high %v2760, %v2760
    %v3052 = vunpack.c.l.s4 1983009808
    %v3053 = vunpack.c.0.s8 %v3052
    %v3054 = vlaneseq
    %v3055 = vshrl.u32 %v3054, 7
    %v3056 = vsub.s32 %v3053, %v3055
    %v3057 = vrot.slane %v2760, %v3056
    %v3059 = vunpack.c.l.s4 1983009808
    %v3060 = vunpack.c.0.s8 %v3059
    %v3061 = vlaneseq
    %v3062 = vshrl.u32 %v3061, 7
    %v3063 = vsub.s32 %v3060, %v3062
    %v3064 = vrot.slane %v3050, %v3063
    %v3065 = vcombine.high %v3057, %v3057
    %v3066 = vcombine.high %v3064, %v3064
    %v3068 = vunpack.c.l.s4 1983009808
    %v3069 = vunpack.c.0.s8 %v3068
    %v3070 = vlaneseq
    %v3071 = vshrl.u32 %v3070, 7
    %v3072 = vsub.s32 %v3069, %v3071
    %v3073 = vrot.slane %v2765, %v3072
    %v3079 = vmul.f32 %v3045, %v3057
    %v3080 = vmul.f32 %v3045, %v3065
    %v3081 = vmul.f32 %v3045, %v3064
    %v3082 = vmul.f32 %v3045, %v3066
    %v3083 = vmul.f32 %v3045, %v3073
    %v3084 = vmul.f32 %v3079, 0.0009765625
    %v3085 = vmul.f32 %v3080, 0.0009765625
    %v3086 = vmul.f32 %v3081, 0.0009765625
    %v3087 = vmul.f32 %v3082, 0.0009765625
    %v3088 = vmul.f32 %v3083, 0.0009765625
    %v3094 = vcombine.low %v3084, %v3085
    %v3095 = vcombine.low %v3086, %v3087
    %v3097 = vunpack.c.l.s4 1983009808
    %v3098 = vunpack.c.0.s8 %v3097
    %v3099 = vlaneseq
    %v3100 = vshrl.u32 %v3099, 7
    %v3101 = vsub.s32 %v3098, %v3100
    %v3102 = vrot.slane %v3094, %v3101
    %v3104 = vunpack.c.l.s4 1983009808
    %v3105 = vunpack.c.0.s8 %v3104
    %v3106 = vlaneseq
    %v3107 = vshrl.u32 %v3106, 7
    %v3108 = vsub.s32 %v3105, %v3107
    %v3109 = vrot.slane %v3095, %v3108
    %v3110 = vcombine.low %v3102, %v3109
    %v3112 = vunpack.c.l.s4 1983009808
    %v3113 = vunpack.c.0.s8 %v3112
    %v3114 = vlaneseq
    %v3115 = vshrl.u32 %v3114, 7
    %v3116 = vsub.s32 %v3113, %v3115
    %v3117 = vrot.slane %v3088, %v3116
    %v3120 = vsub.f32 %v1576, %v3110
    %v3121 = vsub.f32 %v1581, %v3117
    %v3122 = vmul.f32 %v3120, 0.0009775171
    %v3123 = vmul.f32 %v3121, 0.0009775171
    %v3124 = vstv %s70
    %v3125 = vmul.f32 %v3124, %v1576
    %v3126 = vmul.f32 %v3124, %v1581
    %v3127 = vstv %s71
    %v3128 = vmul.f32 %v3127, %v2018
    %v3129 = vmul.f32 %v3127, %v2023
    %v3130 = vadd.f32 %v3125, %v3128
    %v3131 = vadd.f32 %v3126, %v3129
    %v3132 = vstv %s72
    %v3133 = vmul.f32 %v3132, %v2460
    %v3134 = vmul.f32 %v3132, %v2465
    %v3135 = vadd.f32 %v3130, %v3133
    %v3136 = vadd.f32 %v3131, %v3134
    %v3137 = vstv %s73
    %v3138 = vmul.f32 %v3137, %v3122
    %v3139 = vmul.f32 %v3137, %v3123
    %v3140 = vadd.f32 %v3135, %v3138
    %v3141 = vadd.f32 %v3136, %v3139
    %v3142 = vld [vmem:[%s3] sm:$0xff]
    %v3143 = vld [vmem:[%s3 + $0x8] sm:$0xff]
    %v3144 = vmul.f32 %v3142, %v3142
    %v3145 = vmul.f32 %v3143, %v3143
    %3146 = vadd.xlane.f32.xlu0 %v3144
    %v3147 = vpop.xlane.xlu0 %3146
    %3148 = vadd.xlane.f32.xlu0 %v3145
    %v3149 = vpop.xlane.xlu0 %3148
    %v3150 = vrot.slane %v3144, 4
    %v3151 = vadd.f32 %v3144, %v3150
    %v3152 = vrot.slane %v3151, 2
    %v3153 = vadd.f32 %v3151, %v3152
    %v3154 = vrot.slane %v3153, 1
    %v3155 = vadd.f32 %v3153, %v3154
    %v3156 = vrot.slane %v3145, 4
    %v3157 = vadd.f32 %v3145, %v3156
    %v3158 = vrot.slane %v3157, 2
    %v3159 = vadd.f32 %v3157, %v3158
    %v3160 = vrot.slane %v3159, 1
    %v3161 = vadd.f32 %v3159, %v3160
    %v3162 = vrot.slane %v3147, 4
    %v3163 = vadd.f32 %v3147, %v3162
    %v3164 = vrot.slane %v3163, 2
    %v3165 = vadd.f32 %v3163, %v3164
    %v3166 = vrot.slane %v3165, 1
    %v3167 = vadd.f32 %v3165, %v3166
    %v3168 = vrot.slane %v3149, 4
    %v3169 = vadd.f32 %v3149, %v3168
    %v3170 = vrot.slane %v3169, 2
    %v3171 = vadd.f32 %v3169, %v3170
    %v3172 = vrot.slane %v3171, 1
    %v3173 = vadd.f32 %v3171, %v3172
    %v3174 = vrsqrt.pop %v3155
    %v3175 = vmul.f32 %v3155, %v3174
    %vm3176 = vcmp.eq.f32.partialorder %v3155, inf
    %v3177 = vsel %vm3176, %v3155, %v3175
    %vm3178 = vcmp.eq.f32.partialorder %v3155, 0.0
    %v3179 = vand.u32 %v3155, 2147483648
    %v3180 = vsel %vm3178, %v3179, %v3177
    %v3181 = vrsqrt.pop %v3161
    %v3182 = vmul.f32 %v3161, %v3181
    %vm3183 = vcmp.eq.f32.partialorder %v3161, inf
    %v3184 = vsel %vm3183, %v3161, %v3182
    %vm3185 = vcmp.eq.f32.partialorder %v3161, 0.0
    %v3186 = vand.u32 %v3161, 2147483648
    %v3187 = vsel %vm3185, %v3186, %v3184
    %v3188 = vadd.f32 %v3180, 1e-12
    %v3189 = vadd.f32 %v3187, 1e-12
    %v3190 = vrcp.pop %v3188
    %v3191 = vrcp.pop %v3189
    %v3192 = vstv %s75
    %v3193 = vmul.f32 %v3192, %v3190
    %v3194 = vmul.f32 %v3192, %v3191
    %v3195 = vstv %s74
    %v3196 = vadd.f32 %v3195, %v3193
    %v3197 = vadd.f32 %v3195, %v3194
    %v3198 = vrsqrt.pop %v3167
    %v3199 = vmul.f32 %v3167, %v3198
    %vm3200 = vcmp.eq.f32.partialorder %v3167, inf
    %v3201 = vsel %vm3200, %v3167, %v3199
    %vm3202 = vcmp.eq.f32.partialorder %v3167, 0.0
    %v3203 = vand.u32 %v3167, 2147483648
    %v3204 = vsel %vm3202, %v3203, %v3201
    %v3205 = vrsqrt.pop %v3173
    %v3206 = vmul.f32 %v3173, %v3205
    %vm3207 = vcmp.eq.f32.partialorder %v3173, inf
    %v3208 = vsel %vm3207, %v3173, %v3206
    %vm3209 = vcmp.eq.f32.partialorder %v3173, 0.0
    %v3210 = vand.u32 %v3173, 2147483648
    %v3211 = vsel %vm3209, %v3210, %v3208
    %v3212 = vadd.f32 %v3204, 1e-12
    %v3213 = vadd.f32 %v3211, 1e-12
    %v3214 = vrcp.pop %v3212
    %v3215 = vrcp.pop %v3213
    %v3216 = vstv %s76
    %v3217 = vmul.f32 %v3216, %v3214
    %v3218 = vmul.f32 %v3216, %v3215
    %v3219 = vadd.f32 %v3196, %v3217
    %v3220 = vadd.f32 %v3197, %v3218
    %v3221 = vrsqrt.pop %v3147
    %v3222 = vmul.f32 %v3147, %v3221
    %vm3223 = vcmp.eq.f32.partialorder %v3147, inf
    %v3224 = vsel %vm3223, %v3147, %v3222
    %vm3225 = vcmp.eq.f32.partialorder %v3147, 0.0
    %v3226 = vand.u32 %v3147, 2147483648
    %v3227 = vsel %vm3225, %v3226, %v3224
    %v3228 = vrsqrt.pop %v3149
    %v3229 = vmul.f32 %v3149, %v3228
    %vm3230 = vcmp.eq.f32.partialorder %v3149, inf
    %v3231 = vsel %vm3230, %v3149, %v3229
    %vm3232 = vcmp.eq.f32.partialorder %v3149, 0.0
    %v3233 = vand.u32 %v3149, 2147483648
    %v3234 = vsel %vm3232, %v3233, %v3231
    %v3235 = vadd.f32 %v3227, 1e-12
    %v3236 = vadd.f32 %v3234, 1e-12
    %v3237 = vrcp.pop %v3235
    %v3238 = vrcp.pop %v3236
    %v3239 = vstv %s77
    %v3240 = vmul.f32 %v3239, %v3237
    %v3241 = vmul.f32 %v3239, %v3238
    %v3242 = vadd.f32 %v3219, %v3240
    %v3243 = vadd.f32 %v3220, %v3241
    %v3244 = vmul.f32 %v3142, %v3242
    %v3245 = vmul.f32 %v3143, %v3243
    %v3246 = vld [vmem:[#allocation9] sm:$0xff]
    %v3247 = vld [vmem:[#allocation9 + $0x8] sm:$0xff]
    %v3248 = vld [vmem:[#allocation9 + $0x10] sm:$0xff]
    %v3249 = vld [vmem:[#allocation9 + $0x18] sm:$0xff]
    %v3250 = vld [vmem:[#allocation9 + $0x20] sm:$0xff]
    %v3251 = vld [vmem:[#allocation9 + $0x28] sm:$0xff]
    %v3252 = vld [vmem:[#allocation9 + $0x30] sm:$0xff]
    %v3253 = vld [vmem:[#allocation9 + $0x38] sm:$0xff]
    %v3254 = vld [vmem:[#allocation9 + $0x40] sm:$0xff]
    %v3255 = vld [vmem:[#allocation9 + $0x48] sm:$0xff]
    %v3256 = vmul.f32 %v3246, %v3246
    %v3257 = vmul.f32 %v3247, %v3247
    %v3258 = vmul.f32 %v3248, %v3248
    %v3259 = vmul.f32 %v3249, %v3249
    %v3260 = vmul.f32 %v3250, %v3250
    %v3261 = vmul.f32 %v3251, %v3251
    %v3262 = vmul.f32 %v3252, %v3252
    %v3263 = vmul.f32 %v3253, %v3253
    %v3264 = vmul.f32 %v3254, %v3254
    %v3265 = vmul.f32 %v3255, %v3255
    %3266 = vadd.xlane.f32.xlu0 %v3256
    %v3267 = vpop.xlane.xlu0 %3266
    %3268 = vadd.xlane.f32.xlu0 %v3257
    %v3269 = vpop.xlane.xlu0 %3268
    %3270 = vadd.xlane.f32.xlu0 %v3258
    %v3271 = vpop.xlane.xlu0 %3270
    %3272 = vadd.xlane.f32.xlu0 %v3259
    %v3273 = vpop.xlane.xlu0 %3272
    %3274 = vadd.xlane.f32.xlu0 %v3260
    %v3275 = vpop.xlane.xlu0 %3274
    %3276 = vadd.xlane.f32.xlu0 %v3261
    %v3277 = vpop.xlane.xlu0 %3276
    %3278 = vadd.xlane.f32.xlu0 %v3262
    %v3279 = vpop.xlane.xlu0 %3278
    %3280 = vadd.xlane.f32.xlu0 %v3263
    %v3281 = vpop.xlane.xlu0 %3280
    %3282 = vadd.xlane.f32.xlu0 %v3264
    %v3283 = vpop.xlane.xlu0 %3282
    %3284 = vadd.xlane.f32.xlu0 %v3265
    %v3285 = vpop.xlane.xlu0 %3284
    %v3286 = vrot.slane %v3256, 4
    %v3287 = vadd.f32 %v3256, %v3286
    %v3288 = vrot.slane %v3287, 2
    %v3289 = vadd.f32 %v3287, %v3288
    %v3290 = vrot.slane %v3289, 1
    %v3291 = vadd.f32 %v3289, %v3290
    %v3292 = vrot.slane %v3257, 4
    %v3293 = vadd.f32 %v3257, %v3292
    %v3294 = vrot.slane %v3293, 2
    %v3295 = vadd.f32 %v3293, %v3294
    %v3296 = vrot.slane %v3295, 1
    %v3297 = vadd.f32 %v3295, %v3296
    %v3298 = vrot.slane %v3258, 4
    %v3299 = vadd.f32 %v3258, %v3298
    %v3300 = vrot.slane %v3299, 2
    %v3301 = vadd.f32 %v3299, %v3300
    %v3302 = vrot.slane %v3301, 1
    %v3303 = vadd.f32 %v3301, %v3302
    %v3304 = vrot.slane %v3259, 4
    %v3305 = vadd.f32 %v3259, %v3304
    %v3306 = vrot.slane %v3305, 2
    %v3307 = vadd.f32 %v3305, %v3306
    %v3308 = vrot.slane %v3307, 1
    %v3309 = vadd.f32 %v3307, %v3308
    %v3310 = vrot.slane %v3260, 4
    %v3311 = vadd.f32 %v3260, %v3310
    %v3312 = vrot.slane %v3311, 2
    %v3313 = vadd.f32 %v3311, %v3312
    %v3314 = vrot.slane %v3313, 1
    %v3315 = vadd.f32 %v3313, %v3314
    %v3316 = vrot.slane %v3261, 4
    %v3317 = vadd.f32 %v3261, %v3316
    %v3318 = vrot.slane %v3317, 2
    %v3319 = vadd.f32 %v3317, %v3318
    %v3320 = vrot.slane %v3319, 1
    %v3321 = vadd.f32 %v3319, %v3320
    %v3322 = vrot.slane %v3262, 4
    %v3323 = vadd.f32 %v3262, %v3322
    %v3324 = vrot.slane %v3323, 2
    %v3325 = vadd.f32 %v3323, %v3324
    %v3326 = vrot.slane %v3325, 1
    %v3327 = vadd.f32 %v3325, %v3326
    %v3328 = vrot.slane %v3263, 4
    %v3329 = vadd.f32 %v3263, %v3328
    %v3330 = vrot.slane %v3329, 2
    %v3331 = vadd.f32 %v3329, %v3330
    %v3332 = vrot.slane %v3331, 1
    %v3333 = vadd.f32 %v3331, %v3332
    %v3334 = vrot.slane %v3264, 4
    %v3335 = vadd.f32 %v3264, %v3334
    %v3336 = vrot.slane %v3335, 2
    %v3337 = vadd.f32 %v3335, %v3336
    %v3338 = vrot.slane %v3337, 1
    %v3339 = vadd.f32 %v3337, %v3338
    %v3340 = vrot.slane %v3265, 4
    %v3341 = vadd.f32 %v3265, %v3340
    %v3342 = vrot.slane %v3341, 2
    %v3343 = vadd.f32 %v3341, %v3342
    %v3344 = vrot.slane %v3343, 1
    %v3345 = vadd.f32 %v3343, %v3344
    %v3346 = vrot.slane %v3267, 4
    %v3347 = vadd.f32 %v3267, %v3346
    %v3348 = vrot.slane %v3347, 2
    %v3349 = vadd.f32 %v3347, %v3348
    %v3350 = vrot.slane %v3349, 1
    %v3351 = vadd.f32 %v3349, %v3350
    %v3352 = vrot.slane %v3269, 4
    %v3353 = vadd.f32 %v3269, %v3352
    %v3354 = vrot.slane %v3353, 2
    %v3355 = vadd.f32 %v3353, %v3354
    %v3356 = vrot.slane %v3355, 1
    %v3357 = vadd.f32 %v3355, %v3356
    %v3358 = vrot.slane %v3271, 4
    %v3359 = vadd.f32 %v3271, %v3358
    %v3360 = vrot.slane %v3359, 2
    %v3361 = vadd.f32 %v3359, %v3360
    %v3362 = vrot.slane %v3361, 1
    %v3363 = vadd.f32 %v3361, %v3362
    %v3364 = vrot.slane %v3273, 4
    %v3365 = vadd.f32 %v3273, %v3364
    %v3366 = vrot.slane %v3365, 2
    %v3367 = vadd.f32 %v3365, %v3366
    %v3368 = vrot.slane %v3367, 1
    %v3369 = vadd.f32 %v3367, %v3368
    %v3370 = vrot.slane %v3275, 4
    %v3371 = vadd.f32 %v3275, %v3370
    %v3372 = vrot.slane %v3371, 2
    %v3373 = vadd.f32 %v3371, %v3372
    %v3374 = vrot.slane %v3373, 1
    %v3375 = vadd.f32 %v3373, %v3374
    %v3376 = vrot.slane %v3277, 4
    %v3377 = vadd.f32 %v3277, %v3376
    %v3378 = vrot.slane %v3377, 2
    %v3379 = vadd.f32 %v3377, %v3378
    %v3380 = vrot.slane %v3379, 1
    %v3381 = vadd.f32 %v3379, %v3380
    %v3382 = vrot.slane %v3279, 4
    %v3383 = vadd.f32 %v3279, %v3382
    %v3384 = vrot.slane %v3383, 2
    %v3385 = vadd.f32 %v3383, %v3384
    %v3386 = vrot.slane %v3385, 1
    %v3387 = vadd.f32 %v3385, %v3386
    %v3388 = vrot.slane %v3281, 4
    %v3389 = vadd.f32 %v3281, %v3388
    %v3390 = vrot.slane %v3389, 2
    %v3391 = vadd.f32 %v3389, %v3390
    %v3392 = vrot.slane %v3391, 1
    %v3393 = vadd.f32 %v3391, %v3392
    %v3394 = vrot.slane %v3283, 4
    %v3395 = vadd.f32 %v3283, %v3394
    %v3396 = vrot.slane %v3395, 2
    %v3397 = vadd.f32 %v3395, %v3396
    %v3398 = vrot.slane %v3397, 1
    %v3399 = vadd.f32 %v3397, %v3398
    %v3400 = vrot.slane %v3285, 4
    %v3401 = vadd.f32 %v3285, %v3400
    %v3402 = vrot.slane %v3401, 2
    %v3403 = vadd.f32 %v3401, %v3402
    %v3404 = vrot.slane %v3403, 1
    %v3405 = vadd.f32 %v3403, %v3404
    %v3406 = vrsqrt.pop %v3291
    %v3407 = vmul.f32 %v3291, %v3406
    %vm3408 = vcmp.eq.f32.partialorder %v3291, inf
    %v3409 = vsel %vm3408, %v3291, %v3407
    %vm3410 = vcmp.eq.f32.partialorder %v3291, 0.0
    %v3411 = vand.u32 %v3291, 2147483648
    %v3412 = vsel %vm3410, %v3411, %v3409
    %v3413 = vrsqrt.pop %v3297
    %v3414 = vmul.f32 %v3297, %v3413
    %vm3415 = vcmp.eq.f32.partialorder %v3297, inf
    %v3416 = vsel %vm3415, %v3297, %v3414
    %vm3417 = vcmp.eq.f32.partialorder %v3297, 0.0
    %v3418 = vand.u32 %v3297, 2147483648
    %v3419 = vsel %vm3417, %v3418, %v3416
    %v3420 = vrsqrt.pop %v3303
    %v3421 = vmul.f32 %v3303, %v3420
    %vm3422 = vcmp.eq.f32.partialorder %v3303, inf
    %v3423 = vsel %vm3422, %v3303, %v3421
    %vm3424 = vcmp.eq.f32.partialorder %v3303, 0.0
    %v3425 = vand.u32 %v3303, 2147483648
    %v3426 = vsel %vm3424, %v3425, %v3423
    %v3427 = vrsqrt.pop %v3309
    %v3428 = vmul.f32 %v3309, %v3427
    %vm3429 = vcmp.eq.f32.partialorder %v3309, inf
    %v3430 = vsel %vm3429, %v3309, %v3428
    %vm3431 = vcmp.eq.f32.partialorder %v3309, 0.0
    %v3432 = vand.u32 %v3309, 2147483648
    %v3433 = vsel %vm3431, %v3432, %v3430
    %v3434 = vrsqrt.pop %v3315
    %v3435 = vmul.f32 %v3315, %v3434
    %vm3436 = vcmp.eq.f32.partialorder %v3315, inf
    %v3437 = vsel %vm3436, %v3315, %v3435
    %vm3438 = vcmp.eq.f32.partialorder %v3315, 0.0
    %v3439 = vand.u32 %v3315, 2147483648
    %v3440 = vsel %vm3438, %v3439, %v3437
    %v3441 = vrsqrt.pop %v3321
    %v3442 = vmul.f32 %v3321, %v3441
    %vm3443 = vcmp.eq.f32.partialorder %v3321, inf
    %v3444 = vsel %vm3443, %v3321, %v3442
    %vm3445 = vcmp.eq.f32.partialorder %v3321, 0.0
    %v3446 = vand.u32 %v3321, 2147483648
    %v3447 = vsel %vm3445, %v3446, %v3444
    %v3448 = vrsqrt.pop %v3327
    %v3449 = vmul.f32 %v3327, %v3448
    %vm3450 = vcmp.eq.f32.partialorder %v3327, inf
    %v3451 = vsel %vm3450, %v3327, %v3449
    %vm3452 = vcmp.eq.f32.partialorder %v3327, 0.0
    %v3453 = vand.u32 %v3327, 2147483648
    %v3454 = vsel %vm3452, %v3453, %v3451
    %v3455 = vrsqrt.pop %v3333
    %v3456 = vmul.f32 %v3333, %v3455
    %vm3457 = vcmp.eq.f32.partialorder %v3333, inf
    %v3458 = vsel %vm3457, %v3333, %v3456
    %vm3459 = vcmp.eq.f32.partialorder %v3333, 0.0
    %v3460 = vand.u32 %v3333, 2147483648
    %v3461 = vsel %vm3459, %v3460, %v3458
    %v3462 = vrsqrt.pop %v3339
    %v3463 = vmul.f32 %v3339, %v3462
    %vm3464 = vcmp.eq.f32.partialorder %v3339, inf
    %v3465 = vsel %vm3464, %v3339, %v3463
    %vm3466 = vcmp.eq.f32.partialorder %v3339, 0.0
    %v3467 = vand.u32 %v3339, 2147483648
    %v3468 = vsel %vm3466, %v3467, %v3465
    %v3469 = vrsqrt.pop %v3345
    %v3470 = vmul.f32 %v3345, %v3469
    %vm3471 = vcmp.eq.f32.partialorder %v3345, inf
    %v3472 = vsel %vm3471, %v3345, %v3470
    %vm3473 = vcmp.eq.f32.partialorder %v3345, 0.0
    %v3474 = vand.u32 %v3345, 2147483648
    %v3475 = vsel %vm3473, %v3474, %v3472
    %v3476 = vadd.f32 %v3412, 1e-12
    %v3477 = vadd.f32 %v3419, 1e-12
    %v3478 = vadd.f32 %v3426, 1e-12
    %v3479 = vadd.f32 %v3433, 1e-12
    %v3480 = vadd.f32 %v3440, 1e-12
    %v3481 = vadd.f32 %v3447, 1e-12
    %v3482 = vadd.f32 %v3454, 1e-12
    %v3483 = vadd.f32 %v3461, 1e-12
    %v3484 = vadd.f32 %v3468, 1e-12
    %v3485 = vadd.f32 %v3475, 1e-12
    %v3486 = vrcp.pop %v3476
    %v3487 = vrcp.pop %v3477
    %v3488 = vrcp.pop %v3478
    %v3489 = vrcp.pop %v3479
    %v3490 = vrcp.pop %v3480
    %v3491 = vrcp.pop %v3481
    %v3492 = vrcp.pop %v3482
    %v3493 = vrcp.pop %v3483
    %v3494 = vrcp.pop %v3484
    %v3495 = vrcp.pop %v3485
    %v3496 = vmul.f32 %v3192, %v3486
    %v3497 = vmul.f32 %v3192, %v3487
    %v3498 = vmul.f32 %v3192, %v3488
    %v3499 = vmul.f32 %v3192, %v3489
    %v3500 = vmul.f32 %v3192, %v3490
    %v3501 = vmul.f32 %v3192, %v3491
    %v3502 = vmul.f32 %v3192, %v3492
    %v3503 = vmul.f32 %v3192, %v3493
    %v3504 = vmul.f32 %v3192, %v3494
    %v3505 = vmul.f32 %v3192, %v3495
    %v3506 = vadd.f32 %v3195, %v3496
    %v3507 = vadd.f32 %v3195, %v3497
    %v3508 = vadd.f32 %v3195, %v3498
    %v3509 = vadd.f32 %v3195, %v3499
    %v3510 = vadd.f32 %v3195, %v3500
    %v3511 = vadd.f32 %v3195, %v3501
    %v3512 = vadd.f32 %v3195, %v3502
    %v3513 = vadd.f32 %v3195, %v3503
    %v3514 = vadd.f32 %v3195, %v3504
    %v3515 = vadd.f32 %v3195, %v3505
    %v3516 = vrsqrt.pop %v3351
    %v3517 = vmul.f32 %v3351, %v3516
    %vm3518 = vcmp.eq.f32.partialorder %v3351, inf
    %v3519 = vsel %vm3518, %v3351, %v3517
    %vm3520 = vcmp.eq.f32.partialorder %v3351, 0.0
    %v3521 = vand.u32 %v3351, 2147483648
    %v3522 = vsel %vm3520, %v3521, %v3519
    %v3523 = vrsqrt.pop %v3357
    %v3524 = vmul.f32 %v3357, %v3523
    %vm3525 = vcmp.eq.f32.partialorder %v3357, inf
    %v3526 = vsel %vm3525, %v3357, %v3524
    %vm3527 = vcmp.eq.f32.partialorder %v3357, 0.0
    %v3528 = vand.u32 %v3357, 2147483648
    %v3529 = vsel %vm3527, %v3528, %v3526
    %v3530 = vrsqrt.pop %v3363
    %v3531 = vmul.f32 %v3363, %v3530
    %vm3532 = vcmp.eq.f32.partialorder %v3363, inf
    %v3533 = vsel %vm3532, %v3363, %v3531
    %vm3534 = vcmp.eq.f32.partialorder %v3363, 0.0
    %v3535 = vand.u32 %v3363, 2147483648
    %v3536 = vsel %vm3534, %v3535, %v3533
    %v3537 = vrsqrt.pop %v3369
    %v3538 = vmul.f32 %v3369, %v3537
    %vm3539 = vcmp.eq.f32.partialorder %v3369, inf
    %v3540 = vsel %vm3539, %v3369, %v3538
    %vm3541 = vcmp.eq.f32.partialorder %v3369, 0.0
    %v3542 = vand.u32 %v3369, 2147483648
    %v3543 = vsel %vm3541, %v3542, %v3540
    %v3544 = vrsqrt.pop %v3375
    %v3545 = vmul.f32 %v3375, %v3544
    %vm3546 = vcmp.eq.f32.partialorder %v3375, inf
    %v3547 = vsel %vm3546, %v3375, %v3545
    %vm3548 = vcmp.eq.f32.partialorder %v3375, 0.0
    %v3549 = vand.u32 %v3375, 2147483648
    %v3550 = vsel %vm3548, %v3549, %v3547
    %v3551 = vrsqrt.pop %v3381
    %v3552 = vmul.f32 %v3381, %v3551
    %vm3553 = vcmp.eq.f32.partialorder %v3381, inf
    %v3554 = vsel %vm3553, %v3381, %v3552
    %vm3555 = vcmp.eq.f32.partialorder %v3381, 0.0
    %v3556 = vand.u32 %v3381, 2147483648
    %v3557 = vsel %vm3555, %v3556, %v3554
    %v3558 = vrsqrt.pop %v3387
    %v3559 = vmul.f32 %v3387, %v3558
    %vm3560 = vcmp.eq.f32.partialorder %v3387, inf
    %v3561 = vsel %vm3560, %v3387, %v3559
    %vm3562 = vcmp.eq.f32.partialorder %v3387, 0.0
    %v3563 = vand.u32 %v3387, 2147483648
    %v3564 = vsel %vm3562, %v3563, %v3561
    %v3565 = vrsqrt.pop %v3393
    %v3566 = vmul.f32 %v3393, %v3565
    %vm3567 = vcmp.eq.f32.partialorder %v3393, inf
    %v3568 = vsel %vm3567, %v3393, %v3566
    %vm3569 = vcmp.eq.f32.partialorder %v3393, 0.0
    %v3570 = vand.u32 %v3393, 2147483648
    %v3571 = vsel %vm3569, %v3570, %v3568
    %v3572 = vrsqrt.pop %v3399
    %v3573 = vmul.f32 %v3399, %v3572
    %vm3574 = vcmp.eq.f32.partialorder %v3399, inf
    %v3575 = vsel %vm3574, %v3399, %v3573
    %vm3576 = vcmp.eq.f32.partialorder %v3399, 0.0
    %v3577 = vand.u32 %v3399, 2147483648
    %v3578 = vsel %vm3576, %v3577, %v3575
    %v3579 = vrsqrt.pop %v3405
    %v3580 = vmul.f32 %v3405, %v3579
    %vm3581 = vcmp.eq.f32.partialorder %v3405, inf
    %v3582 = vsel %vm3581, %v3405, %v3580
    %vm3583 = vcmp.eq.f32.partialorder %v3405, 0.0
    %v3584 = vand.u32 %v3405, 2147483648
    %v3585 = vsel %vm3583, %v3584, %v3582
    %v3586 = vadd.f32 %v3522, 1e-12
    %v3587 = vadd.f32 %v3529, 1e-12
    %v3588 = vadd.f32 %v3536, 1e-12
    %v3589 = vadd.f32 %v3543, 1e-12
    %v3590 = vadd.f32 %v3550, 1e-12
    %v3591 = vadd.f32 %v3557, 1e-12
    %v3592 = vadd.f32 %v3564, 1e-12
    %v3593 = vadd.f32 %v3571, 1e-12
    %v3594 = vadd.f32 %v3578, 1e-12
    %v3595 = vadd.f32 %v3585, 1e-12
    %v3596 = vrcp.pop %v3586
    %v3597 = vrcp.pop %v3587
    %v3598 = vrcp.pop %v3588
    %v3599 = vrcp.pop %v3589
    %v3600 = vrcp.pop %v3590
    %v3601 = vrcp.pop %v3591
    %v3602 = vrcp.pop %v3592
    %v3603 = vrcp.pop %v3593
    %v3604 = vrcp.pop %v3594
    %v3605 = vrcp.pop %v3595
    %v3606 = vmul.f32 %v3216, %v3596
    %v3607 = vmul.f32 %v3216, %v3597
    %v3608 = vmul.f32 %v3216, %v3598
    %v3609 = vmul.f32 %v3216, %v3599
    %v3610 = vmul.f32 %v3216, %v3600
    %v3611 = vmul.f32 %v3216, %v3601
    %v3612 = vmul.f32 %v3216, %v3602
    %v3613 = vmul.f32 %v3216, %v3603
    %v3614 = vmul.f32 %v3216, %v3604
    %v3615 = vmul.f32 %v3216, %v3605
    %v3616 = vadd.f32 %v3506, %v3606
    %v3617 = vadd.f32 %v3507, %v3607
    %v3618 = vadd.f32 %v3508, %v3608
    %v3619 = vadd.f32 %v3509, %v3609
    %v3620 = vadd.f32 %v3510, %v3610
    %v3621 = vadd.f32 %v3511, %v3611
    %v3622 = vadd.f32 %v3512, %v3612
    %v3623 = vadd.f32 %v3513, %v3613
    %v3624 = vadd.f32 %v3514, %v3614
    %v3625 = vadd.f32 %v3515, %v3615
    %v3626 = vrsqrt.pop %v3267
    %v3627 = vmul.f32 %v3267, %v3626
    %vm3628 = vcmp.eq.f32.partialorder %v3267, inf
    %v3629 = vsel %vm3628, %v3267, %v3627
    %vm3630 = vcmp.eq.f32.partialorder %v3267, 0.0
    %v3631 = vand.u32 %v3267, 2147483648
    %v3632 = vsel %vm3630, %v3631, %v3629
    %v3633 = vrsqrt.pop %v3269
    %v3634 = vmul.f32 %v3269, %v3633
    %vm3635 = vcmp.eq.f32.partialorder %v3269, inf
    %v3636 = vsel %vm3635, %v3269, %v3634
    %vm3637 = vcmp.eq.f32.partialorder %v3269, 0.0
    %v3638 = vand.u32 %v3269, 2147483648
    %v3639 = vsel %vm3637, %v3638, %v3636
    %v3640 = vrsqrt.pop %v3271
    %v3641 = vmul.f32 %v3271, %v3640
    %vm3642 = vcmp.eq.f32.partialorder %v3271, inf
    %v3643 = vsel %vm3642, %v3271, %v3641
    %vm3644 = vcmp.eq.f32.partialorder %v3271, 0.0
    %v3645 = vand.u32 %v3271, 2147483648
    %v3646 = vsel %vm3644, %v3645, %v3643
    %v3647 = vrsqrt.pop %v3273
    %v3648 = vmul.f32 %v3273, %v3647
    %vm3649 = vcmp.eq.f32.partialorder %v3273, inf
    %v3650 = vsel %vm3649, %v3273, %v3648
    %vm3651 = vcmp.eq.f32.partialorder %v3273, 0.0
    %v3652 = vand.u32 %v3273, 2147483648
    %v3653 = vsel %vm3651, %v3652, %v3650
    %v3654 = vrsqrt.pop %v3275
    %v3655 = vmul.f32 %v3275, %v3654
    %vm3656 = vcmp.eq.f32.partialorder %v3275, inf
    %v3657 = vsel %vm3656, %v3275, %v3655
    %vm3658 = vcmp.eq.f32.partialorder %v3275, 0.0
    %v3659 = vand.u32 %v3275, 2147483648
    %v3660 = vsel %vm3658, %v3659, %v3657
    %v3661 = vrsqrt.pop %v3277
    %v3662 = vmul.f32 %v3277, %v3661
    %vm3663 = vcmp.eq.f32.partialorder %v3277, inf
    %v3664 = vsel %vm3663, %v3277, %v3662
    %vm3665 = vcmp.eq.f32.partialorder %v3277, 0.0
    %v3666 = vand.u32 %v3277, 2147483648
    %v3667 = vsel %vm3665, %v3666, %v3664
    %v3668 = vrsqrt.pop %v3279
    %v3669 = vmul.f32 %v3279, %v3668
    %vm3670 = vcmp.eq.f32.partialorder %v3279, inf
    %v3671 = vsel %vm3670, %v3279, %v3669
    %vm3672 = vcmp.eq.f32.partialorder %v3279, 0.0
    %v3673 = vand.u32 %v3279, 2147483648
    %v3674 = vsel %vm3672, %v3673, %v3671
    %v3675 = vrsqrt.pop %v3281
    %v3676 = vmul.f32 %v3281, %v3675
    %vm3677 = vcmp.eq.f32.partialorder %v3281, inf
    %v3678 = vsel %vm3677, %v3281, %v3676
    %vm3679 = vcmp.eq.f32.partialorder %v3281, 0.0
    %v3680 = vand.u32 %v3281, 2147483648
    %v3681 = vsel %vm3679, %v3680, %v3678
    %v3682 = vrsqrt.pop %v3283
    %v3683 = vmul.f32 %v3283, %v3682
    %vm3684 = vcmp.eq.f32.partialorder %v3283, inf
    %v3685 = vsel %vm3684, %v3283, %v3683
    %vm3686 = vcmp.eq.f32.partialorder %v3283, 0.0
    %v3687 = vand.u32 %v3283, 2147483648
    %v3688 = vsel %vm3686, %v3687, %v3685
    %v3689 = vrsqrt.pop %v3285
    %v3690 = vmul.f32 %v3285, %v3689
    %vm3691 = vcmp.eq.f32.partialorder %v3285, inf
    %v3692 = vsel %vm3691, %v3285, %v3690
    %vm3693 = vcmp.eq.f32.partialorder %v3285, 0.0
    %v3694 = vand.u32 %v3285, 2147483648
    %v3695 = vsel %vm3693, %v3694, %v3692
    %v3696 = vadd.f32 %v3632, 1e-12
    %v3697 = vadd.f32 %v3639, 1e-12
    %v3698 = vadd.f32 %v3646, 1e-12
    %v3699 = vadd.f32 %v3653, 1e-12
    %v3700 = vadd.f32 %v3660, 1e-12
    %v3701 = vadd.f32 %v3667, 1e-12
    %v3702 = vadd.f32 %v3674, 1e-12
    %v3703 = vadd.f32 %v3681, 1e-12
    %v3704 = vadd.f32 %v3688, 1e-12
    %v3705 = vadd.f32 %v3695, 1e-12
    %v3706 = vrcp.pop %v3696
    %v3707 = vrcp.pop %v3697
    %v3708 = vrcp.pop %v3698
    %v3709 = vrcp.pop %v3699
    %v3710 = vrcp.pop %v3700
    %v3711 = vrcp.pop %v3701
    %v3712 = vrcp.pop %v3702
    %v3713 = vrcp.pop %v3703
    %v3714 = vrcp.pop %v3704
    %v3715 = vrcp.pop %v3705
    %v3716 = vmul.f32 %v3239, %v3706
    %v3717 = vmul.f32 %v3239, %v3707
    %v3718 = vmul.f32 %v3239, %v3708
    %v3719 = vmul.f32 %v3239, %v3709
    %v3720 = vmul.f32 %v3239, %v3710
    %v3721 = vmul.f32 %v3239, %v3711
    %v3722 = vmul.f32 %v3239, %v3712
    %v3723 = vmul.f32 %v3239, %v3713
    %v3724 = vmul.f32 %v3239, %v3714
    %v3725 = vmul.f32 %v3239, %v3715
    %v3726 = vadd.f32 %v3616, %v3716
    %v3727 = vadd.f32 %v3617, %v3717
    %v3728 = vadd.f32 %v3618, %v3718
    %v3729 = vadd.f32 %v3619, %v3719
    %v3730 = vadd.f32 %v3620, %v3720
    %v3731 = vadd.f32 %v3621, %v3721
    %v3732 = vadd.f32 %v3622, %v3722
    %v3733 = vadd.f32 %v3623, %v3723
    %v3734 = vadd.f32 %v3624, %v3724
    %v3735 = vadd.f32 %v3625, %v3725
    %v3736 = vmul.f32 %v3246, %v3726
    %v3737 = vmul.f32 %v3247, %v3727
    %v3738 = vmul.f32 %v3248, %v3728
    %v3739 = vmul.f32 %v3249, %v3729
    %v3740 = vmul.f32 %v3250, %v3730
    %v3741 = vmul.f32 %v3251, %v3731
    %v3742 = vmul.f32 %v3252, %v3732
    %v3743 = vmul.f32 %v3253, %v3733
    %v3744 = vmul.f32 %v3254, %v3734
    %v3745 = vmul.f32 %v3255, %v3735
    %v3746 = vcombine.high %v3244, 0.0
    %v3748 = vunpack.c.l.s4 1983009808
    %v3749 = vunpack.c.0.s8 %v3748
    %v3750 = vlaneseq
    %v3751 = vshrl.u32 %v3750, 7
    %v3752 = vsub.s32 %v3749, %v3751
    %v3753 = vrot.slane %v3244, %v3752
    %v3755 = vunpack.c.l.s4 1983009808
    %v3756 = vunpack.c.0.s8 %v3755
    %v3757 = vlaneseq
    %v3758 = vshrl.u32 %v3757, 7
    %v3759 = vsub.s32 %v3756, %v3758
    %v3760 = vrot.slane %v3746, %v3759
    %v3761 = vcombine.high %v3245, 0.0
    %v3763 = vunpack.c.l.s4 1983009808
    %v3764 = vunpack.c.0.s8 %v3763
    %v3765 = vlaneseq
    %v3766 = vshrl.u32 %v3765, 7
    %v3767 = vsub.s32 %v3764, %v3766
    %v3768 = vrot.slane %v3245, %v3767
    %v3770 = vunpack.c.l.s4 1983009808
    %v3771 = vunpack.c.0.s8 %v3770
    %v3772 = vlaneseq
    %v3773 = vshrl.u32 %v3772, 7
    %v3774 = vsub.s32 %v3771, %v3773
    %v3775 = vrot.slane %v3761, %v3774
    %v3776 = vcombine.low %v3753, %v3768
    %v3777 = vcombine.high %v3753, %v3768
    %v3779 = vunpack.c.l.s4 1934713408
    %v3780 = vunpack.c.0.s8 %v3779
    %v3781 = vlaneseq
    %v3782 = vshrl.u32 %v3781, 7
    %v3783 = vsub.s32 %v3780, %v3782
    %v3784 = vrot.slane %v3776, %v3783
    %v3786 = vunpack.c.l.s4 1934713408
    %v3787 = vunpack.c.0.s8 %v3786
    %v3788 = vlaneseq
    %v3789 = vshrl.u32 %v3788, 7
    %v3790 = vsub.s32 %v3787, %v3789
    %v3791 = vrot.slane %v3777, %v3790
    %v3792 = vcombine.low %v3760, %v3775
    %v3793 = vcombine.high %v3760, %v3775
    %v3795 = vunpack.c.l.s4 1934713408
    %v3796 = vunpack.c.0.s8 %v3795
    %v3797 = vlaneseq
    %v3798 = vshrl.u32 %v3797, 7
    %v3799 = vsub.s32 %v3796, %v3798
    %v3800 = vrot.slane %v3792, %v3799
    %v3802 = vunpack.c.l.s4 1934713408
    %v3803 = vunpack.c.0.s8 %v3802
    %v3804 = vlaneseq
    %v3805 = vshrl.u32 %v3804, 7
    %v3806 = vsub.s32 %v3803, %v3805
    %v3807 = vrot.slane %v3793, %v3806
    %v3808 = vcombine.high %v3784, 0.0
    %v3809 = vcombine.high %v3791, 0.0
    %v3810 = vcombine.high %v3800, 0.0
    %v3811 = vcombine.high %v3807, 0.0
    %v3812 = vcombine.low %v3736, %v3738
    %v3813 = vcombine.high %v3736, %v3738
    %v3815 = vunpack.c.l.s4 1983009808
    %v3816 = vunpack.c.0.s8 %v3815
    %v3817 = vlaneseq
    %v3818 = vshrl.u32 %v3817, 7
    %v3819 = vsub.s32 %v3816, %v3818
    %v3820 = vrot.slane %v3812, %v3819
    %v3822 = vunpack.c.l.s4 1983009808
    %v3823 = vunpack.c.0.s8 %v3822
    %v3824 = vlaneseq
    %v3825 = vshrl.u32 %v3824, 7
    %v3826 = vsub.s32 %v3823, %v3825
    %v3827 = vrot.slane %v3813, %v3826
    %v3828 = vcombine.low %v3737, %v3739
    %v3829 = vcombine.high %v3737, %v3739
    %v3831 = vunpack.c.l.s4 1983009808
    %v3832 = vunpack.c.0.s8 %v3831
    %v3833 = vlaneseq
    %v3834 = vshrl.u32 %v3833, 7
    %v3835 = vsub.s32 %v3832, %v3834
    %v3836 = vrot.slane %v3828, %v3835
    %v3838 = vunpack.c.l.s4 1983009808
    %v3839 = vunpack.c.0.s8 %v3838
    %v3840 = vlaneseq
    %v3841 = vshrl.u32 %v3840, 7
    %v3842 = vsub.s32 %v3839, %v3841
    %v3843 = vrot.slane %v3829, %v3842
    %v3844 = vcombine.low %v3740, %v3742
    %v3845 = vcombine.high %v3740, %v3742
    %v3847 = vunpack.c.l.s4 1983009808
    %v3848 = vunpack.c.0.s8 %v3847
    %v3849 = vlaneseq
    %v3850 = vshrl.u32 %v3849, 7
    %v3851 = vsub.s32 %v3848, %v3850
    %v3852 = vrot.slane %v3844, %v3851
    %v3854 = vunpack.c.l.s4 1983009808
    %v3855 = vunpack.c.0.s8 %v3854
    %v3856 = vlaneseq
    %v3857 = vshrl.u32 %v3856, 7
    %v3858 = vsub.s32 %v3855, %v3857
    %v3859 = vrot.slane %v3845, %v3858
    %v3860 = vcombine.low %v3741, %v3743
    %v3861 = vcombine.high %v3741, %v3743
    %v3863 = vunpack.c.l.s4 1983009808
    %v3864 = vunpack.c.0.s8 %v3863
    %v3865 = vlaneseq
    %v3866 = vshrl.u32 %v3865, 7
    %v3867 = vsub.s32 %v3864, %v3866
    %v3868 = vrot.slane %v3860, %v3867
    %v3870 = vunpack.c.l.s4 1983009808
    %v3871 = vunpack.c.0.s8 %v3870
    %v3872 = vlaneseq
    %v3873 = vshrl.u32 %v3872, 7
    %v3874 = vsub.s32 %v3871, %v3873
    %v3875 = vrot.slane %v3861, %v3874
    %v3876 = vcombine.low %v3820, %v3836
    %v3877 = vcombine.high %v3820, %v3836
    %v3879 = vunpack.c.l.s4 1934713408
    %v3880 = vunpack.c.0.s8 %v3879
    %v3881 = vlaneseq
    %v3882 = vshrl.u32 %v3881, 7
    %v3883 = vsub.s32 %v3880, %v3882
    %v3884 = vrot.slane %v3876, %v3883
    %v3886 = vunpack.c.l.s4 1934713408
    %v3887 = vunpack.c.0.s8 %v3886
    %v3888 = vlaneseq
    %v3889 = vshrl.u32 %v3888, 7
    %v3890 = vsub.s32 %v3887, %v3889
    %v3891 = vrot.slane %v3877, %v3890
    %v3892 = vcombine.low %v3827, %v3843
    %v3893 = vcombine.high %v3827, %v3843
    %v3895 = vunpack.c.l.s4 1934713408
    %v3896 = vunpack.c.0.s8 %v3895
    %v3897 = vlaneseq
    %v3898 = vshrl.u32 %v3897, 7
    %v3899 = vsub.s32 %v3896, %v3898
    %v3900 = vrot.slane %v3892, %v3899
    %v3902 = vunpack.c.l.s4 1934713408
    %v3903 = vunpack.c.0.s8 %v3902
    %v3904 = vlaneseq
    %v3905 = vshrl.u32 %v3904, 7
    %v3906 = vsub.s32 %v3903, %v3905
    %v3907 = vrot.slane %v3893, %v3906
    %v3908 = vcombine.low %v3852, %v3868
    %v3909 = vcombine.high %v3852, %v3868
    %v3911 = vunpack.c.l.s4 1934713408
    %v3912 = vunpack.c.0.s8 %v3911
    %v3913 = vlaneseq
    %v3914 = vshrl.u32 %v3913, 7
    %v3915 = vsub.s32 %v3912, %v3914
    %v3916 = vrot.slane %v3908, %v3915
    %v3918 = vunpack.c.l.s4 1934713408
    %v3919 = vunpack.c.0.s8 %v3918
    %v3920 = vlaneseq
    %v3921 = vshrl.u32 %v3920, 7
    %v3922 = vsub.s32 %v3919, %v3921
    %v3923 = vrot.slane %v3909, %v3922
    %v3924 = vcombine.low %v3859, %v3875
    %v3925 = vcombine.high %v3859, %v3875
    %v3927 = vunpack.c.l.s4 1934713408
    %v3928 = vunpack.c.0.s8 %v3927
    %v3929 = vlaneseq
    %v3930 = vshrl.u32 %v3929, 7
    %v3931 = vsub.s32 %v3928, %v3930
    %v3932 = vrot.slane %v3924, %v3931
    %v3934 = vunpack.c.l.s4 1934713408
    %v3935 = vunpack.c.0.s8 %v3934
    %v3936 = vlaneseq
    %v3937 = vshrl.u32 %v3936, 7
    %v3938 = vsub.s32 %v3935, %v3937
    %v3939 = vrot.slane %v3925, %v3938
    %v3940 = vcombine.low %v3884, %v3916
    %v3941 = vcombine.high %v3884, %v3916
    %v3942 = vcombine.low %v3891, %v3923
    %v3943 = vcombine.high %v3891, %v3923
    %v3944 = vcombine.low %v3900, %v3932
    %v3945 = vcombine.high %v3900, %v3932
    %v3946 = vcombine.low %v3907, %v3939
    %v3947 = vcombine.high %v3907, %v3939
    %v3948 = vcombine.high %v3744, 0.0
    %v3950 = vunpack.c.l.s4 1983009808
    %v3951 = vunpack.c.0.s8 %v3950
    %v3952 = vlaneseq
    %v3953 = vshrl.u32 %v3952, 7
    %v3954 = vsub.s32 %v3951, %v3953
    %v3955 = vrot.slane %v3744, %v3954
    %v3957 = vunpack.c.l.s4 1983009808
    %v3958 = vunpack.c.0.s8 %v3957
    %v3959 = vlaneseq
    %v3960 = vshrl.u32 %v3959, 7
    %v3961 = vsub.s32 %v3958, %v3960
    %v3962 = vrot.slane %v3948, %v3961
    %v3963 = vcombine.high %v3745, 0.0
    %v3965 = vunpack.c.l.s4 1983009808
    %v3966 = vunpack.c.0.s8 %v3965
    %v3967 = vlaneseq
    %v3968 = vshrl.u32 %v3967, 7
    %v3969 = vsub.s32 %v3966, %v3968
    %v3970 = vrot.slane %v3745, %v3969
    %v3972 = vunpack.c.l.s4 1983009808
    %v3973 = vunpack.c.0.s8 %v3972
    %v3974 = vlaneseq
    %v3975 = vshrl.u32 %v3974, 7
    %v3976 = vsub.s32 %v3973, %v3975
    %v3977 = vrot.slane %v3963, %v3976
    %v3978 = vcombine.low %v3955, %v3970
    %v3979 = vcombine.high %v3955, %v3970
    %v3981 = vunpack.c.l.s4 1934713408
    %v3982 = vunpack.c.0.s8 %v3981
    %v3983 = vlaneseq
    %v3984 = vshrl.u32 %v3983, 7
    %v3985 = vsub.s32 %v3982, %v3984
    %v3986 = vrot.slane %v3978, %v3985
    %v3988 = vunpack.c.l.s4 1934713408
    %v3989 = vunpack.c.0.s8 %v3988
    %v3990 = vlaneseq
    %v3991 = vshrl.u32 %v3990, 7
    %v3992 = vsub.s32 %v3989, %v3991
    %v3993 = vrot.slane %v3979, %v3992
    %v3994 = vcombine.low %v3962, %v3977
    %v3995 = vcombine.high %v3962, %v3977
    %v3997 = vunpack.c.l.s4 1934713408
    %v3998 = vunpack.c.0.s8 %v3997
    %v3999 = vlaneseq
    %v4000 = vshrl.u32 %v3999, 7
    %v4001 = vsub.s32 %v3998, %v4000
    %v4002 = vrot.slane %v3994, %v4001
    %v4004 = vunpack.c.l.s4 1934713408
    %v4005 = vunpack.c.0.s8 %v4004
    %v4006 = vlaneseq
    %v4007 = vshrl.u32 %v4006, 7
    %v4008 = vsub.s32 %v4005, %v4007
    %v4009 = vrot.slane %v3995, %v4008
    %v4010 = vcombine.high %v3986, 0.0
    %v4011 = vcombine.high %v3993, 0.0
    %v4012 = vcombine.high %v4002, 0.0
    %v4013 = vcombine.high %v4009, 0.0
    %v4022 = vcombine.low %v3784, %v3808
    %v4023 = vcombine.low %v3791, %v3809
    %v4025 = vunpack.c.l.s4 1983009808
    %v4026 = vunpack.c.0.s8 %v4025
    %v4027 = vlaneseq
    %v4028 = vshrl.u32 %v4027, 7
    %v4029 = vsub.s32 %v4026, %v4028
    %v4030 = vrot.slane %v4022, %v4029
    %v4032 = vunpack.c.l.s4 1983009808
    %v4033 = vunpack.c.0.s8 %v4032
    %v4034 = vlaneseq
    %v4035 = vshrl.u32 %v4034, 7
    %v4036 = vsub.s32 %v4033, %v4035
    %v4037 = vrot.slane %v4023, %v4036
    %v4038 = vcombine.low %v4030, %v4037
    %v4039 = vcombine.low %v3800, %v3810
    %v4040 = vcombine.low %v3807, %v3811
    %v4042 = vunpack.c.l.s4 1983009808
    %v4043 = vunpack.c.0.s8 %v4042
    %v4044 = vlaneseq
    %v4045 = vshrl.u32 %v4044, 7
    %v4046 = vsub.s32 %v4043, %v4045
    %v4047 = vrot.slane %v4039, %v4046
    %v4049 = vunpack.c.l.s4 1983009808
    %v4050 = vunpack.c.0.s8 %v4049
    %v4051 = vlaneseq
    %v4052 = vshrl.u32 %v4051, 7
    %v4053 = vsub.s32 %v4050, %v4052
    %v4054 = vrot.slane %v4040, %v4053
    %v4055 = vcombine.low %v4047, %v4054
    %v4074 = vcombine.low %v3940, %v3941
    %v4075 = vcombine.high %v3940, %v3941
    %v4076 = vcombine.low %v3942, %v3943
    %v4077 = vcombine.high %v3942, %v3943
    %v4079 = vunpack.c.l.s4 1983009808
    %v4080 = vunpack.c.0.s8 %v4079
    %v4081 = vlaneseq
    %v4082 = vshrl.u32 %v4081, 7
    %v4083 = vsub.s32 %v4080, %v4082
    %v4084 = vrot.slane %v4074, %v4083
    %v4086 = vunpack.c.l.s4 1983009808
    %v4087 = vunpack.c.0.s8 %v4086
    %v4088 = vlaneseq
    %v4089 = vshrl.u32 %v4088, 7
    %v4090 = vsub.s32 %v4087, %v4089
    %v4091 = vrot.slane %v4075, %v4090
    %v4093 = vunpack.c.l.s4 1983009808
    %v4094 = vunpack.c.0.s8 %v4093
    %v4095 = vlaneseq
    %v4096 = vshrl.u32 %v4095, 7
    %v4097 = vsub.s32 %v4094, %v4096
    %v4098 = vrot.slane %v4076, %v4097
    %v4100 = vunpack.c.l.s4 1983009808
    %v4101 = vunpack.c.0.s8 %v4100
    %v4102 = vlaneseq
    %v4103 = vshrl.u32 %v4102, 7
    %v4104 = vsub.s32 %v4101, %v4103
    %v4105 = vrot.slane %v4077, %v4104
    %v4106 = vcombine.low %v4084, %v4098
    %v4107 = vcombine.high %v4084, %v4098
    %v4108 = vcombine.low %v4091, %v4105
    %v4109 = vcombine.high %v4091, %v4105
    %v4110 = vcombine.low %v3944, %v3945
    %v4111 = vcombine.high %v3944, %v3945
    %v4112 = vcombine.low %v3946, %v3947
    %v4113 = vcombine.high %v3946, %v3947
    %v4115 = vunpack.c.l.s4 1983009808
    %v4116 = vunpack.c.0.s8 %v4115
    %v4117 = vlaneseq
    %v4118 = vshrl.u32 %v4117, 7
    %v4119 = vsub.s32 %v4116, %v4118
    %v4120 = vrot.slane %v4110, %v4119
    %v4122 = vunpack.c.l.s4 1983009808
    %v4123 = vunpack.c.0.s8 %v4122
    %v4124 = vlaneseq
    %v4125 = vshrl.u32 %v4124, 7
    %v4126 = vsub.s32 %v4123, %v4125
    %v4127 = vrot.slane %v4111, %v4126
    %v4129 = vunpack.c.l.s4 1983009808
    %v4130 = vunpack.c.0.s8 %v4129
    %v4131 = vlaneseq
    %v4132 = vshrl.u32 %v4131, 7
    %v4133 = vsub.s32 %v4130, %v4132
    %v4134 = vrot.slane %v4112, %v4133
    %v4136 = vunpack.c.l.s4 1983009808
    %v4137 = vunpack.c.0.s8 %v4136
    %v4138 = vlaneseq
    %v4139 = vshrl.u32 %v4138, 7
    %v4140 = vsub.s32 %v4137, %v4139
    %v4141 = vrot.slane %v4113, %v4140
    %v4142 = vcombine.low %v4120, %v4134
    %v4143 = vcombine.high %v4120, %v4134
    %v4144 = vcombine.low %v4127, %v4141
    %v4145 = vcombine.high %v4127, %v4141
    %v4146 = vcombine.low %v3986, %v4010
    %v4147 = vcombine.low %v3993, %v4011
    %v4149 = vunpack.c.l.s4 1983009808
    %v4150 = vunpack.c.0.s8 %v4149
    %v4151 = vlaneseq
    %v4152 = vshrl.u32 %v4151, 7
    %v4153 = vsub.s32 %v4150, %v4152
    %v4154 = vrot.slane %v4146, %v4153
    %v4156 = vunpack.c.l.s4 1983009808
    %v4157 = vunpack.c.0.s8 %v4156
    %v4158 = vlaneseq
    %v4159 = vshrl.u32 %v4158, 7
    %v4160 = vsub.s32 %v4157, %v4159
    %v4161 = vrot.slane %v4147, %v4160
    %v4162 = vcombine.low %v4154, %v4161
    %v4163 = vcombine.low %v4002, %v4012
    %v4164 = vcombine.low %v4009, %v4013
    %v4166 = vunpack.c.l.s4 1983009808
    %v4167 = vunpack.c.0.s8 %v4166
    %v4168 = vlaneseq
    %v4169 = vshrl.u32 %v4168, 7
    %v4170 = vsub.s32 %v4167, %v4169
    %v4171 = vrot.slane %v4163, %v4170
    %v4173 = vunpack.c.l.s4 1983009808
    %v4174 = vunpack.c.0.s8 %v4173
    %v4175 = vlaneseq
    %v4176 = vshrl.u32 %v4175, 7
    %v4177 = vsub.s32 %v4174, %v4176
    %v4178 = vrot.slane %v4164, %v4177
    %v4179 = vcombine.low %v4171, %v4178
    %v4190 = vsub.f32 %v4038, %v4106
    %v4191 = vsub.f32 %v4055, %v4142
    %v4192 = vsub.f32 %v4038, %v4107
    %v4193 = vsub.f32 %v4055, %v4143
    %v4194 = vsub.f32 %v4038, %v4108
    %v4195 = vsub.f32 %v4055, %v4144
    %v4196 = vsub.f32 %v4038, %v4109
    %v4197 = vsub.f32 %v4055, %v4145
    %v4198 = vsub.f32 %v4038, %v4162
    %v4199 = vsub.f32 %v4055, %v4179
    %v4200 = vmul.f32 %v4038, %v4106
    %v4201 = vmul.f32 %v4055, %v4142
    %v4202 = vmul.f32 %v4038, %v4107
    %v4203 = vmul.f32 %v4055, %v4143
    %v4204 = vmul.f32 %v4038, %v4108
    %v4205 = vmul.f32 %v4055, %v4144
    %v4206 = vmul.f32 %v4038, %v4109
    %v4207 = vmul.f32 %v4055, %v4145
    %v4208 = vmul.f32 %v4038, %v4162
    %v4209 = vmul.f32 %v4055, %v4179
    %v4220 = vcombine.low %v4200, %v4202
    %v4221 = vcombine.high %v4200, %v4202
    %v4222 = vcombine.low %v4204, %v4206
    %v4223 = vcombine.high %v4204, %v4206
    %v4225 = vunpack.c.l.s4 1983009808
    %v4226 = vunpack.c.0.s8 %v4225
    %v4227 = vlaneseq
    %v4228 = vshrl.u32 %v4227, 7
    %v4229 = vsub.s32 %v4226, %v4228
    %v4230 = vrot.slane %v4220, %v4229
    %v4232 = vunpack.c.l.s4 1983009808
    %v4233 = vunpack.c.0.s8 %v4232
    %v4234 = vlaneseq
    %v4235 = vshrl.u32 %v4234, 7
    %v4236 = vsub.s32 %v4233, %v4235
    %v4237 = vrot.slane %v4221, %v4236
    %v4239 = vunpack.c.l.s4 1983009808
    %v4240 = vunpack.c.0.s8 %v4239
    %v4241 = vlaneseq
    %v4242 = vshrl.u32 %v4241, 7
    %v4243 = vsub.s32 %v4240, %v4242
    %v4244 = vrot.slane %v4222, %v4243
    %v4246 = vunpack.c.l.s4 1983009808
    %v4247 = vunpack.c.0.s8 %v4246
    %v4248 = vlaneseq
    %v4249 = vshrl.u32 %v4248, 7
    %v4250 = vsub.s32 %v4247, %v4249
    %v4251 = vrot.slane %v4223, %v4250
    %v4252 = vcombine.low %v4230, %v4244
    %v4253 = vcombine.high %v4230, %v4244
    %v4254 = vcombine.low %v4237, %v4251
    %v4255 = vcombine.high %v4237, %v4251
    %v4256 = vcombine.low %v4201, %v4203
    %v4257 = vcombine.high %v4201, %v4203
    %v4258 = vcombine.low %v4205, %v4207
    %v4259 = vcombine.high %v4205, %v4207
    %v4261 = vunpack.c.l.s4 1983009808
    %v4262 = vunpack.c.0.s8 %v4261
    %v4263 = vlaneseq
    %v4264 = vshrl.u32 %v4263, 7
    %v4265 = vsub.s32 %v4262, %v4264
    %v4266 = vrot.slane %v4256, %v4265
    %v4268 = vunpack.c.l.s4 1983009808
    %v4269 = vunpack.c.0.s8 %v4268
    %v4270 = vlaneseq
    %v4271 = vshrl.u32 %v4270, 7
    %v4272 = vsub.s32 %v4269, %v4271
    %v4273 = vrot.slane %v4257, %v4272
    %v4275 = vunpack.c.l.s4 1983009808
    %v4276 = vunpack.c.0.s8 %v4275
    %v4277 = vlaneseq
    %v4278 = vshrl.u32 %v4277, 7
    %v4279 = vsub.s32 %v4276, %v4278
    %v4280 = vrot.slane %v4258, %v4279
    %v4282 = vunpack.c.l.s4 1983009808
    %v4283 = vunpack.c.0.s8 %v4282
    %v4284 = vlaneseq
    %v4285 = vshrl.u32 %v4284, 7
    %v4286 = vsub.s32 %v4283, %v4285
    %v4287 = vrot.slane %v4259, %v4286
    %v4288 = vcombine.low %v4266, %v4280
    %v4289 = vcombine.high %v4266, %v4280
    %v4290 = vcombine.low %v4273, %v4287
    %v4291 = vcombine.high %v4273, %v4287
    %v4292 = vcombine.high %v4208, %v4208
    %v4294 = vunpack.c.l.s4 1983009808
    %v4295 = vunpack.c.0.s8 %v4294
    %v4296 = vlaneseq
    %v4297 = vshrl.u32 %v4296, 7
    %v4298 = vsub.s32 %v4295, %v4297
    %v4299 = vrot.slane %v4208, %v4298
    %v4301 = vunpack.c.l.s4 1983009808
    %v4302 = vunpack.c.0.s8 %v4301
    %v4303 = vlaneseq
    %v4304 = vshrl.u32 %v4303, 7
    %v4305 = vsub.s32 %v4302, %v4304
    %v4306 = vrot.slane %v4292, %v4305
    %v4307 = vcombine.high %v4299, %v4299
    %v4308 = vcombine.high %v4306, %v4306
    %v4309 = vcombine.high %v4209, %v4209
    %v4311 = vunpack.c.l.s4 1983009808
    %v4312 = vunpack.c.0.s8 %v4311
    %v4313 = vlaneseq
    %v4314 = vshrl.u32 %v4313, 7
    %v4315 = vsub.s32 %v4312, %v4314
    %v4316 = vrot.slane %v4209, %v4315
    %v4318 = vunpack.c.l.s4 1983009808
    %v4319 = vunpack.c.0.s8 %v4318
    %v4320 = vlaneseq
    %v4321 = vshrl.u32 %v4320, 7
    %v4322 = vsub.s32 %v4319, %v4321
    %v4323 = vrot.slane %v4309, %v4322
    %v4324 = vcombine.high %v4316, %v4316
    %v4325 = vcombine.high %v4323, %v4323
    %4342 = vmatprep.subr.mxu0 0.0
    %4343 = vmatpush1.msra.mxu0 1.0
    %4344 = vmatprep.subr.mxu0 0.0
    %4345 = vmatpush1.msra.mxu0 1.0
    %4346 = vmatprep.subr.mxu0 0.0
    %4347 = vmatpush1.msra.mxu0 1.0
    %4348 = vmatprep.subr.mxu0 0.0
    %4349 = vmatpush1.msra.mxu0 1.0
    %4350 = vmatprep.subr.mxu0 0.0
    %4351 = vmatpush1.msra.mxu0 1.0
    %4352 = vmatprep.subr.mxu0 0.0
    %4353 = vmatpush1.msra.mxu0 1.0
    %4354 = vmatprep.subr.mxu0 0.0
    %4355 = vmatpush1.msra.mxu0 1.0
    %4356 = vmatprep.subr.mxu0 0.0
    %4357 = vmatpush1.msra.mxu0 1.0
    %4358 = vmatprep.subr.mxu0 0.0
    %4359 = vmatpush1.msra.mxu0 1.0
    %4360 = vmatprep.subr.mxu0 0.0
    %4361 = vmatpush1.msra.mxu0 1.0
    %4362 = vmatprep.subr.mxu0 0.0
    %4363 = vmatpush1.msra.mxu0 1.0
    %4364 = vmatprep.subr.mxu0 0.0
    %4365 = vmatpush1.msra.mxu0 1.0
    %4366 = vmatprep.subr.mxu0 0.0
    %4367 = vmatpush1.msra.mxu0 1.0
    %4368 = vmatprep.subr.mxu0 0.0
    %4369 = vmatpush1.msra.mxu0 1.0
    %4370 = vmatprep.subr.mxu0 0.0
    %4371 = vmatpush1.msra.mxu0 1.0
    %4372 = vmatprep.subr.mxu0 0.0
    %4373 = vmatpush1.msra.mxu0 1.0
    %4374 = vmatprep.subr.mxu0 0.0
    %4375 = vmatpush1.msra.mxu0 1.0
    %4376 = vmatprep.subr.mxu0 0.0
    %4377 = vmatpush1.msra.mxu0 1.0
    %4378 = vmatprep.subr.mxu0 0.0
    %4379 = vmatpush1.msra.mxu0 1.0
    %4380 = vmatprep.subr.mxu0 0.0
    %4381 = vmatpush1.msra.mxu0 1.0
    %4382 = vmatprep.subr.mxu0 0.0
    %4383 = vmatpush1.msra.mxu0 1.0
    %4384 = vmatprep.subr.mxu0 0.0
    %4385 = vmatpush1.msra.mxu0 1.0
    %4386 = vmatprep.subr.mxu0 0.0
    %4387 = vmatpush1.msra.mxu0 1.0
    %4388 = vmatprep.subr.mxu0 0.0
    %4389 = vmatpush1.msra.mxu0 1.0
    %4390 = vmatprep.subr.mxu0 0.0
    %4391 = vmatpush1.msra.mxu0 1.0
    %4392 = vmatprep.subr.mxu0 0.0
    %4393 = vmatpush1.msra.mxu0 1.0
    %4394 = vmatprep.subr.mxu0 0.0
    %4395 = vmatpush1.msra.mxu0 1.0
    %4396 = vmatprep.subr.mxu0 0.0
    %4397 = vmatpush1.msra.mxu0 1.0
    %4398 = vmatprep.subr.mxu0 0.0
    %4399 = vmatpush1.msra.mxu0 1.0
    %4400 = vmatprep.subr.mxu0 0.0
    %4401 = vmatpush1.msra.mxu0 1.0
    %4402 = vmatprep.subr.mxu0 0.0
    %4403 = vmatpush1.msra.mxu0 1.0
    %4404 = vmatprep.subr.mxu0 0.0
    %4405 = vmatpush1.msra.mxu0 1.0
    %4406 = vmatprep.mubr.f32.mxu0 %v4253
    %4407 = vmatmul.mubr.f32.gmra.mrb[0].mxu0 %v4252
    %v4408 = vpop.f32.mrb[0].mxu0
    %v4409 = vadd.f32 0.0, %v4408
    %v4410 = vpop.f32.mrb[0].mxu0
    %4411 = vmatprep.mubr.f32.mxu0 %v4307
    %4412 = vmatmul.mubr.f32.gmra.mrb[0].mxu0 %v4299
    %v4413 = vpop.f32.mrb[0].mxu0
    %v4414 = vadd.f32 0.0, %v4413
    %v4415 = vpop.f32.mrb[0].mxu0
    %4416 = vdwg.mxu0
    %4417 = vmatprep.subr.mxu0 0.0
    %4418 = vmatpush1.msra.mxu0 1.0
    %4419 = vmatprep.subr.mxu0 0.0
    %4420 = vmatpush1.msra.mxu0 1.0
    %4421 = vmatprep.subr.mxu0 0.0
    %4422 = vmatpush1.msra.mxu0 1.0
    %4423 = vmatprep.subr.mxu0 0.0
    %4424 = vmatpush1.msra.mxu0 1.0
    %4425 = vmatprep.subr.mxu0 0.0
    %4426 = vmatpush1.msra.mxu0 1.0
    %4427 = vmatprep.subr.mxu0 0.0
    %4428 = vmatpush1.msra.mxu0 1.0
    %4429 = vmatprep.subr.mxu0 0.0
    %4430 = vmatpush1.msra.mxu0 1.0
    %4431 = vmatprep.subr.mxu0 0.0
    %4432 = vmatpush1.msra.mxu0 1.0
    %4433 = vmatprep.subr.mxu0 0.0
    %4434 = vmatpush1.msra.mxu0 1.0
    %4435 = vmatprep.subr.mxu0 0.0
    %4436 = vmatpush1.msra.mxu0 1.0
    %4437 = vmatprep.subr.mxu0 0.0
    %4438 = vmatpush1.msra.mxu0 1.0
    %4439 = vmatprep.subr.mxu0 0.0
    %4440 = vmatpush1.msra.mxu0 1.0
    %4441 = vmatprep.subr.mxu0 0.0
    %4442 = vmatpush1.msra.mxu0 1.0
    %4443 = vmatprep.subr.mxu0 0.0
    %4444 = vmatpush1.msra.mxu0 1.0
    %4445 = vmatprep.subr.mxu0 0.0
    %4446 = vmatpush1.msra.mxu0 1.0
    %4447 = vmatprep.subr.mxu0 0.0
    %4448 = vmatpush1.msra.mxu0 1.0
    %4449 = vmatprep.subr.mxu0 0.0
    %4450 = vmatpush1.msra.mxu0 1.0
    %4451 = vmatprep.subr.mxu0 0.0
    %4452 = vmatpush1.msra.mxu0 1.0
    %4453 = vmatprep.subr.mxu0 0.0
    %4454 = vmatpush1.msra.mxu0 1.0
    %4455 = vmatprep.subr.mxu0 0.0
    %4456 = vmatpush1.msra.mxu0 1.0
    %4457 = vmatprep.subr.mxu0 0.0
    %4458 = vmatpush1.msra.mxu0 1.0
    %4459 = vmatprep.subr.mxu0 0.0
    %4460 = vmatpush1.msra.mxu0 1.0
    %4461 = vmatprep.subr.mxu0 0.0
    %4462 = vmatpush1.msra.mxu0 1.0
    %4463 = vmatprep.subr.mxu0 0.0
    %4464 = vmatpush1.msra.mxu0 1.0
    %4465 = vmatprep.subr.mxu0 0.0
    %4466 = vmatpush1.msra.mxu0 1.0
    %4467 = vmatprep.subr.mxu0 0.0
    %4468 = vmatpush1.msra.mxu0 1.0
    %4469 = vmatprep.subr.mxu0 0.0
    %4470 = vmatpush1.msra.mxu0 1.0
    %4471 = vmatprep.subr.mxu0 0.0
    %4472 = vmatpush1.msra.mxu0 1.0
    %4473 = vmatprep.subr.mxu0 0.0
    %4474 = vmatpush1.msra.mxu0 1.0
    %4475 = vmatprep.subr.mxu0 0.0
    %4476 = vmatpush1.msra.mxu0 1.0
    %4477 = vmatprep.subr.mxu0 0.0
    %4478 = vmatpush1.msra.mxu0 1.0
    %4479 = vmatprep.subr.mxu0 0.0
    %4480 = vmatpush1.msra.mxu0 1.0
    %4481 = vmatprep.mubr.f32.mxu0 %v4255
    %4482 = vmatmul.mubr.f32.gmra.mrb[0].mxu0 %v4254
    %v4483 = vpop.f32.mrb[0].mxu0
    %v4484 = vadd.f32 %v4409, %v4483
    %v4485 = vpop.f32.mrb[0].mxu0
    %4486 = vmatprep.mubr.f32.mxu0 %v4308
    %4487 = vmatmul.mubr.f32.gmra.mrb[0].mxu0 %v4306
    %v4488 = vpop.f32.mrb[0].mxu0
    %v4489 = vadd.f32 %v4414, %v4488
    %v4490 = vpop.f32.mrb[0].mxu0
    %4491 = vdwg.mxu0
    %4492 = vmatprep.subr.mxu0 0.0
    %4493 = vmatpush1.msra.mxu0 1.0
    %4494 = vmatprep.subr.mxu0 0.0
    %4495 = vmatpush1.msra.mxu0 1.0
    %4496 = vmatprep.subr.mxu0 0.0
    %4497 = vmatpush1.msra.mxu0 1.0
    %4498 = vmatprep.subr.mxu0 0.0
    %4499 = vmatpush1.msra.mxu0 1.0
    %4500 = vmatprep.subr.mxu0 0.0
    %4501 = vmatpush1.msra.mxu0 1.0
    %4502 = vmatprep.subr.mxu0 0.0
    %4503 = vmatpush1.msra.mxu0 1.0
    %4504 = vmatprep.subr.mxu0 0.0
    %4505 = vmatpush1.msra.mxu0 1.0
    %4506 = vmatprep.subr.mxu0 0.0
    %4507 = vmatpush1.msra.mxu0 1.0
    %4508 = vmatprep.subr.mxu0 0.0
    %4509 = vmatpush1.msra.mxu0 1.0
    %4510 = vmatprep.subr.mxu0 0.0
    %4511 = vmatpush1.msra.mxu0 1.0
    %4512 = vmatprep.subr.mxu0 0.0
    %4513 = vmatpush1.msra.mxu0 1.0
    %4514 = vmatprep.subr.mxu0 0.0
    %4515 = vmatpush1.msra.mxu0 1.0
    %4516 = vmatprep.subr.mxu0 0.0
    %4517 = vmatpush1.msra.mxu0 1.0
    %4518 = vmatprep.subr.mxu0 0.0
    %4519 = vmatpush1.msra.mxu0 1.0
    %4520 = vmatprep.subr.mxu0 0.0
    %4521 = vmatpush1.msra.mxu0 1.0
    %4522 = vmatprep.subr.mxu0 0.0
    %4523 = vmatpush1.msra.mxu0 1.0
    %4524 = vmatprep.subr.mxu0 0.0
    %4525 = vmatpush1.msra.mxu0 1.0
    %4526 = vmatprep.subr.mxu0 0.0
    %4527 = vmatpush1.msra.mxu0 1.0
    %4528 = vmatprep.subr.mxu0 0.0
    %4529 = vmatpush1.msra.mxu0 1.0
    %4530 = vmatprep.subr.mxu0 0.0
    %4531 = vmatpush1.msra.mxu0 1.0
    %4532 = vmatprep.subr.mxu0 0.0
    %4533 = vmatpush1.msra.mxu0 1.0
    %4534 = vmatprep.subr.mxu0 0.0
    %4535 = vmatpush1.msra.mxu0 1.0
    %4536 = vmatprep.subr.mxu0 0.0
    %4537 = vmatpush1.msra.mxu0 1.0
    %4538 = vmatprep.subr.mxu0 0.0
    %4539 = vmatpush1.msra.mxu0 1.0
    %4540 = vmatprep.subr.mxu0 0.0
    %4541 = vmatpush1.msra.mxu0 1.0
    %4542 = vmatprep.subr.mxu0 0.0
    %4543 = vmatpush1.msra.mxu0 1.0
    %4544 = vmatprep.subr.mxu0 0.0
    %4545 = vmatpush1.msra.mxu0 1.0
    %4546 = vmatprep.subr.mxu0 0.0
    %4547 = vmatpush1.msra.mxu0 1.0
    %4548 = vmatprep.subr.mxu0 0.0
    %4549 = vmatpush1.msra.mxu0 1.0
    %4550 = vmatprep.subr.mxu0 0.0
    %4551 = vmatpush1.msra.mxu0 1.0
    %4552 = vmatprep.subr.mxu0 0.0
    %4553 = vmatpush1.msra.mxu0 1.0
    %4554 = vmatprep.subr.mxu0 0.0
    %4555 = vmatpush1.msra.mxu0 1.0
    %4556 = vmatprep.mubr.f32.mxu0 %v4289
    %4557 = vmatmul.mubr.f32.gmra.mrb[0].mxu0 %v4288
    %v4558 = vpop.f32.mrb[0].mxu0
    %v4559 = vadd.f32 %v4484, %v4558
    %v4560 = vpop.f32.mrb[0].mxu0
    %4561 = vmatprep.mubr.f32.mxu0 %v4324
    %4562 = vmatmul.mubr.f32.gmra.mrb[0].mxu0 %v4316
    %v4563 = vpop.f32.mrb[0].mxu0
    %v4564 = vadd.f32 %v4489, %v4563
    %v4565 = vpop.f32.mrb[0].mxu0
    %4566 = vdwg.mxu0
    %4567 = vmatprep.subr.mxu0 0.0
    %4568 = vmatpush1.msra.mxu0 1.0
    %4569 = vmatprep.subr.mxu0 0.0
    %4570 = vmatpush1.msra.mxu0 1.0
    %4571 = vmatprep.subr.mxu0 0.0
    %4572 = vmatpush1.msra.mxu0 1.0
    %4573 = vmatprep.subr.mxu0 0.0
    %4574 = vmatpush1.msra.mxu0 1.0
    %4575 = vmatprep.subr.mxu0 0.0
    %4576 = vmatpush1.msra.mxu0 1.0
    %4577 = vmatprep.subr.mxu0 0.0
    %4578 = vmatpush1.msra.mxu0 1.0
    %4579 = vmatprep.subr.mxu0 0.0
    %4580 = vmatpush1.msra.mxu0 1.0
    %4581 = vmatprep.subr.mxu0 0.0
    %4582 = vmatpush1.msra.mxu0 1.0
    %4583 = vmatprep.subr.mxu0 0.0
    %4584 = vmatpush1.msra.mxu0 1.0
    %4585 = vmatprep.subr.mxu0 0.0
    %4586 = vmatpush1.msra.mxu0 1.0
    %4587 = vmatprep.subr.mxu0 0.0
    %4588 = vmatpush1.msra.mxu0 1.0
    %4589 = vmatprep.subr.mxu0 0.0
    %4590 = vmatpush1.msra.mxu0 1.0
    %4591 = vmatprep.subr.mxu0 0.0
    %4592 = vmatpush1.msra.mxu0 1.0
    %4593 = vmatprep.subr.mxu0 0.0
    %4594 = vmatpush1.msra.mxu0 1.0
    %4595 = vmatprep.subr.mxu0 0.0
    %4596 = vmatpush1.msra.mxu0 1.0
    %4597 = vmatprep.subr.mxu0 0.0
    %4598 = vmatpush1.msra.mxu0 1.0
    %4599 = vmatprep.subr.mxu0 0.0
    %4600 = vmatpush1.msra.mxu0 1.0
    %4601 = vmatprep.subr.mxu0 0.0
    %4602 = vmatpush1.msra.mxu0 1.0
    %4603 = vmatprep.subr.mxu0 0.0
    %4604 = vmatpush1.msra.mxu0 1.0
    %4605 = vmatprep.subr.mxu0 0.0
    %4606 = vmatpush1.msra.mxu0 1.0
    %4607 = vmatprep.subr.mxu0 0.0
    %4608 = vmatpush1.msra.mxu0 1.0
    %4609 = vmatprep.subr.mxu0 0.0
    %4610 = vmatpush1.msra.mxu0 1.0
    %4611 = vmatprep.subr.mxu0 0.0
    %4612 = vmatpush1.msra.mxu0 1.0
    %4613 = vmatprep.subr.mxu0 0.0
    %4614 = vmatpush1.msra.mxu0 1.0
    %4615 = vmatprep.subr.mxu0 0.0
    %4616 = vmatpush1.msra.mxu0 1.0
    %4617 = vmatprep.subr.mxu0 0.0
    %4618 = vmatpush1.msra.mxu0 1.0
    %4619 = vmatprep.subr.mxu0 0.0
    %4620 = vmatpush1.msra.mxu0 1.0
    %4621 = vmatprep.subr.mxu0 0.0
    %4622 = vmatpush1.msra.mxu0 1.0
    %4623 = vmatprep.subr.mxu0 0.0
    %4624 = vmatpush1.msra.mxu0 1.0
    %4625 = vmatprep.subr.mxu0 0.0
    %4626 = vmatpush1.msra.mxu0 1.0
    %4627 = vmatprep.subr.mxu0 0.0
    %4628 = vmatpush1.msra.mxu0 1.0
    %4629 = vmatprep.subr.mxu0 0.0
    %4630 = vmatpush1.msra.mxu0 1.0
    %4631 = vmatprep.mubr.f32.mxu0 %v4291
    %4632 = vmatmul.mubr.f32.gmra.mrb[0].mxu0 %v4290
    %v4633 = vpop.f32.mrb[0].mxu0
    %v4634 = vadd.f32 %v4559, %v4633
    %v4635 = vpop.f32.mrb[0].mxu0
    %4636 = vmatprep.mubr.f32.mxu0 %v4325
    %4637 = vmatmul.mubr.f32.gmra.mrb[0].mxu0 %v4323
    %v4638 = vpop.f32.mrb[0].mxu0
    %v4639 = vadd.f32 %v4564, %v4638
    %v4640 = vpop.f32.mrb[0].mxu0
    %4641 = vdwg.mxu0
    %v4642 = vand.u32 2147483647, %v4190
    %v4643 = vand.u32 2147483647, %v4191
    %v4644 = vand.u32 2147483647, %v4192
    %v4645 = vand.u32 2147483647, %v4193
    %v4646 = vand.u32 2147483647, %v4194
    %v4647 = vand.u32 2147483647, %v4195
    %v4648 = vand.u32 2147483647, %v4196
    %v4649 = vand.u32 2147483647, %v4197
    %v4650 = vand.u32 2147483647, %v4198
    %v4651 = vand.u32 2147483647, %v4199
    %v4662 = vcombine.low %v4642, %v4644
    %v4663 = vcombine.high %v4642, %v4644
    %v4664 = vcombine.low %v4646, %v4648
    %v4665 = vcombine.high %v4646, %v4648
    %v4667 = vunpack.c.l.s4 1983009808
    %v4668 = vunpack.c.0.s8 %v4667
    %v4669 = vlaneseq
    %v4670 = vshrl.u32 %v4669, 7
    %v4671 = vsub.s32 %v4668, %v4670
    %v4672 = vrot.slane %v4662, %v4671
    %v4674 = vunpack.c.l.s4 1983009808
    %v4675 = vunpack.c.0.s8 %v4674
    %v4676 = vlaneseq
    %v4677 = vshrl.u32 %v4676, 7
    %v4678 = vsub.s32 %v4675, %v4677
    %v4679 = vrot.slane %v4663, %v4678
    %v4681 = vunpack.c.l.s4 1983009808
    %v4682 = vunpack.c.0.s8 %v4681
    %v4683 = vlaneseq
    %v4684 = vshrl.u32 %v4683, 7
    %v4685 = vsub.s32 %v4682, %v4684
    %v4686 = vrot.slane %v4664, %v4685
    %v4688 = vunpack.c.l.s4 1983009808
    %v4689 = vunpack.c.0.s8 %v4688
    %v4690 = vlaneseq
    %v4691 = vshrl.u32 %v4690, 7
    %v4692 = vsub.s32 %v4689, %v4691
    %v4693 = vrot.slane %v4665, %v4692
    %v4694 = vcombine.low %v4672, %v4686
    %v4695 = vcombine.high %v4672, %v4686
    %v4696 = vcombine.low %v4679, %v4693
    %v4697 = vcombine.high %v4679, %v4693
    %v4698 = vcombine.low %v4643, %v4645
    %v4699 = vcombine.high %v4643, %v4645
    %v4700 = vcombine.low %v4647, %v4649
    %v4701 = vcombine.high %v4647, %v4649
    %v4703 = vunpack.c.l.s4 1983009808
    %v4704 = vunpack.c.0.s8 %v4703
    %v4705 = vlaneseq
    %v4706 = vshrl.u32 %v4705, 7
    %v4707 = vsub.s32 %v4704, %v4706
    %v4708 = vrot.slane %v4698, %v4707
    %v4710 = vunpack.c.l.s4 1983009808
    %v4711 = vunpack.c.0.s8 %v4710
    %v4712 = vlaneseq
    %v4713 = vshrl.u32 %v4712, 7
    %v4714 = vsub.s32 %v4711, %v4713
    %v4715 = vrot.slane %v4699, %v4714
    %v4717 = vunpack.c.l.s4 1983009808
    %v4718 = vunpack.c.0.s8 %v4717
    %v4719 = vlaneseq
    %v4720 = vshrl.u32 %v4719, 7
    %v4721 = vsub.s32 %v4718, %v4720
    %v4722 = vrot.slane %v4700, %v4721
    %v4724 = vunpack.c.l.s4 1983009808
    %v4725 = vunpack.c.0.s8 %v4724
    %v4726 = vlaneseq
    %v4727 = vshrl.u32 %v4726, 7
    %v4728 = vsub.s32 %v4725, %v4727
    %v4729 = vrot.slane %v4701, %v4728
    %v4730 = vcombine.low %v4708, %v4722
    %v4731 = vcombine.high %v4708, %v4722
    %v4732 = vcombine.low %v4715, %v4729
    %v4733 = vcombine.high %v4715, %v4729
    %v4734 = vcombine.high %v4650, %v4650
    %v4736 = vunpack.c.l.s4 1983009808
    %v4737 = vunpack.c.0.s8 %v4736
    %v4738 = vlaneseq
    %v4739 = vshrl.u32 %v4738, 7
    %v4740 = vsub.s32 %v4737, %v4739
    %v4741 = vrot.slane %v4650, %v4740
    %v4743 = vunpack.c.l.s4 1983009808
    %v4744 = vunpack.c.0.s8 %v4743
    %v4745 = vlaneseq
    %v4746 = vshrl.u32 %v4745, 7
    %v4747 = vsub.s32 %v4744, %v4746
    %v4748 = vrot.slane %v4734, %v4747
    %v4749 = vcombine.high %v4741, %v4741
    %v4750 = vcombine.high %v4748, %v4748
    %v4751 = vcombine.high %v4651, %v4651
    %v4753 = vunpack.c.l.s4 1983009808
    %v4754 = vunpack.c.0.s8 %v4753
    %v4755 = vlaneseq
    %v4756 = vshrl.u32 %v4755, 7
    %v4757 = vsub.s32 %v4754, %v4756
    %v4758 = vrot.slane %v4651, %v4757
    %v4760 = vunpack.c.l.s4 1983009808
    %v4761 = vunpack.c.0.s8 %v4760
    %v4762 = vlaneseq
    %v4763 = vshrl.u32 %v4762, 7
    %v4764 = vsub.s32 %v4761, %v4763
    %v4765 = vrot.slane %v4751, %v4764
    %v4766 = vcombine.high %v4758, %v4758
    %v4767 = vcombine.high %v4765, %v4765
    %4784 = vmatprep.subr.mxu0 0.0
    %4785 = vmatpush1.msra.mxu0 1.0
    %4786 = vmatprep.subr.mxu0 0.0
    %4787 = vmatpush1.msra.mxu0 1.0
    %4788 = vmatprep.subr.mxu0 0.0
    %4789 = vmatpush1.msra.mxu0 1.0
    %4790 = vmatprep.subr.mxu0 0.0
    %4791 = vmatpush1.msra.mxu0 1.0
    %4792 = vmatprep.subr.mxu0 0.0
    %4793 = vmatpush1.msra.mxu0 1.0
    %4794 = vmatprep.subr.mxu0 0.0
    %4795 = vmatpush1.msra.mxu0 1.0
    %4796 = vmatprep.subr.mxu0 0.0
    %4797 = vmatpush1.msra.mxu0 1.0
    %4798 = vmatprep.subr.mxu0 0.0
    %4799 = vmatpush1.msra.mxu0 1.0
    %4800 = vmatprep.subr.mxu0 0.0
    %4801 = vmatpush1.msra.mxu0 1.0
    %4802 = vmatprep.subr.mxu0 0.0
    %4803 = vmatpush1.msra.mxu0 1.0
    %4804 = vmatprep.subr.mxu0 0.0
    %4805 = vmatpush1.msra.mxu0 1.0
    %4806 = vmatprep.subr.mxu0 0.0
    %4807 = vmatpush1.msra.mxu0 1.0
    %4808 = vmatprep.subr.mxu0 0.0
    %4809 = vmatpush1.msra.mxu0 1.0
    %4810 = vmatprep.subr.mxu0 0.0
    %4811 = vmatpush1.msra.mxu0 1.0
    %4812 = vmatprep.subr.mxu0 0.0
    %4813 = vmatpush1.msra.mxu0 1.0
    %4814 = vmatprep.subr.mxu0 0.0
    %4815 = vmatpush1.msra.mxu0 1.0
    %4816 = vmatprep.subr.mxu0 0.0
    %4817 = vmatpush1.msra.mxu0 1.0
    %4818 = vmatprep.subr.mxu0 0.0
    %4819 = vmatpush1.msra.mxu0 1.0
    %4820 = vmatprep.subr.mxu0 0.0
    %4821 = vmatpush1.msra.mxu0 1.0
    %4822 = vmatprep.subr.mxu0 0.0
    %4823 = vmatpush1.msra.mxu0 1.0
    %4824 = vmatprep.subr.mxu0 0.0
    %4825 = vmatpush1.msra.mxu0 1.0
    %4826 = vmatprep.subr.mxu0 0.0
    %4827 = vmatpush1.msra.mxu0 1.0
    %4828 = vmatprep.subr.mxu0 0.0
    %4829 = vmatpush1.msra.mxu0 1.0
    %4830 = vmatprep.subr.mxu0 0.0
    %4831 = vmatpush1.msra.mxu0 1.0
    %4832 = vmatprep.subr.mxu0 0.0
    %4833 = vmatpush1.msra.mxu0 1.0
    %4834 = vmatprep.subr.mxu0 0.0
    %4835 = vmatpush1.msra.mxu0 1.0
    %4836 = vmatprep.subr.mxu0 0.0
    %4837 = vmatpush1.msra.mxu0 1.0
    %4838 = vmatprep.subr.mxu0 0.0
    %4839 = vmatpush1.msra.mxu0 1.0
    %4840 = vmatprep.subr.mxu0 0.0
    %4841 = vmatpush1.msra.mxu0 1.0
    %4842 = vmatprep.subr.mxu0 0.0
    %4843 = vmatpush1.msra.mxu0 1.0
    %4844 = vmatprep.subr.mxu0 0.0
    %4845 = vmatpush1.msra.mxu0 1.0
    %4846 = vmatprep.subr.mxu0 0.0
    %4847 = vmatpush1.msra.mxu0 1.0
    %4848 = vmatprep.mubr.f32.mxu0 %v4695
    %4849 = vmatmul.mubr.f32.gmra.mrb[0].mxu0 %v4694
    %v4850 = vpop.f32.mrb[0].mxu0
    %v4851 = vadd.f32 0.0, %v4850
    %v4852 = vpop.f32.mrb[0].mxu0
    %4853 = vmatprep.mubr.f32.mxu0 %v4749
    %4854 = vmatmul.mubr.f32.gmra.mrb[0].mxu0 %v4741
    %v4855 = vpop.f32.mrb[0].mxu0
    %v4856 = vadd.f32 0.0, %v4855
    %v4857 = vpop.f32.mrb[0].mxu0
    %4858 = vdwg.mxu0
    %4859 = vmatprep.subr.mxu0 0.0
    %4860 = vmatpush1.msra.mxu0 1.0
    %4861 = vmatprep.subr.mxu0 0.0
    %4862 = vmatpush1.msra.mxu0 1.0
    %4863 = vmatprep.subr.mxu0 0.0
    %4864 = vmatpush1.msra.mxu0 1.0
    %4865 = vmatprep.subr.mxu0 0.0
    %4866 = vmatpush1.msra.mxu0 1.0
    %4867 = vmatprep.subr.mxu0 0.0
    %4868 = vmatpush1.msra.mxu0 1.0
    %4869 = vmatprep.subr.mxu0 0.0
    %4870 = vmatpush1.msra.mxu0 1.0
    %4871 = vmatprep.subr.mxu0 0.0
    %4872 = vmatpush1.msra.mxu0 1.0
    %4873 = vmatprep.subr.mxu0 0.0
    %4874 = vmatpush1.msra.mxu0 1.0
    %4875 = vmatprep.subr.mxu0 0.0
    %4876 = vmatpush1.msra.mxu0 1.0
    %4877 = vmatprep.subr.mxu0 0.0
    %4878 = vmatpush1.msra.mxu0 1.0
    %4879 = vmatprep.subr.mxu0 0.0
    %4880 = vmatpush1.msra.mxu0 1.0
    %4881 = vmatprep.subr.mxu0 0.0
    %4882 = vmatpush1.msra.mxu0 1.0
    %4883 = vmatprep.subr.mxu0 0.0
    %4884 = vmatpush1.msra.mxu0 1.0
    %4885 = vmatprep.subr.mxu0 0.0
    %4886 = vmatpush1.msra.mxu0 1.0
    %4887 = vmatprep.subr.mxu0 0.0
    %4888 = vmatpush1.msra.mxu0 1.0
    %4889 = vmatprep.subr.mxu0 0.0
    %4890 = vmatpush1.msra.mxu0 1.0
    %4891 = vmatprep.subr.mxu0 0.0
    %4892 = vmatpush1.msra.mxu0 1.0
    %4893 = vmatprep.subr.mxu0 0.0
    %4894 = vmatpush1.msra.mxu0 1.0
    %4895 = vmatprep.subr.mxu0 0.0
    %4896 = vmatpush1.msra.mxu0 1.0
    %4897 = vmatprep.subr.mxu0 0.0
    %4898 = vmatpush1.msra.mxu0 1.0
    %4899 = vmatprep.subr.mxu0 0.0
    %4900 = vmatpush1.msra.mxu0 1.0
    %4901 = vmatprep.subr.mxu0 0.0
    %4902 = vmatpush1.msra.mxu0 1.0
    %4903 = vmatprep.subr.mxu0 0.0
    %4904 = vmatpush1.msra.mxu0 1.0
    %4905 = vmatprep.subr.mxu0 0.0
    %4906 = vmatpush1.msra.mxu0 1.0
    %4907 = vmatprep.subr.mxu0 0.0
    %4908 = vmatpush1.msra.mxu0 1.0
    %4909 = vmatprep.subr.mxu0 0.0
    %4910 = vmatpush1.msra.mxu0 1.0
    %4911 = vmatprep.subr.mxu0 0.0
    %4912 = vmatpush1.msra.mxu0 1.0
    %4913 = vmatprep.subr.mxu0 0.0
    %4914 = vmatpush1.msra.mxu0 1.0
    %4915 = vmatprep.subr.mxu0 0.0
    %4916 = vmatpush1.msra.mxu0 1.0
    %4917 = vmatprep.subr.mxu0 0.0
    %4918 = vmatpush1.msra.mxu0 1.0
    %4919 = vmatprep.subr.mxu0 0.0
    %4920 = vmatpush1.msra.mxu0 1.0
    %4921 = vmatprep.subr.mxu0 0.0
    %4922 = vmatpush1.msra.mxu0 1.0
    %4923 = vmatprep.mubr.f32.mxu0 %v4697
    %4924 = vmatmul.mubr.f32.gmra.mrb[0].mxu0 %v4696
    %v4925 = vpop.f32.mrb[0].mxu0
    %v4926 = vadd.f32 %v4851, %v4925
    %v4927 = vpop.f32.mrb[0].mxu0
    %4928 = vmatprep.mubr.f32.mxu0 %v4750
    %4929 = vmatmul.mubr.f32.gmra.mrb[0].mxu0 %v4748
    %v4930 = vpop.f32.mrb[0].mxu0
    %v4931 = vadd.f32 %v4856, %v4930
    %v4932 = vpop.f32.mrb[0].mxu0
    %4933 = vdwg.mxu0
    %4934 = vmatprep.subr.mxu0 0.0
    %4935 = vmatpush1.msra.mxu0 1.0
    %4936 = vmatprep.subr.mxu0 0.0
    %4937 = vmatpush1.msra.mxu0 1.0
    %4938 = vmatprep.subr.mxu0 0.0
    %4939 = vmatpush1.msra.mxu0 1.0
    %4940 = vmatprep.subr.mxu0 0.0
    %4941 = vmatpush1.msra.mxu0 1.0
    %4942 = vmatprep.subr.mxu0 0.0
    %4943 = vmatpush1.msra.mxu0 1.0
    %4944 = vmatprep.subr.mxu0 0.0
    %4945 = vmatpush1.msra.mxu0 1.0
    %4946 = vmatprep.subr.mxu0 0.0
    %4947 = vmatpush1.msra.mxu0 1.0
    %4948 = vmatprep.subr.mxu0 0.0
    %4949 = vmatpush1.msra.mxu0 1.0
    %4950 = vmatprep.subr.mxu0 0.0
    %4951 = vmatpush1.msra.mxu0 1.0
    %4952 = vmatprep.subr.mxu0 0.0
    %4953 = vmatpush1.msra.mxu0 1.0
    %4954 = vmatprep.subr.mxu0 0.0
    %4955 = vmatpush1.msra.mxu0 1.0
    %4956 = vmatprep.subr.mxu0 0.0
    %4957 = vmatpush1.msra.mxu0 1.0
    %4958 = vmatprep.subr.mxu0 0.0
    %4959 = vmatpush1.msra.mxu0 1.0
    %4960 = vmatprep.subr.mxu0 0.0
    %4961 = vmatpush1.msra.mxu0 1.0
    %4962 = vmatprep.subr.mxu0 0.0
    %4963 = vmatpush1.msra.mxu0 1.0
    %4964 = vmatprep.subr.mxu0 0.0
    %4965 = vmatpush1.msra.mxu0 1.0
    %4966 = vmatprep.subr.mxu0 0.0
    %4967 = vmatpush1.msra.mxu0 1.0
    %4968 = vmatprep.subr.mxu0 0.0
    %4969 = vmatpush1.msra.mxu0 1.0
    %4970 = vmatprep.subr.mxu0 0.0
    %4971 = vmatpush1.msra.mxu0 1.0
    %4972 = vmatprep.subr.mxu0 0.0
    %4973 = vmatpush1.msra.mxu0 1.0
    %4974 = vmatprep.subr.mxu0 0.0
    %4975 = vmatpush1.msra.mxu0 1.0
    %4976 = vmatprep.subr.mxu0 0.0
    %4977 = vmatpush1.msra.mxu0 1.0
    %4978 = vmatprep.subr.mxu0 0.0
    %4979 = vmatpush1.msra.mxu0 1.0
    %4980 = vmatprep.subr.mxu0 0.0
    %4981 = vmatpush1.msra.mxu0 1.0
    %4982 = vmatprep.subr.mxu0 0.0
    %4983 = vmatpush1.msra.mxu0 1.0
    %4984 = vmatprep.subr.mxu0 0.0
    %4985 = vmatpush1.msra.mxu0 1.0
    %4986 = vmatprep.subr.mxu0 0.0
    %4987 = vmatpush1.msra.mxu0 1.0
    %4988 = vmatprep.subr.mxu0 0.0
    %4989 = vmatpush1.msra.mxu0 1.0
    %4990 = vmatprep.subr.mxu0 0.0
    %4991 = vmatpush1.msra.mxu0 1.0
    %4992 = vmatprep.subr.mxu0 0.0
    %4993 = vmatpush1.msra.mxu0 1.0
    %4994 = vmatprep.subr.mxu0 0.0
    %4995 = vmatpush1.msra.mxu0 1.0
    %4996 = vmatprep.subr.mxu0 0.0
    %4997 = vmatpush1.msra.mxu0 1.0
    %4998 = vmatprep.mubr.f32.mxu0 %v4731
    %4999 = vmatmul.mubr.f32.gmra.mrb[0].mxu0 %v4730
    %v5000 = vpop.f32.mrb[0].mxu0
    %v5001 = vadd.f32 %v4926, %v5000
    %v5002 = vpop.f32.mrb[0].mxu0
    %5003 = vmatprep.mubr.f32.mxu0 %v4766
    %5004 = vmatmul.mubr.f32.gmra.mrb[0].mxu0 %v4758
    %v5005 = vpop.f32.mrb[0].mxu0
    %v5006 = vadd.f32 %v4931, %v5005
    %v5007 = vpop.f32.mrb[0].mxu0
    %5008 = vdwg.mxu0
    %5009 = vmatprep.subr.mxu0 0.0
    %5010 = vmatpush1.msra.mxu0 1.0
    %5011 = vmatprep.subr.mxu0 0.0
    %5012 = vmatpush1.msra.mxu0 1.0
    %5013 = vmatprep.subr.mxu0 0.0
    %5014 = vmatpush1.msra.mxu0 1.0
    %5015 = vmatprep.subr.mxu0 0.0
    %5016 = vmatpush1.msra.mxu0 1.0
    %5017 = vmatprep.subr.mxu0 0.0
    %5018 = vmatpush1.msra.mxu0 1.0
    %5019 = vmatprep.subr.mxu0 0.0
    %5020 = vmatpush1.msra.mxu0 1.0
    %5021 = vmatprep.subr.mxu0 0.0
    %5022 = vmatpush1.msra.mxu0 1.0
    %5023 = vmatprep.subr.mxu0 0.0
    %5024 = vmatpush1.msra.mxu0 1.0
    %5025 = vmatprep.subr.mxu0 0.0
    %5026 = vmatpush1.msra.mxu0 1.0
    %5027 = vmatprep.subr.mxu0 0.0
    %5028 = vmatpush1.msra.mxu0 1.0
    %5029 = vmatprep.subr.mxu0 0.0
    %5030 = vmatpush1.msra.mxu0 1.0
    %5031 = vmatprep.subr.mxu0 0.0
    %5032 = vmatpush1.msra.mxu0 1.0
    %5033 = vmatprep.subr.mxu0 0.0
    %5034 = vmatpush1.msra.mxu0 1.0
    %5035 = vmatprep.subr.mxu0 0.0
    %5036 = vmatpush1.msra.mxu0 1.0
    %5037 = vmatprep.subr.mxu0 0.0
    %5038 = vmatpush1.msra.mxu0 1.0
    %5039 = vmatprep.subr.mxu0 0.0
    %5040 = vmatpush1.msra.mxu0 1.0
    %5041 = vmatprep.subr.mxu0 0.0
    %5042 = vmatpush1.msra.mxu0 1.0
    %5043 = vmatprep.subr.mxu0 0.0
    %5044 = vmatpush1.msra.mxu0 1.0
    %5045 = vmatprep.subr.mxu0 0.0
    %5046 = vmatpush1.msra.mxu0 1.0
    %5047 = vmatprep.subr.mxu0 0.0
    %5048 = vmatpush1.msra.mxu0 1.0
    %5049 = vmatprep.subr.mxu0 0.0
    %5050 = vmatpush1.msra.mxu0 1.0
    %5051 = vmatprep.subr.mxu0 0.0
    %5052 = vmatpush1.msra.mxu0 1.0
    %5053 = vmatprep.subr.mxu0 0.0
    %5054 = vmatpush1.msra.mxu0 1.0
    %5055 = vmatprep.subr.mxu0 0.0
    %5056 = vmatpush1.msra.mxu0 1.0
    %5057 = vmatprep.subr.mxu0 0.0
    %5058 = vmatpush1.msra.mxu0 1.0
    %5059 = vmatprep.subr.mxu0 0.0
    %5060 = vmatpush1.msra.mxu0 1.0
    %5061 = vmatprep.subr.mxu0 0.0
    %5062 = vmatpush1.msra.mxu0 1.0
    %5063 = vmatprep.subr.mxu0 0.0
    %5064 = vmatpush1.msra.mxu0 1.0
    %5065 = vmatprep.subr.mxu0 0.0
    %5066 = vmatpush1.msra.mxu0 1.0
    %5067 = vmatprep.subr.mxu0 0.0
    %5068 = vmatpush1.msra.mxu0 1.0
    %5069 = vmatprep.subr.mxu0 0.0
    %5070 = vmatpush1.msra.mxu0 1.0
    %5071 = vmatprep.subr.mxu0 0.0
    %5072 = vmatpush1.msra.mxu0 1.0
    %5073 = vmatprep.mubr.f32.mxu0 %v4733
    %5074 = vmatmul.mubr.f32.gmra.mrb[0].mxu0 %v4732
    %v5075 = vpop.f32.mrb[0].mxu0
    %v5076 = vadd.f32 %v5001, %v5075
    %v5077 = vpop.f32.mrb[0].mxu0
    %5078 = vmatprep.mubr.f32.mxu0 %v4767
    %5079 = vmatmul.mubr.f32.gmra.mrb[0].mxu0 %v4765
    %v5080 = vpop.f32.mrb[0].mxu0
    %v5081 = vadd.f32 %v5006, %v5080
    %v5082 = vpop.f32.mrb[0].mxu0
    %5083 = vdwg.mxu0
    %v5084 = vmul.f32 %v4190, %v4190
    %v5085 = vmul.f32 %v4191, %v4191
    %v5086 = vmul.f32 %v4192, %v4192
    %v5087 = vmul.f32 %v4193, %v4193
    %v5088 = vmul.f32 %v4194, %v4194
    %v5089 = vmul.f32 %v4195, %v4195
    %v5090 = vmul.f32 %v4196, %v4196
    %v5091 = vmul.f32 %v4197, %v4197
    %v5092 = vmul.f32 %v4198, %v4198
    %v5093 = vmul.f32 %v4199, %v4199
    %v5104 = vcombine.low %v5084, %v5086
    %v5105 = vcombine.high %v5084, %v5086
    %v5106 = vcombine.low %v5088, %v5090
    %v5107 = vcombine.high %v5088, %v5090
    %v5109 = vunpack.c.l.s4 1983009808
    %v5110 = vunpack.c.0.s8 %v5109
    %v5111 = vlaneseq
    %v5112 = vshrl.u32 %v5111, 7
    %v5113 = vsub.s32 %v5110, %v5112
    %v5114 = vrot.slane %v5104, %v5113
    %v5116 = vunpack.c.l.s4 1983009808
    %v5117 = vunpack.c.0.s8 %v5116
    %v5118 = vlaneseq
    %v5119 = vshrl.u32 %v5118, 7
    %v5120 = vsub.s32 %v5117, %v5119
    %v5121 = vrot.slane %v5105, %v5120
    %v5123 = vunpack.c.l.s4 1983009808
    %v5124 = vunpack.c.0.s8 %v5123
    %v5125 = vlaneseq
    %v5126 = vshrl.u32 %v5125, 7
    %v5127 = vsub.s32 %v5124, %v5126
    %v5128 = vrot.slane %v5106, %v5127
    %v5130 = vunpack.c.l.s4 1983009808
    %v5131 = vunpack.c.0.s8 %v5130
    %v5132 = vlaneseq
    %v5133 = vshrl.u32 %v5132, 7
    %v5134 = vsub.s32 %v5131, %v5133
    %v5135 = vrot.slane %v5107, %v5134
    %v5136 = vcombine.low %v5114, %v5128
    %v5137 = vcombine.high %v5114, %v5128
    %v5138 = vcombine.low %v5121, %v5135
    %v5139 = vcombine.high %v5121, %v5135
    %v5140 = vcombine.low %v5085, %v5087
    %v5141 = vcombine.high %v5085, %v5087
    %v5142 = vcombine.low %v5089, %v5091
    %v5143 = vcombine.high %v5089, %v5091
    %v5145 = vunpack.c.l.s4 1983009808
    %v5146 = vunpack.c.0.s8 %v5145
    %v5147 = vlaneseq
    %v5148 = vshrl.u32 %v5147, 7
    %v5149 = vsub.s32 %v5146, %v5148
    %v5150 = vrot.slane %v5140, %v5149
    %v5152 = vunpack.c.l.s4 1983009808
    %v5153 = vunpack.c.0.s8 %v5152
    %v5154 = vlaneseq
    %v5155 = vshrl.u32 %v5154, 7
    %v5156 = vsub.s32 %v5153, %v5155
    %v5157 = vrot.slane %v5141, %v5156
    %v5159 = vunpack.c.l.s4 1983009808
    %v5160 = vunpack.c.0.s8 %v5159
    %v5161 = vlaneseq
    %v5162 = vshrl.u32 %v5161, 7
    %v5163 = vsub.s32 %v5160, %v5162
    %v5164 = vrot.slane %v5142, %v5163
    %v5166 = vunpack.c.l.s4 1983009808
    %v5167 = vunpack.c.0.s8 %v5166
    %v5168 = vlaneseq
    %v5169 = vshrl.u32 %v5168, 7
    %v5170 = vsub.s32 %v5167, %v5169
    %v5171 = vrot.slane %v5143, %v5170
    %v5172 = vcombine.low %v5150, %v5164
    %v5173 = vcombine.high %v5150, %v5164
    %v5174 = vcombine.low %v5157, %v5171
    %v5175 = vcombine.high %v5157, %v5171
    %v5176 = vcombine.high %v5092, %v5092
    %v5178 = vunpack.c.l.s4 1983009808
    %v5179 = vunpack.c.0.s8 %v5178
    %v5180 = vlaneseq
    %v5181 = vshrl.u32 %v5180, 7
    %v5182 = vsub.s32 %v5179, %v5181
    %v5183 = vrot.slane %v5092, %v5182
    %v5185 = vunpack.c.l.s4 1983009808
    %v5186 = vunpack.c.0.s8 %v5185
    %v5187 = vlaneseq
    %v5188 = vshrl.u32 %v5187, 7
    %v5189 = vsub.s32 %v5186, %v5188
    %v5190 = vrot.slane %v5176, %v5189
    %v5191 = vcombine.high %v5183, %v5183
    %v5192 = vcombine.high %v5190, %v5190
    %v5193 = vcombine.high %v5093, %v5093
    %v5195 = vunpack.c.l.s4 1983009808
    %v5196 = vunpack.c.0.s8 %v5195
    %v5197 = vlaneseq
    %v5198 = vshrl.u32 %v5197, 7
    %v5199 = vsub.s32 %v5196, %v5198
    %v5200 = vrot.slane %v5093, %v5199
    %v5202 = vunpack.c.l.s4 1983009808
    %v5203 = vunpack.c.0.s8 %v5202
    %v5204 = vlaneseq
    %v5205 = vshrl.u32 %v5204, 7
    %v5206 = vsub.s32 %v5203, %v5205
    %v5207 = vrot.slane %v5193, %v5206
    %v5208 = vcombine.high %v5200, %v5200
    %v5209 = vcombine.high %v5207, %v5207
    %5226 = vmatprep.subr.mxu0 0.0
    %5227 = vmatpush1.msra.mxu0 1.0
    %5228 = vmatprep.subr.mxu0 0.0
    %5229 = vmatpush1.msra.mxu0 1.0
    %5230 = vmatprep.subr.mxu0 0.0
    %5231 = vmatpush1.msra.mxu0 1.0
    %5232 = vmatprep.subr.mxu0 0.0
    %5233 = vmatpush1.msra.mxu0 1.0
    %5234 = vmatprep.subr.mxu0 0.0
    %5235 = vmatpush1.msra.mxu0 1.0
    %5236 = vmatprep.subr.mxu0 0.0
    %5237 = vmatpush1.msra.mxu0 1.0
    %5238 = vmatprep.subr.mxu0 0.0
    %5239 = vmatpush1.msra.mxu0 1.0
    %5240 = vmatprep.subr.mxu0 0.0
    %5241 = vmatpush1.msra.mxu0 1.0
    %5242 = vmatprep.subr.mxu0 0.0
    %5243 = vmatpush1.msra.mxu0 1.0
    %5244 = vmatprep.subr.mxu0 0.0
    %5245 = vmatpush1.msra.mxu0 1.0
    %5246 = vmatprep.subr.mxu0 0.0
    %5247 = vmatpush1.msra.mxu0 1.0
    %5248 = vmatprep.subr.mxu0 0.0
    %5249 = vmatpush1.msra.mxu0 1.0
    %5250 = vmatprep.subr.mxu0 0.0
    %5251 = vmatpush1.msra.mxu0 1.0
    %5252 = vmatprep.subr.mxu0 0.0
    %5253 = vmatpush1.msra.mxu0 1.0
    %5254 = vmatprep.subr.mxu0 0.0
    %5255 = vmatpush1.msra.mxu0 1.0
    %5256 = vmatprep.subr.mxu0 0.0
    %5257 = vmatpush1.msra.mxu0 1.0
    %5258 = vmatprep.subr.mxu0 0.0
    %5259 = vmatpush1.msra.mxu0 1.0
    %5260 = vmatprep.subr.mxu0 0.0
    %5261 = vmatpush1.msra.mxu0 1.0
    %5262 = vmatprep.subr.mxu0 0.0
    %5263 = vmatpush1.msra.mxu0 1.0
    %5264 = vmatprep.subr.mxu0 0.0
    %5265 = vmatpush1.msra.mxu0 1.0
    %5266 = vmatprep.subr.mxu0 0.0
    %5267 = vmatpush1.msra.mxu0 1.0
    %5268 = vmatprep.subr.mxu0 0.0
    %5269 = vmatpush1.msra.mxu0 1.0
    %5270 = vmatprep.subr.mxu0 0.0
    %5271 = vmatpush1.msra.mxu0 1.0
    %5272 = vmatprep.subr.mxu0 0.0
    %5273 = vmatpush1.msra.mxu0 1.0
    %5274 = vmatprep.subr.mxu0 0.0
    %5275 = vmatpush1.msra.mxu0 1.0
    %5276 = vmatprep.subr.mxu0 0.0
    %5277 = vmatpush1.msra.mxu0 1.0
    %5278 = vmatprep.subr.mxu0 0.0
    %5279 = vmatpush1.msra.mxu0 1.0
    %5280 = vmatprep.subr.mxu0 0.0
    %5281 = vmatpush1.msra.mxu0 1.0
    %5282 = vmatprep.subr.mxu0 0.0
    %5283 = vmatpush1.msra.mxu0 1.0
    %5284 = vmatprep.subr.mxu0 0.0
    %5285 = vmatpush1.msra.mxu0 1.0
    %5286 = vmatprep.subr.mxu0 0.0
    %5287 = vmatpush1.msra.mxu0 1.0
    %5288 = vmatprep.subr.mxu0 0.0
    %5289 = vmatpush1.msra.mxu0 1.0
    %5290 = vmatprep.mubr.f32.mxu0 %v5137
    %5291 = vmatmul.mubr.f32.gmra.mrb[0].mxu0 %v5136
    %v5292 = vpop.f32.mrb[0].mxu0
    %v5293 = vadd.f32 0.0, %v5292
    %v5294 = vpop.f32.mrb[0].mxu0
    %5295 = vmatprep.mubr.f32.mxu0 %v5191
    %5296 = vmatmul.mubr.f32.gmra.mrb[0].mxu0 %v5183
    %v5297 = vpop.f32.mrb[0].mxu0
    %v5298 = vadd.f32 0.0, %v5297
    %v5299 = vpop.f32.mrb[0].mxu0
    %5300 = vdwg.mxu0
    %5301 = vmatprep.subr.mxu0 0.0
    %5302 = vmatpush1.msra.mxu0 1.0
    %5303 = vmatprep.subr.mxu0 0.0
    %5304 = vmatpush1.msra.mxu0 1.0
    %5305 = vmatprep.subr.mxu0 0.0
    %5306 = vmatpush1.msra.mxu0 1.0
    %5307 = vmatprep.subr.mxu0 0.0
    %5308 = vmatpush1.msra.mxu0 1.0
    %5309 = vmatprep.subr.mxu0 0.0
    %5310 = vmatpush1.msra.mxu0 1.0
    %5311 = vmatprep.subr.mxu0 0.0
    %5312 = vmatpush1.msra.mxu0 1.0
    %5313 = vmatprep.subr.mxu0 0.0
    %5314 = vmatpush1.msra.mxu0 1.0
    %5315 = vmatprep.subr.mxu0 0.0
    %5316 = vmatpush1.msra.mxu0 1.0
    %5317 = vmatprep.subr.mxu0 0.0
    %5318 = vmatpush1.msra.mxu0 1.0
    %5319 = vmatprep.subr.mxu0 0.0
    %5320 = vmatpush1.msra.mxu0 1.0
    %5321 = vmatprep.subr.mxu0 0.0
    %5322 = vmatpush1.msra.mxu0 1.0
    %5323 = vmatprep.subr.mxu0 0.0
    %5324 = vmatpush1.msra.mxu0 1.0
    %5325 = vmatprep.subr.mxu0 0.0
    %5326 = vmatpush1.msra.mxu0 1.0
    %5327 = vmatprep.subr.mxu0 0.0
    %5328 = vmatpush1.msra.mxu0 1.0
    %5329 = vmatprep.subr.mxu0 0.0
    %5330 = vmatpush1.msra.mxu0 1.0
    %5331 = vmatprep.subr.mxu0 0.0
    %5332 = vmatpush1.msra.mxu0 1.0
    %5333 = vmatprep.subr.mxu0 0.0
    %5334 = vmatpush1.msra.mxu0 1.0
    %5335 = vmatprep.subr.mxu0 0.0
    %5336 = vmatpush1.msra.mxu0 1.0
    %5337 = vmatprep.subr.mxu0 0.0
    %5338 = vmatpush1.msra.mxu0 1.0
    %5339 = vmatprep.subr.mxu0 0.0
    %5340 = vmatpush1.msra.mxu0 1.0
    %5341 = vmatprep.subr.mxu0 0.0
    %5342 = vmatpush1.msra.mxu0 1.0
    %5343 = vmatprep.subr.mxu0 0.0
    %5344 = vmatpush1.msra.mxu0 1.0
    %5345 = vmatprep.subr.mxu0 0.0
    %5346 = vmatpush1.msra.mxu0 1.0
    %5347 = vmatprep.subr.mxu0 0.0
    %5348 = vmatpush1.msra.mxu0 1.0
    %5349 = vmatprep.subr.mxu0 0.0
    %5350 = vmatpush1.msra.mxu0 1.0
    %5351 = vmatprep.subr.mxu0 0.0
    %5352 = vmatpush1.msra.mxu0 1.0
    %5353 = vmatprep.subr.mxu0 0.0
    %5354 = vmatpush1.msra.mxu0 1.0
    %5355 = vmatprep.subr.mxu0 0.0
    %5356 = vmatpush1.msra.mxu0 1.0
    %5357 = vmatprep.subr.mxu0 0.0
    %5358 = vmatpush1.msra.mxu0 1.0
    %5359 = vmatprep.subr.mxu0 0.0
    %5360 = vmatpush1.msra.mxu0 1.0
    %5361 = vmatprep.subr.mxu0 0.0
    %5362 = vmatpush1.msra.mxu0 1.0
    %5363 = vmatprep.subr.mxu0 0.0
    %5364 = vmatpush1.msra.mxu0 1.0
    %5365 = vmatprep.mubr.f32.mxu0 %v5139
    %5366 = vmatmul.mubr.f32.gmra.mrb[0].mxu0 %v5138
    %v5367 = vpop.f32.mrb[0].mxu0
    %v5368 = vadd.f32 %v5293, %v5367
    %v5369 = vpop.f32.mrb[0].mxu0
    %5370 = vmatprep.mubr.f32.mxu0 %v5192
    %5371 = vmatmul.mubr.f32.gmra.mrb[0].mxu0 %v5190
    %v5372 = vpop.f32.mrb[0].mxu0
    %v5373 = vadd.f32 %v5298, %v5372
    %v5374 = vpop.f32.mrb[0].mxu0
    %5375 = vdwg.mxu0
    %5376 = vmatprep.subr.mxu0 0.0
    %5377 = vmatpush1.msra.mxu0 1.0
    %5378 = vmatprep.subr.mxu0 0.0
    %5379 = vmatpush1.msra.mxu0 1.0
    %5380 = vmatprep.subr.mxu0 0.0
    %5381 = vmatpush1.msra.mxu0 1.0
    %5382 = vmatprep.subr.mxu0 0.0
    %5383 = vmatpush1.msra.mxu0 1.0
    %5384 = vmatprep.subr.mxu0 0.0
    %5385 = vmatpush1.msra.mxu0 1.0
    %5386 = vmatprep.subr.mxu0 0.0
    %5387 = vmatpush1.msra.mxu0 1.0
    %5388 = vmatprep.subr.mxu0 0.0
    %5389 = vmatpush1.msra.mxu0 1.0
    %5390 = vmatprep.subr.mxu0 0.0
    %5391 = vmatpush1.msra.mxu0 1.0
    %5392 = vmatprep.subr.mxu0 0.0
    %5393 = vmatpush1.msra.mxu0 1.0
    %5394 = vmatprep.subr.mxu0 0.0
    %5395 = vmatpush1.msra.mxu0 1.0
    %5396 = vmatprep.subr.mxu0 0.0
    %5397 = vmatpush1.msra.mxu0 1.0
    %5398 = vmatprep.subr.mxu0 0.0
    %5399 = vmatpush1.msra.mxu0 1.0
    %5400 = vmatprep.subr.mxu0 0.0
    %5401 = vmatpush1.msra.mxu0 1.0
    %5402 = vmatprep.subr.mxu0 0.0
    %5403 = vmatpush1.msra.mxu0 1.0
    %5404 = vmatprep.subr.mxu0 0.0
    %5405 = vmatpush1.msra.mxu0 1.0
    %5406 = vmatprep.subr.mxu0 0.0
    %5407 = vmatpush1.msra.mxu0 1.0
    %5408 = vmatprep.subr.mxu0 0.0
    %5409 = vmatpush1.msra.mxu0 1.0
    %5410 = vmatprep.subr.mxu0 0.0
    %5411 = vmatpush1.msra.mxu0 1.0
    %5412 = vmatprep.subr.mxu0 0.0
    %5413 = vmatpush1.msra.mxu0 1.0
    %5414 = vmatprep.subr.mxu0 0.0
    %5415 = vmatpush1.msra.mxu0 1.0
    %5416 = vmatprep.subr.mxu0 0.0
    %5417 = vmatpush1.msra.mxu0 1.0
    %5418 = vmatprep.subr.mxu0 0.0
    %5419 = vmatpush1.msra.mxu0 1.0
    %5420 = vmatprep.subr.mxu0 0.0
    %5421 = vmatpush1.msra.mxu0 1.0
    %5422 = vmatprep.subr.mxu0 0.0
    %5423 = vmatpush1.msra.mxu0 1.0
    %5424 = vmatprep.subr.mxu0 0.0
    %5425 = vmatpush1.msra.mxu0 1.0
    %5426 = vmatprep.subr.mxu0 0.0
    %5427 = vmatpush1.msra.mxu0 1.0
    %5428 = vmatprep.subr.mxu0 0.0
    %5429 = vmatpush1.msra.mxu0 1.0
    %5430 = vmatprep.subr.mxu0 0.0
    %5431 = vmatpush1.msra.mxu0 1.0
    %5432 = vmatprep.subr.mxu0 0.0
    %5433 = vmatpush1.msra.mxu0 1.0
    %5434 = vmatprep.subr.mxu0 0.0
    %5435 = vmatpush1.msra.mxu0 1.0
    %5436 = vmatprep.subr.mxu0 0.0
    %5437 = vmatpush1.msra.mxu0 1.0
    %5438 = vmatprep.subr.mxu0 0.0
    %5439 = vmatpush1.msra.mxu0 1.0
    %5440 = vmatprep.mubr.f32.mxu0 %v5173
    %5441 = vmatmul.mubr.f32.gmra.mrb[0].mxu0 %v5172
    %v5442 = vpop.f32.mrb[0].mxu0
    %v5443 = vadd.f32 %v5368, %v5442
    %v5444 = vpop.f32.mrb[0].mxu0
    %5445 = vmatprep.mubr.f32.mxu0 %v5208
    %5446 = vmatmul.mubr.f32.gmra.mrb[0].mxu0 %v5200
    %v5447 = vpop.f32.mrb[0].mxu0
    %v5448 = vadd.f32 %v5373, %v5447
    %v5449 = vpop.f32.mrb[0].mxu0
    %5450 = vdwg.mxu0
    %5451 = vmatprep.subr.mxu0 0.0
    %5452 = vmatpush1.msra.mxu0 1.0
    %5453 = vmatprep.subr.mxu0 0.0
    %5454 = vmatpush1.msra.mxu0 1.0
    %5455 = vmatprep.subr.mxu0 0.0
    %5456 = vmatpush1.msra.mxu0 1.0
    %5457 = vmatprep.subr.mxu0 0.0
    %5458 = vmatpush1.msra.mxu0 1.0
    %5459 = vmatprep.subr.mxu0 0.0
    %5460 = vmatpush1.msra.mxu0 1.0
    %5461 = vmatprep.subr.mxu0 0.0
    %5462 = vmatpush1.msra.mxu0 1.0
    %5463 = vmatprep.subr.mxu0 0.0
    %5464 = vmatpush1.msra.mxu0 1.0
    %5465 = vmatprep.subr.mxu0 0.0
    %5466 = vmatpush1.msra.mxu0 1.0
    %5467 = vmatprep.subr.mxu0 0.0
    %5468 = vmatpush1.msra.mxu0 1.0
    %5469 = vmatprep.subr.mxu0 0.0
    %5470 = vmatpush1.msra.mxu0 1.0
    %5471 = vmatprep.subr.mxu0 0.0
    %5472 = vmatpush1.msra.mxu0 1.0
    %5473 = vmatprep.subr.mxu0 0.0
    %5474 = vmatpush1.msra.mxu0 1.0
    %5475 = vmatprep.subr.mxu0 0.0
    %5476 = vmatpush1.msra.mxu0 1.0
    %5477 = vmatprep.subr.mxu0 0.0
    %5478 = vmatpush1.msra.mxu0 1.0
    %5479 = vmatprep.subr.mxu0 0.0
    %5480 = vmatpush1.msra.mxu0 1.0
    %5481 = vmatprep.subr.mxu0 0.0
    %5482 = vmatpush1.msra.mxu0 1.0
    %5483 = vmatprep.subr.mxu0 0.0
    %5484 = vmatpush1.msra.mxu0 1.0
    %5485 = vmatprep.subr.mxu0 0.0
    %5486 = vmatpush1.msra.mxu0 1.0
    %5487 = vmatprep.subr.mxu0 0.0
    %5488 = vmatpush1.msra.mxu0 1.0
    %5489 = vmatprep.subr.mxu0 0.0
    %5490 = vmatpush1.msra.mxu0 1.0
    %5491 = vmatprep.subr.mxu0 0.0
    %5492 = vmatpush1.msra.mxu0 1.0
    %5493 = vmatprep.subr.mxu0 0.0
    %5494 = vmatpush1.msra.mxu0 1.0
    %5495 = vmatprep.subr.mxu0 0.0
    %5496 = vmatpush1.msra.mxu0 1.0
    %5497 = vmatprep.subr.mxu0 0.0
    %5498 = vmatpush1.msra.mxu0 1.0
    %5499 = vmatprep.subr.mxu0 0.0
    %5500 = vmatpush1.msra.mxu0 1.0
    %5501 = vmatprep.subr.mxu0 0.0
    %5502 = vmatpush1.msra.mxu0 1.0
    %5503 = vmatprep.subr.mxu0 0.0
    %5504 = vmatpush1.msra.mxu0 1.0
    %5505 = vmatprep.subr.mxu0 0.0
    %5506 = vmatpush1.msra.mxu0 1.0
    %5507 = vmatprep.subr.mxu0 0.0
    %5508 = vmatpush1.msra.mxu0 1.0
    %5509 = vmatprep.subr.mxu0 0.0
    %5510 = vmatpush1.msra.mxu0 1.0
    %5511 = vmatprep.subr.mxu0 0.0
    %5512 = vmatpush1.msra.mxu0 1.0
    %5513 = vmatprep.subr.mxu0 0.0
    %5514 = vmatpush1.msra.mxu0 1.0
    %5515 = vmatprep.mubr.f32.mxu0 %v5175
    %5516 = vmatmul.mubr.f32.gmra.mrb[0].mxu0 %v5174
    %v5517 = vpop.f32.mrb[0].mxu0
    %v5518 = vadd.f32 %v5443, %v5517
    %v5519 = vpop.f32.mrb[0].mxu0
    %5520 = vmatprep.mubr.f32.mxu0 %v5209
    %5521 = vmatmul.mubr.f32.gmra.mrb[0].mxu0 %v5207
    %v5522 = vpop.f32.mrb[0].mxu0
    %v5523 = vadd.f32 %v5448, %v5522
    %v5524 = vpop.f32.mrb[0].mxu0
    %5525 = vdwg.mxu0
    %5526 = vmatprep.subr.mxu0 0.0
    %5527 = vmatpush1.msra.mxu0 1.0
    %5528 = vmatprep.subr.mxu0 0.0
    %5529 = vmatpush1.msra.mxu0 1.0
    %5530 = vmatprep.subr.mxu0 0.0
    %5531 = vmatpush1.msra.mxu0 1.0
    %5532 = vmatprep.subr.mxu0 0.0
    %5533 = vmatpush1.msra.mxu0 1.0
    %5534 = vmatprep.subr.mxu0 0.0
    %5535 = vmatpush1.msra.mxu0 1.0
    %5536 = vmatprep.subr.mxu0 0.0
    %5537 = vmatpush1.msra.mxu0 1.0
    %5538 = vmatprep.subr.mxu0 0.0
    %5539 = vmatpush1.msra.mxu0 1.0
    %5540 = vmatprep.subr.mxu0 0.0
    %5541 = vmatpush1.msra.mxu0 1.0
    %5542 = vmatprep.subr.mxu0 0.0
    %5543 = vmatpush1.msra.mxu0 1.0
    %5544 = vmatprep.subr.mxu0 0.0
    %5545 = vmatpush1.msra.mxu0 1.0
    %5546 = vmatprep.subr.mxu0 0.0
    %5547 = vmatpush1.msra.mxu0 1.0
    %5548 = vmatprep.subr.mxu0 0.0
    %5549 = vmatpush1.msra.mxu0 1.0
    %5550 = vmatprep.subr.mxu0 0.0
    %5551 = vmatpush1.msra.mxu0 1.0
    %5552 = vmatprep.subr.mxu0 0.0
    %5553 = vmatpush1.msra.mxu0 1.0
    %5554 = vmatprep.subr.mxu0 0.0
    %5555 = vmatpush1.msra.mxu0 1.0
    %5556 = vmatprep.subr.mxu0 0.0
    %5557 = vmatpush1.msra.mxu0 1.0
    %5558 = vmatprep.subr.mxu0 0.0
    %5559 = vmatpush1.msra.mxu0 1.0
    %5560 = vmatprep.subr.mxu0 0.0
    %5561 = vmatpush1.msra.mxu0 1.0
    %5562 = vmatprep.subr.mxu0 0.0
    %5563 = vmatpush1.msra.mxu0 1.0
    %5564 = vmatprep.subr.mxu0 0.0
    %5565 = vmatpush1.msra.mxu0 1.0
    %5566 = vmatprep.subr.mxu0 0.0
    %5567 = vmatpush1.msra.mxu0 1.0
    %5568 = vmatprep.subr.mxu0 0.0
    %5569 = vmatpush1.msra.mxu0 1.0
    %5570 = vmatprep.subr.mxu0 0.0
    %5571 = vmatpush1.msra.mxu0 1.0
    %5572 = vmatprep.subr.mxu0 0.0
    %5573 = vmatpush1.msra.mxu0 1.0
    %5574 = vmatprep.subr.mxu0 0.0
    %5575 = vmatpush1.msra.mxu0 1.0
    %5576 = vmatprep.subr.mxu0 0.0
    %5577 = vmatpush1.msra.mxu0 1.0
    %5578 = vmatprep.subr.mxu0 0.0
    %5579 = vmatpush1.msra.mxu0 1.0
    %5580 = vmatprep.subr.mxu0 0.0
    %5581 = vmatpush1.msra.mxu0 1.0
    %5582 = vmatprep.subr.mxu0 0.0
    %5583 = vmatpush1.msra.mxu0 1.0
    %5584 = vmatprep.subr.mxu0 0.0
    %5585 = vmatpush1.msra.mxu0 1.0
    %5586 = vmatprep.subr.mxu0 0.0
    %5587 = vmatpush1.msra.mxu0 1.0
    %5588 = vmatprep.subr.mxu0 0.0
    %5589 = vmatpush1.msra.mxu0 1.0
    %5590 = vmatprep.mubr.f32.mxu0 %v3941
    %5591 = vmatmul.mubr.f32.gmra.mrb[0].mxu0 %v3940
    %v5592 = vpop.f32.mrb[0].mxu0
    %v5593 = vadd.f32 0.0, %v5592
    %v5594 = vpop.f32.mrb[0].mxu0
    %5595 = vmatprep.mubr.f32.mxu0 %v4010
    %5596 = vmatmul.mubr.f32.gmra.mrb[0].mxu0 %v3986
    %v5597 = vpop.f32.mrb[0].mxu0
    %v5598 = vadd.f32 0.0, %v5597
    %v5599 = vpop.f32.mrb[0].mxu0
    %5600 = vdwg.mxu0
    %5601 = vmatprep.subr.mxu0 0.0
    %5602 = vmatpush1.msra.mxu0 1.0
    %5603 = vmatprep.subr.mxu0 0.0
    %5604 = vmatpush1.msra.mxu0 1.0
    %5605 = vmatprep.subr.mxu0 0.0
    %5606 = vmatpush1.msra.mxu0 1.0
    %5607 = vmatprep.subr.mxu0 0.0
    %5608 = vmatpush1.msra.mxu0 1.0
    %5609 = vmatprep.subr.mxu0 0.0
    %5610 = vmatpush1.msra.mxu0 1.0
    %5611 = vmatprep.subr.mxu0 0.0
    %5612 = vmatpush1.msra.mxu0 1.0
    %5613 = vmatprep.subr.mxu0 0.0
    %5614 = vmatpush1.msra.mxu0 1.0
    %5615 = vmatprep.subr.mxu0 0.0
    %5616 = vmatpush1.msra.mxu0 1.0
    %5617 = vmatprep.subr.mxu0 0.0
    %5618 = vmatpush1.msra.mxu0 1.0
    %5619 = vmatprep.subr.mxu0 0.0
    %5620 = vmatpush1.msra.mxu0 1.0
    %5621 = vmatprep.subr.mxu0 0.0
    %5622 = vmatpush1.msra.mxu0 1.0
    %5623 = vmatprep.subr.mxu0 0.0
    %5624 = vmatpush1.msra.mxu0 1.0
    %5625 = vmatprep.subr.mxu0 0.0
    %5626 = vmatpush1.msra.mxu0 1.0
    %5627 = vmatprep.subr.mxu0 0.0
    %5628 = vmatpush1.msra.mxu0 1.0
    %5629 = vmatprep.subr.mxu0 0.0
    %5630 = vmatpush1.msra.mxu0 1.0
    %5631 = vmatprep.subr.mxu0 0.0
    %5632 = vmatpush1.msra.mxu0 1.0
    %5633 = vmatprep.subr.mxu0 0.0
    %5634 = vmatpush1.msra.mxu0 1.0
    %5635 = vmatprep.subr.mxu0 0.0
    %5636 = vmatpush1.msra.mxu0 1.0
    %5637 = vmatprep.subr.mxu0 0.0
    %5638 = vmatpush1.msra.mxu0 1.0
    %5639 = vmatprep.subr.mxu0 0.0
    %5640 = vmatpush1.msra.mxu0 1.0
    %5641 = vmatprep.subr.mxu0 0.0
    %5642 = vmatpush1.msra.mxu0 1.0
    %5643 = vmatprep.subr.mxu0 0.0
    %5644 = vmatpush1.msra.mxu0 1.0
    %5645 = vmatprep.subr.mxu0 0.0
    %5646 = vmatpush1.msra.mxu0 1.0
    %5647 = vmatprep.subr.mxu0 0.0
    %5648 = vmatpush1.msra.mxu0 1.0
    %5649 = vmatprep.subr.mxu0 0.0
    %5650 = vmatpush1.msra.mxu0 1.0
    %5651 = vmatprep.subr.mxu0 0.0
    %5652 = vmatpush1.msra.mxu0 1.0
    %5653 = vmatprep.subr.mxu0 0.0
    %5654 = vmatpush1.msra.mxu0 1.0
    %5655 = vmatprep.subr.mxu0 0.0
    %5656 = vmatpush1.msra.mxu0 1.0
    %5657 = vmatprep.subr.mxu0 0.0
    %5658 = vmatpush1.msra.mxu0 1.0
    %5659 = vmatprep.subr.mxu0 0.0
    %5660 = vmatpush1.msra.mxu0 1.0
    %5661 = vmatprep.subr.mxu0 0.0
    %5662 = vmatpush1.msra.mxu0 1.0
    %5663 = vmatprep.subr.mxu0 0.0
    %5664 = vmatpush1.msra.mxu0 1.0
    %5665 = vmatprep.mubr.f32.mxu0 %v3943
    %5666 = vmatmul.mubr.f32.gmra.mrb[0].mxu0 %v3942
    %v5667 = vpop.f32.mrb[0].mxu0
    %v5668 = vadd.f32 %v5593, %v5667
    %v5669 = vpop.f32.mrb[0].mxu0
    %5670 = vmatprep.mubr.f32.mxu0 %v4011
    %5671 = vmatmul.mubr.f32.gmra.mrb[0].mxu0 %v3993
    %v5672 = vpop.f32.mrb[0].mxu0
    %v5673 = vadd.f32 %v5598, %v5672
    %v5674 = vpop.f32.mrb[0].mxu0
    %5675 = vdwg.mxu0
    %5676 = vmatprep.subr.mxu0 0.0
    %5677 = vmatpush1.msra.mxu0 1.0
    %5678 = vmatprep.subr.mxu0 0.0
    %5679 = vmatpush1.msra.mxu0 1.0
    %5680 = vmatprep.subr.mxu0 0.0
    %5681 = vmatpush1.msra.mxu0 1.0
    %5682 = vmatprep.subr.mxu0 0.0
    %5683 = vmatpush1.msra.mxu0 1.0
    %5684 = vmatprep.subr.mxu0 0.0
    %5685 = vmatpush1.msra.mxu0 1.0
    %5686 = vmatprep.subr.mxu0 0.0
    %5687 = vmatpush1.msra.mxu0 1.0
    %5688 = vmatprep.subr.mxu0 0.0
    %5689 = vmatpush1.msra.mxu0 1.0
    %5690 = vmatprep.subr.mxu0 0.0
    %5691 = vmatpush1.msra.mxu0 1.0
    %5692 = vmatprep.subr.mxu0 0.0
    %5693 = vmatpush1.msra.mxu0 1.0
    %5694 = vmatprep.subr.mxu0 0.0
    %5695 = vmatpush1.msra.mxu0 1.0
    %5696 = vmatprep.subr.mxu0 0.0
    %5697 = vmatpush1.msra.mxu0 1.0
    %5698 = vmatprep.subr.mxu0 0.0
    %5699 = vmatpush1.msra.mxu0 1.0
    %5700 = vmatprep.subr.mxu0 0.0
    %5701 = vmatpush1.msra.mxu0 1.0
    %5702 = vmatprep.subr.mxu0 0.0
    %5703 = vmatpush1.msra.mxu0 1.0
    %5704 = vmatprep.subr.mxu0 0.0
    %5705 = vmatpush1.msra.mxu0 1.0
    %5706 = vmatprep.subr.mxu0 0.0
    %5707 = vmatpush1.msra.mxu0 1.0
    %5708 = vmatprep.subr.mxu0 0.0
    %5709 = vmatpush1.msra.mxu0 1.0
    %5710 = vmatprep.subr.mxu0 0.0
    %5711 = vmatpush1.msra.mxu0 1.0
    %5712 = vmatprep.subr.mxu0 0.0
    %5713 = vmatpush1.msra.mxu0 1.0
    %5714 = vmatprep.subr.mxu0 0.0
    %5715 = vmatpush1.msra.mxu0 1.0
    %5716 = vmatprep.subr.mxu0 0.0
    %5717 = vmatpush1.msra.mxu0 1.0
    %5718 = vmatprep.subr.mxu0 0.0
    %5719 = vmatpush1.msra.mxu0 1.0
    %5720 = vmatprep.subr.mxu0 0.0
    %5721 = vmatpush1.msra.mxu0 1.0
    %5722 = vmatprep.subr.mxu0 0.0
    %5723 = vmatpush1.msra.mxu0 1.0
    %5724 = vmatprep.subr.mxu0 0.0
    %5725 = vmatpush1.msra.mxu0 1.0
    %5726 = vmatprep.subr.mxu0 0.0
    %5727 = vmatpush1.msra.mxu0 1.0
    %5728 = vmatprep.subr.mxu0 0.0
    %5729 = vmatpush1.msra.mxu0 1.0
    %5730 = vmatprep.subr.mxu0 0.0
    %5731 = vmatpush1.msra.mxu0 1.0
    %5732 = vmatprep.subr.mxu0 0.0
    %5733 = vmatpush1.msra.mxu0 1.0
    %5734 = vmatprep.subr.mxu0 0.0
    %5735 = vmatpush1.msra.mxu0 1.0
    %5736 = vmatprep.subr.mxu0 0.0
    %5737 = vmatpush1.msra.mxu0 1.0
    %5738 = vmatprep.subr.mxu0 0.0
    %5739 = vmatpush1.msra.mxu0 1.0
    %5740 = vmatprep.mubr.f32.mxu0 %v3945
    %5741 = vmatmul.mubr.f32.gmra.mrb[0].mxu0 %v3944
    %v5742 = vpop.f32.mrb[0].mxu0
    %v5743 = vadd.f32 %v5668, %v5742
    %v5744 = vpop.f32.mrb[0].mxu0
    %5745 = vmatprep.mubr.f32.mxu0 %v4012
    %5746 = vmatmul.mubr.f32.gmra.mrb[0].mxu0 %v4002
    %v5747 = vpop.f32.mrb[0].mxu0
    %v5748 = vadd.f32 %v5673, %v5747
    %v5749 = vpop.f32.mrb[0].mxu0
    %5750 = vdwg.mxu0
    %5751 = vmatprep.subr.mxu0 0.0
    %5752 = vmatpush1.msra.mxu0 1.0
    %5753 = vmatprep.subr.mxu0 0.0
    %5754 = vmatpush1.msra.mxu0 1.0
    %5755 = vmatprep.subr.mxu0 0.0
    %5756 = vmatpush1.msra.mxu0 1.0
    %5757 = vmatprep.subr.mxu0 0.0
    %5758 = vmatpush1.msra.mxu0 1.0
    %5759 = vmatprep.subr.mxu0 0.0
    %5760 = vmatpush1.msra.mxu0 1.0
    %5761 = vmatprep.subr.mxu0 0.0
    %5762 = vmatpush1.msra.mxu0 1.0
    %5763 = vmatprep.subr.mxu0 0.0
    %5764 = vmatpush1.msra.mxu0 1.0
    %5765 = vmatprep.subr.mxu0 0.0
    %5766 = vmatpush1.msra.mxu0 1.0
    %5767 = vmatprep.subr.mxu0 0.0
    %5768 = vmatpush1.msra.mxu0 1.0
    %5769 = vmatprep.subr.mxu0 0.0
    %5770 = vmatpush1.msra.mxu0 1.0
    %5771 = vmatprep.subr.mxu0 0.0
    %5772 = vmatpush1.msra.mxu0 1.0
    %5773 = vmatprep.subr.mxu0 0.0
    %5774 = vmatpush1.msra.mxu0 1.0
    %5775 = vmatprep.subr.mxu0 0.0
    %5776 = vmatpush1.msra.mxu0 1.0
    %5777 = vmatprep.subr.mxu0 0.0
    %5778 = vmatpush1.msra.mxu0 1.0
    %5779 = vmatprep.subr.mxu0 0.0
    %5780 = vmatpush1.msra.mxu0 1.0
    %5781 = vmatprep.subr.mxu0 0.0
    %5782 = vmatpush1.msra.mxu0 1.0
    %5783 = vmatprep.subr.mxu0 0.0
    %5784 = vmatpush1.msra.mxu0 1.0
    %5785 = vmatprep.subr.mxu0 0.0
    %5786 = vmatpush1.msra.mxu0 1.0
    %5787 = vmatprep.subr.mxu0 0.0
    %5788 = vmatpush1.msra.mxu0 1.0
    %5789 = vmatprep.subr.mxu0 0.0
    %5790 = vmatpush1.msra.mxu0 1.0
    %5791 = vmatprep.subr.mxu0 0.0
    %5792 = vmatpush1.msra.mxu0 1.0
    %5793 = vmatprep.subr.mxu0 0.0
    %5794 = vmatpush1.msra.mxu0 1.0
    %5795 = vmatprep.subr.mxu0 0.0
    %5796 = vmatpush1.msra.mxu0 1.0
    %5797 = vmatprep.subr.mxu0 0.0
    %5798 = vmatpush1.msra.mxu0 1.0
    %5799 = vmatprep.subr.mxu0 0.0
    %5800 = vmatpush1.msra.mxu0 1.0
    %5801 = vmatprep.subr.mxu0 0.0
    %5802 = vmatpush1.msra.mxu0 1.0
    %5803 = vmatprep.subr.mxu0 0.0
    %5804 = vmatpush1.msra.mxu0 1.0
    %5805 = vmatprep.subr.mxu0 0.0
    %5806 = vmatpush1.msra.mxu0 1.0
    %5807 = vmatprep.subr.mxu0 0.0
    %5808 = vmatpush1.msra.mxu0 1.0
    %5809 = vmatprep.subr.mxu0 0.0
    %5810 = vmatpush1.msra.mxu0 1.0
    %5811 = vmatprep.subr.mxu0 0.0
    %5812 = vmatpush1.msra.mxu0 1.0
    %5813 = vmatprep.subr.mxu0 0.0
    %5814 = vmatpush1.msra.mxu0 1.0
    %5815 = vmatprep.mubr.f32.mxu0 %v3947
    %5816 = vmatmul.mubr.f32.gmra.mrb[0].mxu0 %v3946
    %v5817 = vpop.f32.mrb[0].mxu0
    %v5818 = vadd.f32 %v5743, %v5817
    %v5819 = vpop.f32.mrb[0].mxu0
    %5820 = vmatprep.mubr.f32.mxu0 %v4013
    %5821 = vmatmul.mubr.f32.gmra.mrb[0].mxu0 %v4009
    %v5822 = vpop.f32.mrb[0].mxu0
    %v5823 = vadd.f32 %v5748, %v5822
    %v5824 = vpop.f32.mrb[0].mxu0
    %5825 = vdwg.mxu0
    %5826 = vmatprep.subr.mxu0 0.0
    %5827 = vmatpush1.msra.mxu0 1.0
    %5828 = vmatprep.subr.mxu0 0.0
    %5829 = vmatpush1.msra.mxu0 1.0
    %5830 = vmatprep.subr.mxu0 0.0
    %5831 = vmatpush1.msra.mxu0 1.0
    %5832 = vmatprep.subr.mxu0 0.0
    %5833 = vmatpush1.msra.mxu0 1.0
    %5834 = vmatprep.subr.mxu0 0.0
    %5835 = vmatpush1.msra.mxu0 1.0
    %5836 = vmatprep.subr.mxu0 0.0
    %5837 = vmatpush1.msra.mxu0 1.0
    %5838 = vmatprep.subr.mxu0 0.0
    %5839 = vmatpush1.msra.mxu0 1.0
    %5840 = vmatprep.subr.mxu0 0.0
    %5841 = vmatpush1.msra.mxu0 1.0
    %5842 = vmatprep.subr.mxu0 0.0
    %5843 = vmatpush1.msra.mxu0 1.0
    %5844 = vmatprep.subr.mxu0 0.0
    %5845 = vmatpush1.msra.mxu0 1.0
    %5846 = vmatprep.subr.mxu0 0.0
    %5847 = vmatpush1.msra.mxu0 1.0
    %5848 = vmatprep.subr.mxu0 0.0
    %5849 = vmatpush1.msra.mxu0 1.0
    %5850 = vmatprep.subr.mxu0 0.0
    %5851 = vmatpush1.msra.mxu0 1.0
    %5852 = vmatprep.subr.mxu0 0.0
    %5853 = vmatpush1.msra.mxu0 1.0
    %5854 = vmatprep.subr.mxu0 0.0
    %5855 = vmatpush1.msra.mxu0 1.0
    %5856 = vmatprep.subr.mxu0 0.0
    %5857 = vmatpush1.msra.mxu0 1.0
    %5858 = vmatprep.subr.mxu0 0.0
    %5859 = vmatpush1.msra.mxu0 1.0
    %5860 = vmatprep.subr.mxu0 0.0
    %5861 = vmatpush1.msra.mxu0 1.0
    %5862 = vmatprep.subr.mxu0 0.0
    %5863 = vmatpush1.msra.mxu0 1.0
    %5864 = vmatprep.subr.mxu0 0.0
    %5865 = vmatpush1.msra.mxu0 1.0
    %5866 = vmatprep.subr.mxu0 0.0
    %5867 = vmatpush1.msra.mxu0 1.0
    %5868 = vmatprep.subr.mxu0 0.0
    %5869 = vmatpush1.msra.mxu0 1.0
    %5870 = vmatprep.subr.mxu0 0.0
    %5871 = vmatpush1.msra.mxu0 1.0
    %5872 = vmatprep.subr.mxu0 0.0
    %5873 = vmatpush1.msra.mxu0 1.0
    %5874 = vmatprep.subr.mxu0 0.0
    %5875 = vmatpush1.msra.mxu0 1.0
    %5876 = vmatprep.subr.mxu0 0.0
    %5877 = vmatpush1.msra.mxu0 1.0
    %5878 = vmatprep.subr.mxu0 0.0
    %5879 = vmatpush1.msra.mxu0 1.0
    %5880 = vmatprep.subr.mxu0 0.0
    %5881 = vmatpush1.msra.mxu0 1.0
    %5882 = vmatprep.subr.mxu0 0.0
    %5883 = vmatpush1.msra.mxu0 1.0
    %5884 = vmatprep.subr.mxu0 0.0
    %5885 = vmatpush1.msra.mxu0 1.0
    %5886 = vmatprep.subr.mxu0 0.0
    %5887 = vmatpush1.msra.mxu0 1.0
    %5888 = vmatprep.subr.mxu0 0.0
    %5889 = vmatpush1.msra.mxu0 1.0
    %5890 = vmatprep.mubr.f32.mxu0 %v3808
    %5891 = vmatmul.mubr.f32.gmra.mrb[0].mxu0 %v3784
    %v5892 = vpop.f32.mrb[0].mxu0
    %v5893 = vadd.f32 0.0, %v5892
    %v5894 = vpop.f32.mrb[0].mxu0
    %5895 = vdwg.mxu0
    %5896 = vmatprep.subr.mxu0 0.0
    %5897 = vmatpush1.msra.mxu0 1.0
    %5898 = vmatprep.subr.mxu0 0.0
    %5899 = vmatpush1.msra.mxu0 1.0
    %5900 = vmatprep.subr.mxu0 0.0
    %5901 = vmatpush1.msra.mxu0 1.0
    %5902 = vmatprep.subr.mxu0 0.0
    %5903 = vmatpush1.msra.mxu0 1.0
    %5904 = vmatprep.subr.mxu0 0.0
    %5905 = vmatpush1.msra.mxu0 1.0
    %5906 = vmatprep.subr.mxu0 0.0
    %5907 = vmatpush1.msra.mxu0 1.0
    %5908 = vmatprep.subr.mxu0 0.0
    %5909 = vmatpush1.msra.mxu0 1.0
    %5910 = vmatprep.subr.mxu0 0.0
    %5911 = vmatpush1.msra.mxu0 1.0
    %5912 = vmatprep.subr.mxu0 0.0
    %5913 = vmatpush1.msra.mxu0 1.0
    %5914 = vmatprep.subr.mxu0 0.0
    %5915 = vmatpush1.msra.mxu0 1.0
    %5916 = vmatprep.subr.mxu0 0.0
    %5917 = vmatpush1.msra.mxu0 1.0
    %5918 = vmatprep.subr.mxu0 0.0
    %5919 = vmatpush1.msra.mxu0 1.0
    %5920 = vmatprep.subr.mxu0 0.0
    %5921 = vmatpush1.msra.mxu0 1.0
    %5922 = vmatprep.subr.mxu0 0.0
    %5923 = vmatpush1.msra.mxu0 1.0
    %5924 = vmatprep.subr.mxu0 0.0
    %5925 = vmatpush1.msra.mxu0 1.0
    %5926 = vmatprep.subr.mxu0 0.0
    %5927 = vmatpush1.msra.mxu0 1.0
    %5928 = vmatprep.subr.mxu0 0.0
    %5929 = vmatpush1.msra.mxu0 1.0
    %5930 = vmatprep.subr.mxu0 0.0
    %5931 = vmatpush1.msra.mxu0 1.0
    %5932 = vmatprep.subr.mxu0 0.0
    %5933 = vmatpush1.msra.mxu0 1.0
    %5934 = vmatprep.subr.mxu0 0.0
    %5935 = vmatpush1.msra.mxu0 1.0
    %5936 = vmatprep.subr.mxu0 0.0
    %5937 = vmatpush1.msra.mxu0 1.0
    %5938 = vmatprep.subr.mxu0 0.0
    %5939 = vmatpush1.msra.mxu0 1.0
    %5940 = vmatprep.subr.mxu0 0.0
    %5941 = vmatpush1.msra.mxu0 1.0
    %5942 = vmatprep.subr.mxu0 0.0
    %5943 = vmatpush1.msra.mxu0 1.0
    %5944 = vmatprep.subr.mxu0 0.0
    %5945 = vmatpush1.msra.mxu0 1.0
    %5946 = vmatprep.subr.mxu0 0.0
    %5947 = vmatpush1.msra.mxu0 1.0
    %5948 = vmatprep.subr.mxu0 0.0
    %5949 = vmatpush1.msra.mxu0 1.0
    %5950 = vmatprep.subr.mxu0 0.0
    %5951 = vmatpush1.msra.mxu0 1.0
    %5952 = vmatprep.subr.mxu0 0.0
    %5953 = vmatpush1.msra.mxu0 1.0
    %5954 = vmatprep.subr.mxu0 0.0
    %5955 = vmatpush1.msra.mxu0 1.0
    %5956 = vmatprep.subr.mxu0 0.0
    %5957 = vmatpush1.msra.mxu0 1.0
    %5958 = vmatprep.subr.mxu0 0.0
    %5959 = vmatpush1.msra.mxu0 1.0
    %5960 = vmatprep.mubr.f32.mxu0 %v3809
    %5961 = vmatmul.mubr.f32.gmra.mrb[0].mxu0 %v3791
    %v5962 = vpop.f32.mrb[0].mxu0
    %v5963 = vadd.f32 %v5893, %v5962
    %v5964 = vpop.f32.mrb[0].mxu0
    %5965 = vdwg.mxu0
    %5966 = vmatprep.subr.mxu0 0.0
    %5967 = vmatpush1.msra.mxu0 1.0
    %5968 = vmatprep.subr.mxu0 0.0
    %5969 = vmatpush1.msra.mxu0 1.0
    %5970 = vmatprep.subr.mxu0 0.0
    %5971 = vmatpush1.msra.mxu0 1.0
    %5972 = vmatprep.subr.mxu0 0.0
    %5973 = vmatpush1.msra.mxu0 1.0
    %5974 = vmatprep.subr.mxu0 0.0
    %5975 = vmatpush1.msra.mxu0 1.0
    %5976 = vmatprep.subr.mxu0 0.0
    %5977 = vmatpush1.msra.mxu0 1.0
    %5978 = vmatprep.subr.mxu0 0.0
    %5979 = vmatpush1.msra.mxu0 1.0
    %5980 = vmatprep.subr.mxu0 0.0
    %5981 = vmatpush1.msra.mxu0 1.0
    %5982 = vmatprep.subr.mxu0 0.0
    %5983 = vmatpush1.msra.mxu0 1.0
    %5984 = vmatprep.subr.mxu0 0.0
    %5985 = vmatpush1.msra.mxu0 1.0
    %5986 = vmatprep.subr.mxu0 0.0
    %5987 = vmatpush1.msra.mxu0 1.0
    %5988 = vmatprep.subr.mxu0 0.0
    %5989 = vmatpush1.msra.mxu0 1.0
    %5990 = vmatprep.subr.mxu0 0.0
    %5991 = vmatpush1.msra.mxu0 1.0
    %5992 = vmatprep.subr.mxu0 0.0
    %5993 = vmatpush1.msra.mxu0 1.0
    %5994 = vmatprep.subr.mxu0 0.0
    %5995 = vmatpush1.msra.mxu0 1.0
    %5996 = vmatprep.subr.mxu0 0.0
    %5997 = vmatpush1.msra.mxu0 1.0
    %5998 = vmatprep.subr.mxu0 0.0
    %5999 = vmatpush1.msra.mxu0 1.0
    %6000 = vmatprep.subr.mxu0 0.0
    %6001 = vmatpush1.msra.mxu0 1.0
    %6002 = vmatprep.subr.mxu0 0.0
    %6003 = vmatpush1.msra.mxu0 1.0
    %6004 = vmatprep.subr.mxu0 0.0
    %6005 = vmatpush1.msra.mxu0 1.0
    %6006 = vmatprep.subr.mxu0 0.0
    %6007 = vmatpush1.msra.mxu0 1.0
    %6008 = vmatprep.subr.mxu0 0.0
    %6009 = vmatpush1.msra.mxu0 1.0
    %6010 = vmatprep.subr.mxu0 0.0
    %6011 = vmatpush1.msra.mxu0 1.0
    %6012 = vmatprep.subr.mxu0 0.0
    %6013 = vmatpush1.msra.mxu0 1.0
    %6014 = vmatprep.subr.mxu0 0.0
    %6015 = vmatpush1.msra.mxu0 1.0
    %6016 = vmatprep.subr.mxu0 0.0
    %6017 = vmatpush1.msra.mxu0 1.0
    %6018 = vmatprep.subr.mxu0 0.0
    %6019 = vmatpush1.msra.mxu0 1.0
    %6020 = vmatprep.subr.mxu0 0.0
    %6021 = vmatpush1.msra.mxu0 1.0
    %6022 = vmatprep.subr.mxu0 0.0
    %6023 = vmatpush1.msra.mxu0 1.0
    %6024 = vmatprep.subr.mxu0 0.0
    %6025 = vmatpush1.msra.mxu0 1.0
    %6026 = vmatprep.subr.mxu0 0.0
    %6027 = vmatpush1.msra.mxu0 1.0
    %6028 = vmatprep.subr.mxu0 0.0
    %6029 = vmatpush1.msra.mxu0 1.0
    %6030 = vmatprep.mubr.f32.mxu0 %v3810
    %6031 = vmatmul.mubr.f32.gmra.mrb[0].mxu0 %v3800
    %v6032 = vpop.f32.mrb[0].mxu0
    %v6033 = vadd.f32 %v5963, %v6032
    %v6034 = vpop.f32.mrb[0].mxu0
    %6035 = vdwg.mxu0
    %6036 = vmatprep.subr.mxu0 0.0
    %6037 = vmatpush1.msra.mxu0 1.0
    %6038 = vmatprep.subr.mxu0 0.0
    %6039 = vmatpush1.msra.mxu0 1.0
    %6040 = vmatprep.subr.mxu0 0.0
    %6041 = vmatpush1.msra.mxu0 1.0
    %6042 = vmatprep.subr.mxu0 0.0
    %6043 = vmatpush1.msra.mxu0 1.0
    %6044 = vmatprep.subr.mxu0 0.0
    %6045 = vmatpush1.msra.mxu0 1.0
    %6046 = vmatprep.subr.mxu0 0.0
    %6047 = vmatpush1.msra.mxu0 1.0
    %6048 = vmatprep.subr.mxu0 0.0
    %6049 = vmatpush1.msra.mxu0 1.0
    %6050 = vmatprep.subr.mxu0 0.0
    %6051 = vmatpush1.msra.mxu0 1.0
    %6052 = vmatprep.subr.mxu0 0.0
    %6053 = vmatpush1.msra.mxu0 1.0
    %6054 = vmatprep.subr.mxu0 0.0
    %6055 = vmatpush1.msra.mxu0 1.0
    %6056 = vmatprep.subr.mxu0 0.0
    %6057 = vmatpush1.msra.mxu0 1.0
    %6058 = vmatprep.subr.mxu0 0.0
    %6059 = vmatpush1.msra.mxu0 1.0
    %6060 = vmatprep.subr.mxu0 0.0
    %6061 = vmatpush1.msra.mxu0 1.0
    %6062 = vmatprep.subr.mxu0 0.0
    %6063 = vmatpush1.msra.mxu0 1.0
    %6064 = vmatprep.subr.mxu0 0.0
    %6065 = vmatpush1.msra.mxu0 1.0
    %6066 = vmatprep.subr.mxu0 0.0
    %6067 = vmatpush1.msra.mxu0 1.0
    %6068 = vmatprep.subr.mxu0 0.0
    %6069 = vmatpush1.msra.mxu0 1.0
    %6070 = vmatprep.subr.mxu0 0.0
    %6071 = vmatpush1.msra.mxu0 1.0
    %6072 = vmatprep.subr.mxu0 0.0
    %6073 = vmatpush1.msra.mxu0 1.0
    %6074 = vmatprep.subr.mxu0 0.0
    %6075 = vmatpush1.msra.mxu0 1.0
    %6076 = vmatprep.subr.mxu0 0.0
    %6077 = vmatpush1.msra.mxu0 1.0
    %6078 = vmatprep.subr.mxu0 0.0
    %6079 = vmatpush1.msra.mxu0 1.0
    %6080 = vmatprep.subr.mxu0 0.0
    %6081 = vmatpush1.msra.mxu0 1.0
    %6082 = vmatprep.subr.mxu0 0.0
    %6083 = vmatpush1.msra.mxu0 1.0
    %6084 = vmatprep.subr.mxu0 0.0
    %6085 = vmatpush1.msra.mxu0 1.0
    %6086 = vmatprep.subr.mxu0 0.0
    %6087 = vmatpush1.msra.mxu0 1.0
    %6088 = vmatprep.subr.mxu0 0.0
    %6089 = vmatpush1.msra.mxu0 1.0
    %6090 = vmatprep.subr.mxu0 0.0
    %6091 = vmatpush1.msra.mxu0 1.0
    %6092 = vmatprep.subr.mxu0 0.0
    %6093 = vmatpush1.msra.mxu0 1.0
    %6094 = vmatprep.subr.mxu0 0.0
    %6095 = vmatpush1.msra.mxu0 1.0
    %6096 = vmatprep.subr.mxu0 0.0
    %6097 = vmatpush1.msra.mxu0 1.0
    %6098 = vmatprep.subr.mxu0 0.0
    %6099 = vmatpush1.msra.mxu0 1.0
    %6100 = vmatprep.mubr.f32.mxu0 %v3811
    %6101 = vmatmul.mubr.f32.gmra.mrb[0].mxu0 %v3807
    %v6102 = vpop.f32.mrb[0].mxu0
    %v6103 = vadd.f32 %v6033, %v6102
    %v6104 = vpop.f32.mrb[0].mxu0
    %6105 = vdwg.mxu0
    %v6108 = vcombine.high %v5818, %v5818
    %v6110 = vunpack.c.l.s4 1983009808
    %v6111 = vunpack.c.0.s8 %v6110
    %v6112 = vlaneseq
    %v6113 = vshrl.u32 %v6112, 7
    %v6114 = vsub.s32 %v6111, %v6113
    %v6115 = vrot.slane %v5818, %v6114
    %v6117 = vunpack.c.l.s4 1983009808
    %v6118 = vunpack.c.0.s8 %v6117
    %v6119 = vlaneseq
    %v6120 = vshrl.u32 %v6119, 7
    %v6121 = vsub.s32 %v6118, %v6120
    %v6122 = vrot.slane %v6108, %v6121
    %v6123 = vcombine.high %v6115, %v6115
    %v6124 = vcombine.high %v6122, %v6122
    %v6126 = vunpack.c.l.s4 1983009808
    %v6127 = vunpack.c.0.s8 %v6126
    %v6128 = vlaneseq
    %v6129 = vshrl.u32 %v6128, 7
    %v6130 = vsub.s32 %v6127, %v6129
    %v6131 = vrot.slane %v5823, %v6130
    %v6137 = vmul.f32 %v6103, %v6115
    %v6138 = vmul.f32 %v6103, %v6123
    %v6139 = vmul.f32 %v6103, %v6122
    %v6140 = vmul.f32 %v6103, %v6124
    %v6141 = vmul.f32 %v6103, %v6131
    %v6142 = vmul.f32 %v6137, 0.0009765625
    %v6143 = vmul.f32 %v6138, 0.0009765625
    %v6144 = vmul.f32 %v6139, 0.0009765625
    %v6145 = vmul.f32 %v6140, 0.0009765625
    %v6146 = vmul.f32 %v6141, 0.0009765625
    %v6152 = vcombine.low %v6142, %v6143
    %v6153 = vcombine.low %v6144, %v6145
    %v6155 = vunpack.c.l.s4 1983009808
    %v6156 = vunpack.c.0.s8 %v6155
    %v6157 = vlaneseq
    %v6158 = vshrl.u32 %v6157, 7
    %v6159 = vsub.s32 %v6156, %v6158
    %v6160 = vrot.slane %v6152, %v6159
    %v6162 = vunpack.c.l.s4 1983009808
    %v6163 = vunpack.c.0.s8 %v6162
    %v6164 = vlaneseq
    %v6165 = vshrl.u32 %v6164, 7
    %v6166 = vsub.s32 %v6163, %v6165
    %v6167 = vrot.slane %v6153, %v6166
    %v6168 = vcombine.low %v6160, %v6167
    %v6170 = vunpack.c.l.s4 1983009808
    %v6171 = vunpack.c.0.s8 %v6170
    %v6172 = vlaneseq
    %v6173 = vshrl.u32 %v6172, 7
    %v6174 = vsub.s32 %v6171, %v6173
    %v6175 = vrot.slane %v6146, %v6174
    %v6178 = vsub.f32 %v4634, %v6168
    %v6179 = vsub.f32 %v4639, %v6175
    %v6180 = vmul.f32 %v6178, 0.0009775171
    %v6181 = vmul.f32 %v6179, 0.0009775171
    %v6182 = vstv %s78
    %v6183 = vmul.f32 %v6182, %v4634
    %v6184 = vmul.f32 %v6182, %v4639
    %v6185 = vstv %s79
    %v6186 = vmul.f32 %v6185, %v5076
    %v6187 = vmul.f32 %v6185, %v5081
    %v6188 = vadd.f32 %v6183, %v6186
    %v6189 = vadd.f32 %v6184, %v6187
    %v6190 = vstv %s80
    %v6191 = vmul.f32 %v6190, %v5518
    %v6192 = vmul.f32 %v6190, %v5523
    %v6193 = vadd.f32 %v6188, %v6191
    %v6194 = vadd.f32 %v6189, %v6192
    %v6195 = vstv %s81
    %v6196 = vmul.f32 %v6195, %v6180
    %v6197 = vmul.f32 %v6195, %v6181
    %v6198 = vadd.f32 %v6193, %v6196
    %v6199 = vadd.f32 %v6194, %v6197
    %v6200 = vstv %s82
    %v6201 = vmul.f32 %v6200, %v3140
    %v6202 = vmul.f32 %v6200, %v3141
    %v6203 = vstv %s83
    %v6204 = vmul.f32 %v6203, %v6198
    %v6205 = vmul.f32 %v6203, %v6199
    %v6206 = vadd.f32 %v6201, %v6204
    %v6207 = vadd.f32 %v6202, %v6205
    %v6210 = vcombine.high %v6206, %v6206
    %v6212 = vunpack.c.l.s4 1983009808
    %v6213 = vunpack.c.0.s8 %v6212
    %v6214 = vlaneseq
    %v6215 = vshrl.u32 %v6214, 7
    %v6216 = vsub.s32 %v6213, %v6215
    %v6217 = vrot.slane %v6206, %v6216
    %v6219 = vunpack.c.l.s4 1983009808
    %v6220 = vunpack.c.0.s8 %v6219
    %v6221 = vlaneseq
    %v6222 = vshrl.u32 %v6221, 7
    %v6223 = vsub.s32 %v6220, %v6222
    %v6224 = vrot.slane %v6210, %v6223
    %v6225 = vcombine.high %v6217, %v6217
    %v6226 = vcombine.high %v6224, %v6224
    %v6228 = vunpack.c.l.s4 1983009808
    %v6229 = vunpack.c.0.s8 %v6228
    %v6230 = vlaneseq
    %v6231 = vshrl.u32 %v6230, 7
    %v6232 = vsub.s32 %v6229, %v6231
    %v6233 = vrot.slane %v6207, %v6232
    %v6235 = vunpack.c.l.s4 1983009808
    %v6236 = vunpack.c.0.s8 %v6235
    %v6237 = vlaneseq
    %v6238 = vshrl.u32 %v6237, 7
    %v6239 = vsub.s32 %v6236, %v6238
    %v6240 = vrot.slane %v6217, %v6239
    %v6242 = vunpack.c.l.s4 1983009808
    %v6243 = vunpack.c.0.s8 %v6242
    %v6244 = vlaneseq
    %v6245 = vshrl.u32 %v6244, 7
    %v6246 = vsub.s32 %v6243, %v6245
    %v6247 = vrot.slane %v6225, %v6246
    %v6249 = vunpack.c.l.s4 1983009808
    %v6250 = vunpack.c.0.s8 %v6249
    %v6251 = vlaneseq
    %v6252 = vshrl.u32 %v6251, 7
    %v6253 = vsub.s32 %v6250, %v6252
    %v6254 = vrot.slane %v6224, %v6253
    %v6256 = vunpack.c.l.s4 1983009808
    %v6257 = vunpack.c.0.s8 %v6256
    %v6258 = vlaneseq
    %v6259 = vshrl.u32 %v6258, 7
    %v6260 = vsub.s32 %v6257, %v6259
    %v6261 = vrot.slane %v6226, %v6260
    %v6263 = vunpack.c.l.s4 1983009808
    %v6264 = vunpack.c.0.s8 %v6263
    %v6265 = vlaneseq
    %v6266 = vshrl.u32 %v6265, 7
    %v6267 = vsub.s32 %v6264, %v6266
    %v6268 = vrot.slane %v6233, %v6267
    %6269 = vset.pattern.permute.xlu0 0
    %6270 = vperm.xlu0 %6269, %v6240
    %v6271 = vpop.permute.xlu0 %6270
    %6272 = vset.pattern.permute.xlu0 0
    %6273 = vperm.xlu0 %6272, %v6247
    %v6274 = vpop.permute.xlu0 %6273
    %6275 = vset.pattern.permute.xlu0 0
    %6276 = vperm.xlu0 %6275, %v6254
    %v6277 = vpop.permute.xlu0 %6276
    %6278 = vset.pattern.permute.xlu0 0
    %6279 = vperm.xlu0 %6278, %v6261
    %v6280 = vpop.permute.xlu0 %6279
    %6281 = vset.pattern.permute.xlu0 0
    %6282 = vperm.xlu0 %6281, %v6268
    %v6283 = vpop.permute.xlu0 %6282
    %v6284 = vlaneseq
    %v6285 = vand.u32 %v6284, 127
    %v6286 = vlaneseq
    %v6287 = vshrl.u32 %v6286, 7
    %v6288 = vsub.s32 %v6285, %v6287
    %v6289 = vrot.slane %v6271, %v6288
    %v6290 = vlaneseq
    %v6291 = vshrl.u32 %v6290, 7
    %v6292 = vsub.s32 %v6285, %v6291
    %v6293 = vrot.slane %v6274, %v6292
    %v6294 = vlaneseq
    %v6295 = vshrl.u32 %v6294, 7
    %v6296 = vsub.s32 %v6285, %v6295
    %v6297 = vrot.slane %v6277, %v6296
    %v6298 = vlaneseq
    %v6299 = vshrl.u32 %v6298, 7
    %v6300 = vsub.s32 %v6285, %v6299
    %v6301 = vrot.slane %v6280, %v6300
    %v6302 = vlaneseq
    %v6303 = vshrl.u32 %v6302, 7
    %v6304 = vsub.s32 %v6285, %v6303
    %v6305 = vrot.slane %v6283, %v6304
    %vm6306 = vcmask 1041409
    %v6307 = vsel %vm6306, %v6293, %v6289
    %vm6308 = vcmask 1042434
    %v6309 = vsel %vm6308, %v6297, %v6307
    %vm6310 = vcmask 1043459
    %v6311 = vsel %vm6310, %v6301, %v6309
    %vm6312 = vcmask 1044484
    %v6313 = vsel %vm6312, %v6305, %v6311
    %6315 = vxpose.xlu0.b32.start [1/16] %v6313, 128
    %6316 = vxpose.xlu0.b32.cont [2/16] 0.0, 128
    %6317 = vxpose.xlu0.b32.cont [3/16] 0.0, 128
    %6318 = vxpose.xlu0.b32.cont [4/16] 0.0, 128
    %6319 = vxpose.xlu0.b32.cont [5/16] 0.0, 128
    %6320 = vxpose.xlu0.b32.cont [6/16] 0.0, 128
    %6321 = vxpose.xlu0.b32.cont [7/16] 0.0, 128
    %6322 = vxpose.xlu0.b32.cont [8/16] 0.0, 128
    %6323 = vxpose.xlu0.b32.cont [9/16] 0.0, 128
    %6324 = vxpose.xlu0.b32.cont [10/16] 0.0, 128
    %6325 = vxpose.xlu0.b32.cont [11/16] 0.0, 128
    %6326 = vxpose.xlu0.b32.cont [12/16] 0.0, 128
    %6327 = vxpose.xlu0.b32.cont [13/16] 0.0, 128
    %6328 = vxpose.xlu0.b32.cont [14/16] 0.0, 128
    %6329 = vxpose.xlu0.b32.cont [15/16] 0.0, 128
    %6330 = vxpose.xlu0.b32.end [16/16] 0.0, 128
    %v6331 = vpop.trf.xlu0
    %v6332 = vpop.trf.xlu0
    %v6333 = vpop.trf.xlu0
    %v6334 = vpop.trf.xlu0
    %v6335 = vpop.trf.xlu0
    %v6336 = vpop.trf.xlu0
    %v6337 = vpop.trf.xlu0
    %v6338 = vpop.trf.xlu0
    %v6339 = vpop.trf.xlu0
    %v6340 = vpop.trf.xlu0
    %v6341 = vpop.trf.xlu0
    %v6342 = vpop.trf.xlu0
    %v6343 = vpop.trf.xlu0
    %v6344 = vpop.trf.xlu0
    %v6345 = vpop.trf.xlu0
    %v6346 = vpop.trf.xlu0
    %vm6347 = vcmask 33792
    %6348 = vst.msk [vmem:[#allocation10] sm:$0x3] %vm6347, %v6331
    // Predicated region
    $region30: #{cell_forward.1} parent=1 // pred_check
      _
    $region31: #{cell_forward.1} parent=1 // pred_check_branch
      %6350 = sbr.rel (0) target = $region33
    $region32: #{cell_forward.1} parent=1 // pred_region
      %s6352 = ssub.s32 32, 32
      %6353 = vsyncadd [#allocation6], %s6352
      %s6355 = sshll.u32 [#allocation10], 4
      %s6356 = int_to_ptr.vmem [resolvable:$true] %s6355
      %6358 = dma.vmem_to_hbm [thread:$0]  %s6356, 32, %s5, [#allocation6]
    $region33: #{cell_forward.1} parent=1 // pred_fallthru
      _
    // Predicated region
    $region34: #{cell_forward.1} parent=1 // pred_check
      _
    $region35: #{cell_forward.1} parent=1 // pred_check_branch
      %6360 = sbr.rel (0) target = $region37
    $region36: #{cell_forward.1} parent=1 // pred_region
      %6361 = dma.done [#allocation6], 32
    $region37: #{cell_forward.1} parent=1 // pred_fallthru
      _
    %6362 = vsyncpa [#allocation5], 1
    %6363 = vsyncpa [#allocation8], 1
    %6364 = vsyncpa [#allocation6], 1

</llo_original>
